<compile_context>
chip_gen: v7x
topology: tpu7x:2x2x1
jax: 0.10.0
libtpu: 0.0.40
codegen_flags: <defaults>
</compile_context>

<pallas_src>
import functools

import jax
import jax.numpy as jnp
from jax.experimental import pallas as pl
from jax.experimental.pallas import tpu as pltpu


def _round_up(x, m):
    return (x + m - 1) // m * m


# ---------------------------------------------------------------------------
# Kernel 1: 3x3 conv (9 per-tap MXU matmuls) + folded BN1 bias + ReLU.
# Emits a bf16 feat tile and its per-channel partial sum (GAP phase 1).
# ---------------------------------------------------------------------------
def _conv_bn_relu_kernel(x_ref, w1_ref, b1_ref, feat_ref, psum_ref,
                         *, th, width, cin):
    # x_ref   : (1, th+2, W+2, Cin)  bf16  haloed input row window
    # w1_ref  : (9, Cin, Cp)         bf16  3x3 weights, BN1 scale folded in
    # b1_ref  : (1, Cp)              f32   folded BN1 bias
    # feat_ref: (1, th*W, Cp)        bf16  conv+BN+ReLU output tile
    # psum_ref: (1, 1, 1, Cp)        f32   per-tile channel sums (GAP partials)
    acc = None
    for tap in range(9):
        dy, dx = tap // 3, tap % 3
        # Offset window load from the haloed VMEM block; the (th, W, Cin) ->
        # (th*W, Cin) merge keeps Cin in lanes, so the dot stays strictly 2-D.
        lhs = x_ref[0, dy:dy + th, dx:dx + width, :].reshape(th * width, cin)
        part = jnp.dot(lhs, w1_ref[tap], preferred_element_type=jnp.float32)
        acc = part if acc is None else acc + part

    feat = jnp.maximum(acc + b1_ref[...], 0.0)                  # f32 (th*W, Cp)
    # GAP partial sum from the f32 value -- no re-read of the stored tile.
    psum_ref[0, 0] = jnp.sum(feat, axis=0, keepdims=True)
    feat_ref[0] = feat.astype(feat_ref.dtype)


# ---------------------------------------------------------------------------
# Kernel 2: GAP finalize + 1x1 conv (BN2 folded) + sigmoid + channel reweight.
# feat is reweighted in place (aliased with the output buffer).
# ---------------------------------------------------------------------------
def _atten_reweight_kernel(feat_ref, psum_ref, wa_ref, b2_ref, o_ref, *, inv_hw):
    # feat_ref: (1, T, Cp)        bf16  (HBM buffer aliased with o_ref)
    # psum_ref: (1, n_ht, 1, Cp)  f32   per-tile channel sums for this image
    # wa_ref  : (Cp, Cp)          bf16  1x1 weights, BN2 scale folded in
    # b2_ref  : (1, Cp)           f32   folded BN2 bias
    # o_ref   : (1, T, Cp)        bf16
    mean = jnp.sum(psum_ref[0], axis=0) * inv_hw                # (1, Cp) f32
    att = jnp.dot(mean.astype(jnp.bfloat16), wa_ref[...],
                  preferred_element_type=jnp.float32)
    att = jax.nn.sigmoid(att + b2_ref[...])                     # (1, Cp) f32
    o_ref[0] = (feat_ref[0].astype(jnp.float32) * att).astype(o_ref.dtype)


@jax.jit
def attention_refinement_module(x_nchw, w1_oihw, bn1, wa_oi, bn2):
    """x_nchw: (N, Cin, H, W) f32. Returns (N, Cout, H, W) f32 (NCHW)."""
    N, Cin, H, W = x_nchw.shape
    Cout = w1_oihw.shape[0]
    HW = H * W
    Cp = _round_up(Cout, 128)   # lane-dense channel dim (already a multiple of
                                # 128 at production BiSeNet widths)
    # Spatial tile: th rows per grid step (th*W ~ 512 rows at 64x64 prod size).
    th = 8 if H % 8 == 0 else H
    n_ht = H // th

    # ---- glue (cheap single XLA passes): layout, halo windows, BN folding ----
    # Cast to bf16 *before* transpose/pad so every wrapper pass moves half the
    # bytes.  Overlapping row windows (1-row halo each side) keep the kernel's
    # BlockSpecs non-overlapping at ~(th+2)/th duplication -- not im2col's 9x.
    x_nhwc = jnp.transpose(x_nchw.astype(jnp.bfloat16), (0, 2, 3, 1))
    xp = jnp.pad(x_nhwc, ((0, 0), (1, 1), (1, 1), (0, 0)))      # (N, H+2, W+2, Cin)
    xwin = jnp.stack(
        [xp[:, t * th:t * th + th + 2] for t in range(n_ht)], axis=1)
    xwin = xwin.reshape(N * n_ht, th + 2, W + 2, Cin)

    def fold(bn):
        gamma, beta, mean, var, eps = bn
        scale = gamma / jnp.sqrt(var + eps)
        return scale, beta - mean * scale

    s1, b1 = fold(bn1)
    s2, b2 = fold(bn2)

    # 3x3 weights: OIHW -> (ky, kx, Cin, Cout); fold BN1 scale into the output
    # channels in f32, then pad to Cp and cast to bf16.
    w1 = jnp.transpose(w1_oihw, (2, 3, 1, 0)) * s1               # (3,3,Cin,Cout)
    w1 = jnp.pad(w1.reshape(9, Cin, Cout), ((0, 0), (0, 0), (0, Cp - Cout)))
    w1 = w1.astype(jnp.bfloat16)
    b1 = jnp.pad(b1, (0, Cp - Cout)).reshape(1, Cp).astype(jnp.float32)

    # 1x1 attention weights in (in, out) layout with BN2 scale folded into the
    # output columns; bf16 ahead of a sigmoid is precision-safe.
    wa = jnp.transpose(wa_oi, (1, 0)) * s2                       # (Cout, Cout)
    wa = jnp.pad(wa, ((0, Cp - Cout), (0, Cp - Cout))).astype(jnp.bfloat16)
    b2 = jnp.pad(b2, (0, Cp - Cout)).reshape(1, Cp).astype(jnp.float32)

    compiler_params = pltpu.CompilerParams(
        # No carried state on either axis: both TensorCores (v7x) may split
        # over spatial tiles even for batch 1.
        dimension_semantics=("parallel", "parallel"),
        # Headroom below v7x's 64 MiB physical VMEM; still a raise over the
        # v5e/v6e scoped defaults (those parts have 128 MiB physical).
        vmem_limit_bytes=48 * 1024 * 1024)

    # ---- phase 1: conv3x3 + BN1 + ReLU -> feat tiles + GAP partial sums ----
    conv_kernel = functools.partial(_conv_bn_relu_kernel, th=th, width=W, cin=Cin)
    feat, psum = pl.pallas_call(
        conv_kernel,
        out_shape=(jax.ShapeDtypeStruct((N, HW, Cp), jnp.bfloat16),
                   jax.ShapeDtypeStruct((N, n_ht, 1, Cp), jnp.float32)),
        grid_spec=pltpu.PrefetchScalarGridSpec(
            num_scalar_prefetch=0,
            grid=(N, n_ht),
            in_specs=[
                pl.BlockSpec((1, th + 2, W + 2, Cin),
                             lambda n, t: (n * n_ht + t, 0, 0, 0)),
                pl.BlockSpec((9, Cin, Cp), lambda n, t: (0, 0, 0)),
                pl.BlockSpec((1, Cp), lambda n, t: (0, 0)),
            ],
            out_specs=[
                pl.BlockSpec((1, th * W, Cp), lambda n, t: (n, t, 0)),
                pl.BlockSpec((1, 1, 1, Cp), lambda n, t: (n, t, 0, 0)),
            ]),
        compiler_params=compiler_params,
    )(xwin, w1, b1)

    # ---- phase 2: attention (1x1 conv + BN2 + sigmoid) + in-place reweight ----
    reweight_kernel = functools.partial(_atten_reweight_kernel, inv_hw=1.0 / HW)
    out = pl.pallas_call(
        reweight_kernel,
        out_shape=jax.ShapeDtypeStruct((N, HW, Cp), jnp.bfloat16),
        grid_spec=pltpu.PrefetchScalarGridSpec(
            num_scalar_prefetch=0,
            grid=(N, n_ht),
            in_specs=[
                pl.BlockSpec((1, th * W, Cp), lambda n, t: (n, t, 0)),
                pl.BlockSpec((1, n_ht, 1, Cp), lambda n, t: (n, 0, 0, 0)),
                pl.BlockSpec((Cp, Cp), lambda n, t: (0, 0)),
                pl.BlockSpec((1, Cp), lambda n, t: (0, 0)),
            ],
            out_specs=pl.BlockSpec((1, th * W, Cp), lambda n, t: (n, t, 0))),
        # Reweight feat in place: its bf16 HBM buffer is reused as the output.
        input_output_aliases={0: 0},
        compiler_params=compiler_params,
    )(feat, psum, wa, b2)

    # Drop the channel padding, back to NCHW f32 to match the PyTorch module.
    # TODO(synk): skip this slice/transpose (and stay bf16 NHWC) when the
    # downstream consumer accepts NHWC -- it is a full extra HBM pass.
    out = out[:, :, :Cout].reshape(N, H, W, Cout).astype(jnp.float32)
    return jnp.transpose(out, (0, 3, 1, 2))


def _reference(x_nchw, w1_oihw, bn1, wa_oi, bn2):
    """Pure-JAX f32 reference mirroring the PyTorch forward (inference BN)."""
    def bn_apply(x, bn):
        gamma, beta, mean, var, eps = bn
        s = gamma / jnp.sqrt(var + eps)
        return x * s[None, :, None, None] + (beta - mean * s)[None, :, None, None]

    feat = jax.lax.conv_general_dilated(
        x_nchw, w1_oihw, window_strides=(1, 1), padding=((1, 1), (1, 1)),
        dimension_numbers=("NCHW", "OIHW", "NCHW"))
    feat = jnp.maximum(bn_apply(feat, bn1), 0.0)
    atten = jnp.mean(feat, axis=(2, 3), keepdims=True)
    atten = jax.lax.conv_general_dilated(
        atten, wa_oi[:, :, None, None], window_strides=(1, 1), padding="VALID",
        dimension_numbers=("NCHW", "OIHW", "NCHW"))
    atten = jax.nn.sigmoid(bn_apply(atten, bn2))
    return feat * atten


if __name__ == "__main__":
    key = jax.random.PRNGKey(0)
    N, Cin, Cout, H, W = 2, 4, 8, 16, 16

    k_x, k_w1, k_wa = jax.random.split(key, 3)
    x = jax.random.normal(k_x, (N, Cin, H, W), dtype=jnp.float32)

    # Kaiming-normal-ish deterministic init (a=1 -> gain 1): std = 1/sqrt(fan_in)
    fan1 = Cin * 3 * 3
    w1 = jax.random.normal(k_w1, (Cout, Cin, 3, 3), jnp.float32) / jnp.sqrt(fan1)
    wa = jax.random.normal(k_wa, (Cout, Cout), jnp.float32) / jnp.sqrt(Cout)

    # Deterministic (non-trivial) inference-mode BatchNorm parameters.
    def make_bn(c, offset):
        idx = jnp.arange(c, dtype=jnp.float32)
        gamma = 1.0 + 0.1 * idx + offset
        beta = 0.05 * idx - offset
        mean = 0.01 * idx
        var = 1.0 + 0.02 * idx
        return (gamma, beta, mean, var, 1e-5)

    bn1 = make_bn(Cout, 0.0)
    bn2 = make_bn(Cout, 0.1)

    out = attention_refinement_module(x, w1, bn1, wa, bn2)
    out = jax.block_until_ready(out)

    ref = _reference(x, w1, bn1, wa, bn2)
    assert out.shape == (N, Cout, H, W)
    # bf16 conv inputs/weights, bf16 feat storage and a bf16 attention matvec
    # (all with f32 accumulation / f32 epilogues) -> bf16-level tolerance.
    assert jnp.allclose(out, ref, atol=3e-2, rtol=3e-2), "mismatch vs reference"

    print("KERNEL_OK")
</pallas_src>

<mosaic_0001>
module attributes {stable_mosaic.version = 11 : i64} {
  func.func @_conv_bn_relu_kernel(%arg0: i32, %arg1: i32, %arg2: memref<1x10x18x4xbf16, #tpu.memory_space<vmem>>, %arg3: memref<9x4x128xbf16, #tpu.memory_space<vmem>>, %arg4: memref<1x128xf32, #tpu.memory_space<vmem>>, %arg5: memref<1x128x128xbf16, #tpu.memory_space<vmem>>, %arg6: memref<1x1x1x128xf32, #tpu.memory_space<vmem>>) attributes {dimension_semantics = [#tpu.dimension_semantics<parallel>, #tpu.dimension_semantics<parallel>], iteration_bounds = array<i64: 2, 2>, scalar_prefetch = 0 : i64, scratch_operands = 0 : i64, tpu.core_type = #tpu.core_type<tc>, window_params = [{transform_indices = @transform_0, window_bounds = array<i64: 1, 10, 18, 4>}, {pipeline_mode = #tpu.pipeline_mode<synchronous>, transform_indices = @transform_1, window_bounds = array<i64: 9, 4, 128>}, {pipeline_mode = #tpu.pipeline_mode<synchronous>, transform_indices = @transform_2, window_bounds = array<i64: 1, 128>}, {transform_indices = @transform_3, window_bounds = array<i64: 1, 128, 128>}, {transform_indices = @transform_4, window_bounds = array<i64: 1, 1, 1, 128>}]} {
    %c0 = arith.constant 0 : index
    %c0_0 = arith.constant 0 : index
    %c0_1 = arith.constant 0 : index
    %c0_2 = arith.constant 0 : index
    %0 = vector.load %arg2[%c0, %c0_0, %c0_1, %c0_2] : memref<1x10x18x4xbf16, #tpu.memory_space<vmem>>, vector<1x8x16x4xbf16>
    %1 = vector.shape_cast %0 : vector<1x8x16x4xbf16> to vector<8x16x4xbf16>
    %2 = vector.shape_cast %1 : vector<8x16x4xbf16> to vector<128x4xbf16>
    %c0_3 = arith.constant 0 : index
    %c0_4 = arith.constant 0 : index
    %c0_5 = arith.constant 0 : index
    %3 = vector.load %arg3[%c0_3, %c0_4, %c0_5] : memref<9x4x128xbf16, #tpu.memory_space<vmem>>, vector<1x4x128xbf16>
    %4 = vector.shape_cast %3 : vector<1x4x128xbf16> to vector<4x128xbf16>
    %cst = arith.constant dense<0.000000e+00> : vector<128x128xf32>
    %5 = tpu.matmul %2, %4, %cst {dimension_numbers = #tpu.dot_dimension_numbers<[1], [0], [0], [1], [0, 0, 1, 1], [], []>} : vector<128x4xbf16>, vector<4x128xbf16>, vector<128x128xf32> -> vector<128x128xf32>
    %c0_6 = arith.constant 0 : index
    %c0_7 = arith.constant 0 : index
    %c1 = arith.constant 1 : index
    %c0_8 = arith.constant 0 : index
    %6 = vector.load %arg2[%c0_6, %c0_7, %c1, %c0_8] : memref<1x10x18x4xbf16, #tpu.memory_space<vmem>>, vector<1x8x16x4xbf16>
    %7 = vector.shape_cast %6 : vector<1x8x16x4xbf16> to vector<8x16x4xbf16>
    %8 = vector.shape_cast %7 : vector<8x16x4xbf16> to vector<128x4xbf16>
    %c1_9 = arith.constant 1 : index
    %c0_10 = arith.constant 0 : index
    %c0_11 = arith.constant 0 : index
    %9 = vector.load %arg3[%c1_9, %c0_10, %c0_11] : memref<9x4x128xbf16, #tpu.memory_space<vmem>>, vector<1x4x128xbf16>
    %10 = vector.shape_cast %9 : vector<1x4x128xbf16> to vector<4x128xbf16>
    %cst_12 = arith.constant dense<0.000000e+00> : vector<128x128xf32>
    %11 = tpu.matmul %8, %10, %cst_12 {dimension_numbers = #tpu.dot_dimension_numbers<[1], [0], [0], [1], [0, 0, 1, 1], [], []>} : vector<128x4xbf16>, vector<4x128xbf16>, vector<128x128xf32> -> vector<128x128xf32>
    %12 = arith.addf %5, %11 : vector<128x128xf32>
    %c0_13 = arith.constant 0 : index
    %c0_14 = arith.constant 0 : index
    %c2 = arith.constant 2 : index
    %c0_15 = arith.constant 0 : index
    %13 = vector.load %arg2[%c0_13, %c0_14, %c2, %c0_15] : memref<1x10x18x4xbf16, #tpu.memory_space<vmem>>, vector<1x8x16x4xbf16>
    %14 = vector.shape_cast %13 : vector<1x8x16x4xbf16> to vector<8x16x4xbf16>
    %15 = vector.shape_cast %14 : vector<8x16x4xbf16> to vector<128x4xbf16>
    %c2_16 = arith.constant 2 : index
    %c0_17 = arith.constant 0 : index
    %c0_18 = arith.constant 0 : index
    %16 = vector.load %arg3[%c2_16, %c0_17, %c0_18] : memref<9x4x128xbf16, #tpu.memory_space<vmem>>, vector<1x4x128xbf16>
    %17 = vector.shape_cast %16 : vector<1x4x128xbf16> to vector<4x128xbf16>
    %cst_19 = arith.constant dense<0.000000e+00> : vector<128x128xf32>
    %18 = tpu.matmul %15, %17, %cst_19 {dimension_numbers = #tpu.dot_dimension_numbers<[1], [0], [0], [1], [0, 0, 1, 1], [], []>} : vector<128x4xbf16>, vector<4x128xbf16>, vector<128x128xf32> -> vector<128x128xf32>
    %19 = arith.addf %12, %18 : vector<128x128xf32>
    %c0_20 = arith.constant 0 : index
    %c1_21 = arith.constant 1 : index
    %c0_22 = arith.constant 0 : index
    %c0_23 = arith.constant 0 : index
    %20 = vector.load %arg2[%c0_20, %c1_21, %c0_22, %c0_23] : memref<1x10x18x4xbf16, #tpu.memory_space<vmem>>, vector<1x8x16x4xbf16>
    %21 = vector.shape_cast %20 : vector<1x8x16x4xbf16> to vector<8x16x4xbf16>
    %22 = vector.shape_cast %21 : vector<8x16x4xbf16> to vector<128x4xbf16>
    %c3 = arith.constant 3 : index
    %c0_24 = arith.constant 0 : index
    %c0_25 = arith.constant 0 : index
    %23 = vector.load %arg3[%c3, %c0_24, %c0_25] : memref<9x4x128xbf16, #tpu.memory_space<vmem>>, vector<1x4x128xbf16>
    %24 = vector.shape_cast %23 : vector<1x4x128xbf16> to vector<4x128xbf16>
    %cst_26 = arith.constant dense<0.000000e+00> : vector<128x128xf32>
    %25 = tpu.matmul %22, %24, %cst_26 {dimension_numbers = #tpu.dot_dimension_numbers<[1], [0], [0], [1], [0, 0, 1, 1], [], []>} : vector<128x4xbf16>, vector<4x128xbf16>, vector<128x128xf32> -> vector<128x128xf32>
    %26 = arith.addf %19, %25 : vector<128x128xf32>
    %c0_27 = arith.constant 0 : index
    %c1_28 = arith.constant 1 : index
    %c1_29 = arith.constant 1 : index
    %c0_30 = arith.constant 0 : index
    %27 = vector.load %arg2[%c0_27, %c1_28, %c1_29, %c0_30] : memref<1x10x18x4xbf16, #tpu.memory_space<vmem>>, vector<1x8x16x4xbf16>
    %28 = vector.shape_cast %27 : vector<1x8x16x4xbf16> to vector<8x16x4xbf16>
    %29 = vector.shape_cast %28 : vector<8x16x4xbf16> to vector<128x4xbf16>
    %c4 = arith.constant 4 : index
    %c0_31 = arith.constant 0 : index
    %c0_32 = arith.constant 0 : index
    %30 = vector.load %arg3[%c4, %c0_31, %c0_32] : memref<9x4x128xbf16, #tpu.memory_space<vmem>>, vector<1x4x128xbf16>
    %31 = vector.shape_cast %30 : vector<1x4x128xbf16> to vector<4x128xbf16>
    %cst_33 = arith.constant dense<0.000000e+00> : vector<128x128xf32>
    %32 = tpu.matmul %29, %31, %cst_33 {dimension_numbers = #tpu.dot_dimension_numbers<[1], [0], [0], [1], [0, 0, 1, 1], [], []>} : vector<128x4xbf16>, vector<4x128xbf16>, vector<128x128xf32> -> vector<128x128xf32>
    %33 = arith.addf %26, %32 : vector<128x128xf32>
    %c0_34 = arith.constant 0 : index
    %c1_35 = arith.constant 1 : index
    %c2_36 = arith.constant 2 : index
    %c0_37 = arith.constant 0 : index
    %34 = vector.load %arg2[%c0_34, %c1_35, %c2_36, %c0_37] : memref<1x10x18x4xbf16, #tpu.memory_space<vmem>>, vector<1x8x16x4xbf16>
    %35 = vector.shape_cast %34 : vector<1x8x16x4xbf16> to vector<8x16x4xbf16>
    %36 = vector.shape_cast %35 : vector<8x16x4xbf16> to vector<128x4xbf16>
    %c5 = arith.constant 5 : index
    %c0_38 = arith.constant 0 : index
    %c0_39 = arith.constant 0 : index
    %37 = vector.load %arg3[%c5, %c0_38, %c0_39] : memref<9x4x128xbf16, #tpu.memory_space<vmem>>, vector<1x4x128xbf16>
    %38 = vector.shape_cast %37 : vector<1x4x128xbf16> to vector<4x128xbf16>
    %cst_40 = arith.constant dense<0.000000e+00> : vector<128x128xf32>
    %39 = tpu.matmul %36, %38, %cst_40 {dimension_numbers = #tpu.dot_dimension_numbers<[1], [0], [0], [1], [0, 0, 1, 1], [], []>} : vector<128x4xbf16>, vector<4x128xbf16>, vector<128x128xf32> -> vector<128x128xf32>
    %40 = arith.addf %33, %39 : vector<128x128xf32>
    %c0_41 = arith.constant 0 : index
    %c2_42 = arith.constant 2 : index
    %c0_43 = arith.constant 0 : index
    %c0_44 = arith.constant 0 : index
    %41 = vector.load %arg2[%c0_41, %c2_42, %c0_43, %c0_44] : memref<1x10x18x4xbf16, #tpu.memory_space<vmem>>, vector<1x8x16x4xbf16>
    %42 = vector.shape_cast %41 : vector<1x8x16x4xbf16> to vector<8x16x4xbf16>
    %43 = vector.shape_cast %42 : vector<8x16x4xbf16> to vector<128x4xbf16>
    %c6 = arith.constant 6 : index
    %c0_45 = arith.constant 0 : index
    %c0_46 = arith.constant 0 : index
    %44 = vector.load %arg3[%c6, %c0_45, %c0_46] : memref<9x4x128xbf16, #tpu.memory_space<vmem>>, vector<1x4x128xbf16>
    %45 = vector.shape_cast %44 : vector<1x4x128xbf16> to vector<4x128xbf16>
    %cst_47 = arith.constant dense<0.000000e+00> : vector<128x128xf32>
    %46 = tpu.matmul %43, %45, %cst_47 {dimension_numbers = #tpu.dot_dimension_numbers<[1], [0], [0], [1], [0, 0, 1, 1], [], []>} : vector<128x4xbf16>, vector<4x128xbf16>, vector<128x128xf32> -> vector<128x128xf32>
    %47 = arith.addf %40, %46 : vector<128x128xf32>
    %c0_48 = arith.constant 0 : index
    %c2_49 = arith.constant 2 : index
    %c1_50 = arith.constant 1 : index
    %c0_51 = arith.constant 0 : index
    %48 = vector.load %arg2[%c0_48, %c2_49, %c1_50, %c0_51] : memref<1x10x18x4xbf16, #tpu.memory_space<vmem>>, vector<1x8x16x4xbf16>
    %49 = vector.shape_cast %48 : vector<1x8x16x4xbf16> to vector<8x16x4xbf16>
    %50 = vector.shape_cast %49 : vector<8x16x4xbf16> to vector<128x4xbf16>
    %c7 = arith.constant 7 : index
    %c0_52 = arith.constant 0 : index
    %c0_53 = arith.constant 0 : index
    %51 = vector.load %arg3[%c7, %c0_52, %c0_53] : memref<9x4x128xbf16, #tpu.memory_space<vmem>>, vector<1x4x128xbf16>
    %52 = vector.shape_cast %51 : vector<1x4x128xbf16> to vector<4x128xbf16>
    %cst_54 = arith.constant dense<0.000000e+00> : vector<128x128xf32>
    %53 = tpu.matmul %50, %52, %cst_54 {dimension_numbers = #tpu.dot_dimension_numbers<[1], [0], [0], [1], [0, 0, 1, 1], [], []>} : vector<128x4xbf16>, vector<4x128xbf16>, vector<128x128xf32> -> vector<128x128xf32>
    %54 = arith.addf %47, %53 : vector<128x128xf32>
    %c0_55 = arith.constant 0 : index
    %c2_56 = arith.constant 2 : index
    %c2_57 = arith.constant 2 : index
    %c0_58 = arith.constant 0 : index
    %55 = vector.load %arg2[%c0_55, %c2_56, %c2_57, %c0_58] : memref<1x10x18x4xbf16, #tpu.memory_space<vmem>>, vector<1x8x16x4xbf16>
    %56 = vector.shape_cast %55 : vector<1x8x16x4xbf16> to vector<8x16x4xbf16>
    %57 = vector.shape_cast %56 : vector<8x16x4xbf16> to vector<128x4xbf16>
    %c8 = arith.constant 8 : index
    %c0_59 = arith.constant 0 : index
    %c0_60 = arith.constant 0 : index
    %58 = vector.load %arg3[%c8, %c0_59, %c0_60] : memref<9x4x128xbf16, #tpu.memory_space<vmem>>, vector<1x4x128xbf16>
    %59 = vector.shape_cast %58 : vector<1x4x128xbf16> to vector<4x128xbf16>
    %cst_61 = arith.constant dense<0.000000e+00> : vector<128x128xf32>
    %60 = tpu.matmul %57, %59, %cst_61 {dimension_numbers = #tpu.dot_dimension_numbers<[1], [0], [0], [1], [0, 0, 1, 1], [], []>} : vector<128x4xbf16>, vector<4x128xbf16>, vector<128x128xf32> -> vector<128x128xf32>
    %61 = arith.addf %54, %60 : vector<128x128xf32>
    %c0_62 = arith.constant 0 : index
    %c0_63 = arith.constant 0 : index
    %62 = vector.load %arg4[%c0_62, %c0_63] : memref<1x128xf32, #tpu.memory_space<vmem>>, vector<1x128xf32>
    %63 = vector.broadcast %62 : vector<1x128xf32> to vector<128x128xf32>
    %64 = arith.addf %61, %63 : vector<128x128xf32>
    %cst_64 = arith.constant 0.000000e+00 : f32
    %65 = vector.broadcast %cst_64 : f32 to vector<128x128xf32>
    %66 = arith.maximumf %64, %65 : vector<128x128xf32>
    %cst_65 = arith.constant dense<0.000000e+00> : vector<128xf32>
    %67 = vector.multi_reduction <add>, %66, %cst_65 [0] : vector<128x128xf32> to vector<128xf32>
    %68 = vector.shape_cast %67 : vector<128xf32> to vector<1x128xf32>
    %c0_66 = arith.constant 0 : index
    %c0_67 = arith.constant 0 : index
    %c0_68 = arith.constant 0 : index
    %c0_69 = arith.constant 0 : index
    %69 = vector.load %arg6[%c0_66, %c0_67, %c0_68, %c0_69] : memref<1x1x1x128xf32, #tpu.memory_space<vmem>>, vector<1x1x1x128xf32>
    %70 = vector.shape_cast %69 : vector<1x1x1x128xf32> to vector<1x128xf32>
    %71 = vector.shape_cast %68 : vector<1x128xf32> to vector<1x1x1x128xf32>
    tpu.vector_store %arg6[%c0_66, %c0_67, %c0_68, %c0_69], %71 {strides = array<i32>} : memref<1x1x1x128xf32, #tpu.memory_space<vmem>>, vector<1x1x1x128xf32>,
    %72 = arith.truncf %66 : vector<128x128xf32> to vector<128x128xbf16>
    %c0_70 = arith.constant 0 : index
    %c0_71 = arith.constant 0 : index
    %c0_72 = arith.constant 0 : index
    %73 = vector.load %arg5[%c0_70, %c0_71, %c0_72] : memref<1x128x128xbf16, #tpu.memory_space<vmem>>, vector<1x128x128xbf16>
    %74 = vector.shape_cast %73 : vector<1x128x128xbf16> to vector<128x128xbf16>
    %75 = vector.shape_cast %72 : vector<128x128xbf16> to vector<1x128x128xbf16>
    tpu.vector_store %arg5[%c0_70, %c0_71, %c0_72], %75 {strides = array<i32>} : memref<1x128x128xbf16, #tpu.memory_space<vmem>>, vector<1x128x128xbf16>,
    return
  }
  func.func @transform_0(%arg0: i32, %arg1: i32) -> (i32, i32, i32, i32) {
    %c2_i32 = arith.constant 2 : i32
    %0 = arith.muli %arg0, %c2_i32 : i32
    %1 = arith.addi %0, %arg1 : i32
    %c0_i32 = arith.constant 0 : i32
    %c0_i32_0 = arith.constant 0 : i32
    %c0_i32_1 = arith.constant 0 : i32
    %c0_i32_2 = arith.constant 0 : i32
    return %1, %c0_i32, %c0_i32_0, %c0_i32_1 : i32, i32, i32, i32
  }
  func.func @transform_1(%arg0: i32, %arg1: i32) -> (i32, i32, i32) {
    %c0_i32 = arith.constant 0 : i32
    %c0_i32_0 = arith.constant 0 : i32
    %c0_i32_1 = arith.constant 0 : i32
    %c0_i32_2 = arith.constant 0 : i32
    return %c0_i32, %c0_i32_0, %c0_i32_1 : i32, i32, i32
  }
  func.func @transform_2(%arg0: i32, %arg1: i32) -> (i32, i32) {
    %c0_i32 = arith.constant 0 : i32
    %c0_i32_0 = arith.constant 0 : i32
    %c0_i32_1 = arith.constant 0 : i32
    return %c0_i32, %c0_i32_0 : i32, i32
  }
  func.func @transform_3(%arg0: i32, %arg1: i32) -> (i32, i32, i32) {
    %c0_i32 = arith.constant 0 : i32
    %c0_i32_0 = arith.constant 0 : i32
    return %arg0, %arg1, %c0_i32 : i32, i32, i32
  }
  func.func @transform_4(%arg0: i32, %arg1: i32) -> (i32, i32, i32, i32) {
    %c0_i32 = arith.constant 0 : i32
    %c0_i32_0 = arith.constant 0 : i32
    %c0_i32_1 = arith.constant 0 : i32
    return %arg0, %arg1, %c0_i32, %c0_i32_0 : i32, i32, i32, i32
  }
}

module attributes {stable_mosaic.version = 11 : i64} {
  func.func @_atten_reweight_kernel(%arg0: i32, %arg1: i32, %arg2: memref<1x128x128xbf16, #tpu.memory_space<vmem>>, %arg3: memref<1x2x1x128xf32, #tpu.memory_space<vmem>>, %arg4: memref<128x128xbf16, #tpu.memory_space<vmem>>, %arg5: memref<1x128xf32, #tpu.memory_space<vmem>>, %arg6: memref<1x128x128xbf16, #tpu.memory_space<vmem>>) attributes {dimension_semantics = [#tpu.dimension_semantics<parallel>, #tpu.dimension_semantics<parallel>], iteration_bounds = array<i64: 2, 2>, scalar_prefetch = 0 : i64, scratch_operands = 0 : i64, tpu.core_type = #tpu.core_type<tc>, window_params = [{transform_indices = @transform_0, window_bounds = array<i64: 1, 128, 128>}, {transform_indices = @transform_1, window_bounds = array<i64: 1, 2, 1, 128>}, {pipeline_mode = #tpu.pipeline_mode<synchronous>, transform_indices = @transform_2, window_bounds = array<i64: 128, 128>}, {pipeline_mode = #tpu.pipeline_mode<synchronous>, transform_indices = @transform_3, window_bounds = array<i64: 1, 128>}, {transform_indices = @transform_4, window_bounds = array<i64: 1, 128, 128>}]} {
    %c0 = arith.constant 0 : index
    %c0_0 = arith.constant 0 : index
    %c0_1 = arith.constant 0 : index
    %c0_2 = arith.constant 0 : index
    %0 = vector.load %arg3[%c0, %c0_0, %c0_1, %c0_2] : memref<1x2x1x128xf32, #tpu.memory_space<vmem>>, vector<1x2x1x128xf32>
    %1 = vector.shape_cast %0 : vector<1x2x1x128xf32> to vector<2x1x128xf32>
    %cst = arith.constant dense<0.000000e+00> : vector<1x128xf32>
    %2 = vector.multi_reduction <add>, %1, %cst [0] : vector<2x1x128xf32> to vector<1x128xf32>
    %cst_3 = arith.constant 3.906250e-03 : f32
    %3 = vector.broadcast %cst_3 : f32 to vector<1x128xf32>
    %4 = arith.mulf %2, %3 : vector<1x128xf32>
    %5 = arith.truncf %4 : vector<1x128xf32> to vector<1x128xbf16>
    %c0_4 = arith.constant 0 : index
    %c0_5 = arith.constant 0 : index
    %6 = vector.load %arg4[%c0_4, %c0_5] : memref<128x128xbf16, #tpu.memory_space<vmem>>, vector<128x128xbf16>
    %cst_6 = arith.constant dense<0.000000e+00> : vector<1x128xf32>
    %7 = tpu.matmul %5, %6, %cst_6 {dimension_numbers = #tpu.dot_dimension_numbers<[1], [0], [0], [1], [0, 0, 1, 1], [], []>} : vector<1x128xbf16>, vector<128x128xbf16>, vector<1x128xf32> -> vector<1x128xf32>
    %c0_7 = arith.constant 0 : index
    %c0_8 = arith.constant 0 : index
    %8 = vector.load %arg5[%c0_7, %c0_8] : memref<1x128xf32, #tpu.memory_space<vmem>>, vector<1x128xf32>
    %9 = arith.addf %7, %8 : vector<1x128xf32>
    %10 = arith.negf %9 : vector<1x128xf32>
    %11 = math.exp %10 : vector<1x128xf32>
    %cst_9 = arith.constant 1.000000e+00 : f32
    %12 = vector.broadcast %cst_9 : f32 to vector<1x128xf32>
    %13 = arith.addf %12, %11 : vector<1x128xf32>
    %14 = arith.divf %12, %13 : vector<1x128xf32>
    %c0_10 = arith.constant 0 : index
    %c0_11 = arith.constant 0 : index
    %c0_12 = arith.constant 0 : index
    %15 = vector.load %arg2[%c0_10, %c0_11, %c0_12] : memref<1x128x128xbf16, #tpu.memory_space<vmem>>, vector<1x128x128xbf16>
    %16 = vector.shape_cast %15 : vector<1x128x128xbf16> to vector<128x128xbf16>
    %17 = arith.extf %16 : vector<128x128xbf16> to vector<128x128xf32>
    %18 = vector.broadcast %14 : vector<1x128xf32> to vector<128x128xf32>
    %19 = arith.mulf %17, %18 : vector<128x128xf32>
    %20 = arith.truncf %19 : vector<128x128xf32> to vector<128x128xbf16>
    %c0_13 = arith.constant 0 : index
    %c0_14 = arith.constant 0 : index
    %c0_15 = arith.constant 0 : index
    %21 = vector.load %arg6[%c0_13, %c0_14, %c0_15] : memref<1x128x128xbf16, #tpu.memory_space<vmem>>, vector<1x128x128xbf16>
    %22 = vector.shape_cast %21 : vector<1x128x128xbf16> to vector<128x128xbf16>
    %23 = vector.shape_cast %20 : vector<128x128xbf16> to vector<1x128x128xbf16>
    tpu.vector_store %arg6[%c0_13, %c0_14, %c0_15], %23 {strides = array<i32>} : memref<1x128x128xbf16, #tpu.memory_space<vmem>>, vector<1x128x128xbf16>,
    return
  }
  func.func @transform_0(%arg0: i32, %arg1: i32) -> (i32, i32, i32) {
    %c0_i32 = arith.constant 0 : i32
    %c0_i32_0 = arith.constant 0 : i32
    return %arg0, %arg1, %c0_i32 : i32, i32, i32
  }
  func.func @transform_1(%arg0: i32, %arg1: i32) -> (i32, i32, i32, i32) {
    %c0_i32 = arith.constant 0 : i32
    %c0_i32_0 = arith.constant 0 : i32
    %c0_i32_1 = arith.constant 0 : i32
    %c0_i32_2 = arith.constant 0 : i32
    return %arg0, %c0_i32, %c0_i32_0, %c0_i32_1 : i32, i32, i32, i32
  }
  func.func @transform_2(%arg0: i32, %arg1: i32) -> (i32, i32) {
    %c0_i32 = arith.constant 0 : i32
    %c0_i32_0 = arith.constant 0 : i32
    %c0_i32_1 = arith.constant 0 : i32
    return %c0_i32, %c0_i32_0 : i32, i32
  }
  func.func @transform_3(%arg0: i32, %arg1: i32) -> (i32, i32) {
    %c0_i32 = arith.constant 0 : i32
    %c0_i32_0 = arith.constant 0 : i32
    %c0_i32_1 = arith.constant 0 : i32
    return %c0_i32, %c0_i32_0 : i32, i32
  }
  func.func @transform_4(%arg0: i32, %arg1: i32) -> (i32, i32, i32) {
    %c0_i32 = arith.constant 0 : i32
    %c0_i32_0 = arith.constant 0 : i32
    return %arg0, %arg1, %c0_i32 : i32, i32, i32
  }
}

</mosaic_0001>

<llo_original>
// kernel: attention_refinement_module.3
$region0: #{attention_refinement_module.3}
  #allocation0 [shape = 'u32[]', space=smem, size = 0x4, offset = 0x4, fixed_abs, tag = 'smem constant byte address 0x4 - core index']
  #allocation1 [shape = 'u32[144,128]{1,0:T(1,128)}', space=vmem, size = 0x12000, scoped, tag = 'internal scratch']
  %s0 = inlined_call_operand.vmem [shape: bf16[2,256,128], index: 0, kind: input, shape index: {}, may-alias: {0,4}]
  %s1 = inlined_call_operand.vmem [shape: f32[2,2,1,128], index: 1, kind: input, shape index: {}]
  %s2 = inlined_call_operand.vmem [shape: bf16[128,128], index: 2, kind: input, shape index: {}]
  %s3 = inlined_call_operand.vmem [shape: f32[1,128], index: 3, kind: input, shape index: {}]
  %s4 = inlined_call_operand.vmem [shape: bf16[2,256,128], index: 4, kind: output, shape index: {}, may-alias: {0,4}]
  %s5 = sld [smem:[#allocation0]]
  $region49: #{attention_refinement_module.3} parent=0
    _
  %s7 = ssub.s32 1, %s5
  %s8 = scalar_select 0, %s7, %s5
  loop: start=0, step=1, limit=6
  $region2: #{attention_refinement_module.3} parent=0 // loop_pre_header
    _
  $region3: #{attention_refinement_module.3} parent=0 // loop_header
    %s10 = sphi 0, %s14
    %p11 = scmp.ge.s32.totalorder %s10, 6
    %s17 = sphi 0, %s29
    %s18 = sphi 0, %s25
    %s19 = sphi 0, %s17
    %s20 = sphi 0, %s18
    %s21 = sphi 0, %s19
    %s22 = sphi 0, %s20
    %s34 = sphi 0, %s36
    %s37 = sphi 0, %s34
    %s38 = sphi 0, %s37
    %s54 = sphi 0, %s38
    %s60 = sphi 0, %s62
    %s63 = sphi 0, %s60
    %s64 = sphi 0, %s63
    %s80 = sphi 0, %s64
    %s84 = sphi 0, %s84
    %s86 = sphi 0, %s84
    %s87 = sphi 0, %s86
    %s101 = sphi 0, %s87
    %s105 = sphi 0, %s105
    %s107 = sphi 0, %s105
    %s108 = sphi 0, %s107
    %s122 = sphi 0, %s108
    %s130 = sphi 0, %s132
    %s133 = sphi 0, %s130
    %s134 = sphi 0, %s133
    %s150 = sphi 0, %s134
  $region4: #{attention_refinement_module.3} parent=0 // loop_header_branch
    %13 = sbr.rel (%p11) target = $region8
  $region5: #{attention_refinement_module.3} parent=0 // loop_body
    %s15 = ssub.s32 %s10, 1
    %s16 = ssub.s32 %s10, 2
    %s23 = sadd.s32 1, %s18
    %p24 = scmp.ge.s32.totalorder %s23, 2
    %s25 = scalar_select %p24, 0, %s23
    %s26 = sadd.s32 1, %s17
    %s27 = scalar_select %p24, %s26, %s17
    %p28 = scmp.ge.s32.totalorder %s27, 2
    %s29 = scalar_select %p28, 0, %s27
    %s30 = ssub.s32 %s17, %s29
    %s31 = ssub.s32 %s18, %s25
    %s32 = sor.u32 %s30, %s31
    %p33 = scmp.eq.s32.totalorder %s32, 0
    %s35 = sadd.s32 %s34, 1
    %s36 = scalar_select %p33, %s34, %s35
    %p39 = pneg %p33
    %p40 = scmp.eq.s32.totalorder %s10, 3
    %p41 = por %p39, %p40
    %p42 = scmp.ne.s32.totalorder %s34, %s37
    %p43 = scmp.eq.s32.totalorder %s10, 0
    %p44 = por %p42, %p43
    %p45 = scmp.ne.s32.totalorder %s34, %s37
    %p46 = scmp.eq.s32.totalorder %s15, 3
    %p47 = por %p45, %p46
    %p48 = scmp.ne.s32.totalorder %s37, %s38
    %p49 = scmp.eq.s32.totalorder %s15, 0
    %p50 = por %p48, %p49
    %p51 = scmp.ne.s32.totalorder %s37, %s38
    %p52 = scmp.eq.s32.totalorder %s16, 3
    %p53 = por %p51, %p52
    %p55 = scmp.ne.s32.totalorder %s38, %s54
    %p56 = scmp.eq.s32.totalorder %s16, 0
    %p57 = por %p55, %p56
    %s58 = ssub.s32 %s17, %s29
    %p59 = scmp.eq.s32.totalorder %s58, 0
    %s61 = sadd.s32 %s60, 1
    %s62 = scalar_select %p59, %s60, %s61
    %p65 = pneg %p59
    %p66 = scmp.eq.s32.totalorder %s10, 3
    %p67 = por %p65, %p66
    %p68 = scmp.ne.s32.totalorder %s60, %s63
    %p69 = scmp.eq.s32.totalorder %s10, 0
    %p70 = por %p68, %p69
    %p71 = scmp.ne.s32.totalorder %s60, %s63
    %p72 = scmp.eq.s32.totalorder %s15, 3
    %p73 = por %p71, %p72
    %p74 = scmp.ne.s32.totalorder %s63, %s64
    %p75 = scmp.eq.s32.totalorder %s15, 0
    %p76 = por %p74, %p75
    %p77 = scmp.ne.s32.totalorder %s63, %s64
    %p78 = scmp.eq.s32.totalorder %s16, 3
    %p79 = por %p77, %p78
    %p81 = scmp.ne.s32.totalorder %s64, %s80
    %p82 = scmp.eq.s32.totalorder %s16, 0
    %p83 = por %p81, %p82
    %s85 = sadd.s32 %s84, 1
    %p88 = scmp.eq.s32.totalorder %s10, 3
    %p89 = scmp.ne.s32.totalorder %s84, %s86
    %p90 = scmp.eq.s32.totalorder %s10, 0
    %p91 = por %p89, %p90
    %p92 = scmp.ne.s32.totalorder %s84, %s86
    %p93 = scmp.eq.s32.totalorder %s15, 3
    %p94 = por %p92, %p93
    %p95 = scmp.ne.s32.totalorder %s86, %s87
    %p96 = scmp.eq.s32.totalorder %s15, 0
    %p97 = por %p95, %p96
    %p98 = scmp.ne.s32.totalorder %s86, %s87
    %p99 = scmp.eq.s32.totalorder %s16, 3
    %p100 = por %p98, %p99
    %p102 = scmp.ne.s32.totalorder %s87, %s101
    %p103 = scmp.eq.s32.totalorder %s16, 0
    %p104 = por %p102, %p103
    %s106 = sadd.s32 %s105, 1
    %p109 = scmp.eq.s32.totalorder %s10, 3
    %p110 = scmp.ne.s32.totalorder %s105, %s107
    %p111 = scmp.eq.s32.totalorder %s10, 0
    %p112 = por %p110, %p111
    %p113 = scmp.ne.s32.totalorder %s105, %s107
    %p114 = scmp.eq.s32.totalorder %s15, 3
    %p115 = por %p113, %p114
    %p116 = scmp.ne.s32.totalorder %s107, %s108
    %p117 = scmp.eq.s32.totalorder %s15, 0
    %p118 = por %p116, %p117
    %p119 = scmp.ne.s32.totalorder %s107, %s108
    %p120 = scmp.eq.s32.totalorder %s16, 3
    %p121 = por %p119, %p120
    %p123 = scmp.ne.s32.totalorder %s108, %s122
    %p124 = scmp.eq.s32.totalorder %s16, 0
    %p125 = por %p123, %p124
    %s126 = ssub.s32 %s17, %s29
    %s127 = ssub.s32 %s18, %s25
    %s128 = sor.u32 %s126, %s127
    %p129 = scmp.eq.s32.totalorder %s128, 0
    %s131 = sadd.s32 %s130, 1
    %s132 = scalar_select %p129, %s130, %s131
    %p135 = pneg %p129
    %p136 = scmp.eq.s32.totalorder %s10, 3
    %p137 = por %p135, %p136
    %p138 = scmp.ne.s32.totalorder %s130, %s133
    %p139 = scmp.eq.s32.totalorder %s10, 0
    %p140 = por %p138, %p139
    %p141 = scmp.ne.s32.totalorder %s130, %s133
    %p142 = scmp.eq.s32.totalorder %s15, 3
    %p143 = por %p141, %p142
    %p144 = scmp.ne.s32.totalorder %s133, %s134
    %p145 = scmp.eq.s32.totalorder %s15, 0
    %p146 = por %p144, %p145
    %p147 = scmp.ne.s32.totalorder %s133, %s134
    %p148 = scmp.eq.s32.totalorder %s16, 3
    %p149 = por %p147, %p148
    %p151 = scmp.ne.s32.totalorder %s134, %s150
    %p152 = scmp.eq.s32.totalorder %s16, 0
    %p153 = por %p151, %p152
    %p154 = scmp.le.s32.totalorder 1, %s10
    %p155 = scmp.lt.s32.totalorder %s10, 5
    %p156 = pnand %p154, %p155
    %p157 = pneg %p156
    // Predicated region
    $region9: #{attention_refinement_module.3} parent=5 // pred_check
      _
    $region10: #{attention_refinement_module.3} parent=5 // pred_check_branch
      %159 = sbr.rel (%p156) target = $region12
    $region11: #{attention_refinement_module.3} parent=5 // pred_region
      %s160 = ssub.s32 %s10, 1
      // Predicated region
      $region13: #{attention_refinement_module.3} parent=11 // pred_check
        %p161 = pneg %p97
      $region14: #{attention_refinement_module.3} parent=11 // pred_check_branch
        %163 = sbr.rel (%p161) target = $region16
      $region15: #{attention_refinement_module.3} parent=11 // pred_region
        _
      $region16: #{attention_refinement_module.3} parent=11 // pred_fallthru
        _
      // Predicated region
      $region17: #{attention_refinement_module.3} parent=11 // pred_check
        %p164 = pneg %p118
      $region18: #{attention_refinement_module.3} parent=11 // pred_check_branch
        %166 = sbr.rel (%p164) target = $region20
      $region19: #{attention_refinement_module.3} parent=11 // pred_region
        _
      $region20: #{attention_refinement_module.3} parent=11 // pred_fallthru
        _
    $region12: #{attention_refinement_module.3} parent=5 // pred_fallthru
      _
    %p167 = scmp.lt.s32.totalorder %s10, 4
    // Predicated region
    $region21: #{attention_refinement_module.3} parent=5 // pred_check
      %p168 = pneg %p167
    $region22: #{attention_refinement_module.3} parent=5 // pred_check_branch
      %170 = sbr.rel (%p168) target = $region24
    $region23: #{attention_refinement_module.3} parent=5 // pred_region
      // Predicated region
      $region25: #{attention_refinement_module.3} parent=23 // pred_check
        %p171 = pneg %p44
      $region26: #{attention_refinement_module.3} parent=23 // pred_check_branch
        %173 = sbr.rel (%p171) target = $region28
      $region27: #{attention_refinement_module.3} parent=23 // pred_region
        %s174 = smul.u32 16, %s18
        %p175 = scmp.lt.s32.totalorder %s17, 1
        %s176 = scalar_select %p175, %s17, 1
        %p177 = scmp.lt.s32.totalorder %s174, 31
        %s178 = scalar_select %p177, %s174, 31
        %s179 = smul.addr %s176, 32
        %s180 = sadd.s32 %s178, %s179
        %s181 = smul.addr %s180, 4
        %s182 = scalar_lea.vmem %s0, %s181
        %s183 = smul.u32 16, %s18
      $region28: #{attention_refinement_module.3} parent=23 // pred_fallthru
        _
      // Predicated region
      $region29: #{attention_refinement_module.3} parent=23 // pred_check
        %p184 = pneg %p70
      $region30: #{attention_refinement_module.3} parent=23 // pred_check_branch
        %186 = sbr.rel (%p184) target = $region32
      $region31: #{attention_refinement_module.3} parent=23 // pred_region
        %p187 = scmp.lt.s32.totalorder %s17, 1
        %s188 = scalar_select %p187, %s17, 1
        %s189 = smul.addr %s188, 2
        %s190 = scalar_lea.vmem %s1, %s189
      $region32: #{attention_refinement_module.3} parent=23 // pred_fallthru
        _
    $region24: #{attention_refinement_module.3} parent=5 // pred_fallthru
      _
    %p191 = scmp.le.s32.totalorder 1, %s10
    %p192 = scmp.lt.s32.totalorder %s10, 5
    %p193 = pnand %p191, %p192
    %p194 = pneg %p193
    // Predicated region
    $region33: #{attention_refinement_module.3} parent=5 // pred_check
      _
    $region34: #{attention_refinement_module.3} parent=5 // pred_check_branch
      %196 = sbr.rel (%p193) target = $region36
    $region35: #{attention_refinement_module.3} parent=5 // pred_region
      %s197 = ssub.s32 %s10, 1
      %s198 = smul.u32 16, %s20
      %p199 = scmp.lt.s32.totalorder %s19, 1
      %s200 = scalar_select %p199, %s19, 1
      %p201 = scmp.lt.s32.totalorder %s198, 31
      %s202 = scalar_select %p201, %s198, 31
      %s203 = smul.addr %s200, 32
      %s204 = sadd.s32 %s202, %s203
      %s205 = smul.addr %s204, 4
      %s206 = scalar_lea.vmem %s0, %s205
      %p207 = pneg %p50
      %p208 = pneg %p47
      %p209 = scmp.lt.s32.totalorder %s19, 1
      %s210 = scalar_select %p209, %s19, 1
      %s211 = smul.addr %s210, 2
      %s212 = scalar_lea.vmem %s1, %s211
      %p213 = pneg %p76
      %p214 = pneg %p73
      %p215 = pneg %p97
      %p216 = pneg %p94
      %p217 = pneg %p118
      %p218 = pneg %p115
      %p219 = pneg %p146
      %p220 = pneg %p143
      %s221 = smul.u32 16, %s20
      %p222 = scmp.lt.s32.totalorder %s19, 1
      %s223 = scalar_select %p222, %s19, 1
      %p224 = scmp.lt.s32.totalorder %s221, 31
      %s225 = scalar_select %p224, %s221, 31
      %s226 = smul.addr %s223, 32
      %s227 = sadd.s32 %s225, %s226
      %s228 = smul.addr %s227, 4
      %s229 = scalar_lea.vmem %s4, %s228
      %s230 = smul.u32 16, %s20
      %p231 = scmp.lt.s32.totalorder %s19, 1
      %s232 = scalar_select %p231, %s19, 1
      %p233 = scmp.lt.s32.totalorder %s230, 31
      %s234 = scalar_select %p233, %s230, 31
      %s235 = smul.addr %s232, 32
      %s236 = sadd.s32 %s234, %s235
      %s237 = smul.addr %s236, 4
      %s238 = scalar_lea.vmem %s0, %s237
      %s239 = smul.u32 16, %s20
      %p240 = scmp.lt.s32.totalorder %s19, 1
      %s241 = scalar_select %p240, %s19, 1
      %s242 = smul.addr %s241, 2
      %s243 = scalar_lea.vmem %s1, %s242
      %s244 = smul.u32 16, %s20
      %p245 = scmp.lt.s32.totalorder %s19, 1
      %s246 = scalar_select %p245, %s19, 1
      %p247 = scmp.lt.s32.totalorder %s244, 31
      %s248 = scalar_select %p247, %s244, 31
      %s249 = smul.addr %s246, 32
      %s250 = sadd.s32 %s248, %s249
      %s251 = smul.addr %s250, 4
      %s252 = scalar_lea.vmem %s4, %s251
      %s253 = smul.u32 16, %s20
      %v255 = vld [vmem:[%s243] sm:$0x1]
      %v256 = vld [vmem:[%s243 + $0x1] sm:$0x1]
      %vm257 = vcmask 1040384
      %v258 = vsel %vm257, %v255, 0.0
      %v259 = vsel %vm257, %v256, 0.0
      %v260 = vadd.f32 %v258, %v259
      %v261 = vmul.f32 %v260, 0.00390625
      %v262 = vpack.c.bf16 %v261, %v261
      %v263 = vld [vmem:[%s2] sm:$0xf]
      %v264 = vld [vmem:[%s2 + $0x4] sm:$0xf]
      %v265 = vld [vmem:[%s2 + $0x8] sm:$0xf]
      %v266 = vld [vmem:[%s2 + $0xc] sm:$0xf]
      %v267 = vld [vmem:[%s2 + $0x10] sm:$0xf]
      %v268 = vld [vmem:[%s2 + $0x14] sm:$0xf]
      %v269 = vld [vmem:[%s2 + $0x18] sm:$0xf]
      %v270 = vld [vmem:[%s2 + $0x1c] sm:$0xf]
      %v271 = vld [vmem:[%s2 + $0x20] sm:$0xf]
      %v272 = vld [vmem:[%s2 + $0x24] sm:$0xf]
      %v273 = vld [vmem:[%s2 + $0x28] sm:$0xf]
      %v274 = vld [vmem:[%s2 + $0x2c] sm:$0xf]
      %v275 = vld [vmem:[%s2 + $0x30] sm:$0xf]
      %v276 = vld [vmem:[%s2 + $0x34] sm:$0xf]
      %v277 = vld [vmem:[%s2 + $0x38] sm:$0xf]
      %v278 = vld [vmem:[%s2 + $0x3c] sm:$0xf]
      %v279 = vld [vmem:[%s3] sm:$0x1]
      %v296 = vunpack.c.l.b16 %v263
      %v297 = vunpack.c.l.b16 %v264
      %v298 = vunpack.c.l.b16 %v265
      %v299 = vunpack.c.l.b16 %v266
      %v300 = vunpack.c.l.b16 %v267
      %v301 = vunpack.c.l.b16 %v268
      %v302 = vunpack.c.l.b16 %v269
      %v303 = vunpack.c.l.b16 %v270
      %v304 = vunpack.c.l.b16 %v271
      %v305 = vunpack.c.l.b16 %v272
      %v306 = vunpack.c.l.b16 %v273
      %v307 = vunpack.c.l.b16 %v274
      %v308 = vunpack.c.l.b16 %v275
      %v309 = vunpack.c.l.b16 %v276
      %v310 = vunpack.c.l.b16 %v277
      %v311 = vunpack.c.l.b16 %v278
      %v312 = vpack.c.b16 %v297, %v296
      %v313 = vpack.c.b16 %v299, %v298
      %v314 = vpack.c.b16 %v301, %v300
      %v315 = vpack.c.b16 %v303, %v302
      %v316 = vpack.c.b16 %v305, %v304
      %v317 = vpack.c.b16 %v307, %v306
      %v318 = vpack.c.b16 %v309, %v308
      %v319 = vpack.c.b16 %v311, %v310
      %328 = vmatprep.subr.bf16.mxu0 0
      %329 = vmatpush1.bf16.msra.mxu0 %v312
      %330 = vmatprep.subr.bf16.mxu0 0
      %331 = vmatpush1.bf16.msra.mxu0 %v313
      %332 = vmatprep.subr.bf16.mxu0 0
      %333 = vmatpush1.bf16.msra.mxu0 %v314
      %334 = vmatprep.subr.bf16.mxu0 0
      %335 = vmatpush1.bf16.msra.mxu0 %v315
      %336 = vmatprep.subr.bf16.mxu0 0
      %337 = vmatpush1.bf16.msra.mxu0 %v316
      %338 = vmatprep.subr.bf16.mxu0 0
      %339 = vmatpush1.bf16.msra.mxu0 %v317
      %340 = vmatprep.subr.bf16.mxu0 0
      %341 = vmatpush1.bf16.msra.mxu0 %v318
      %342 = vmatprep.subr.bf16.mxu0 0
      %343 = vmatpush1.bf16.msra.mxu0 %v319
      %344 = vmatprep.subr.bf16.mxu0 0
      %345 = vmatpush1.bf16.msra.mxu0 0
      %346 = vmatprep.subr.bf16.mxu0 0
      %347 = vmatpush1.bf16.msra.mxu0 0
      %348 = vmatprep.subr.bf16.mxu0 0
      %349 = vmatpush1.bf16.msra.mxu0 0
      %350 = vmatprep.subr.bf16.mxu0 0
      %351 = vmatpush1.bf16.msra.mxu0 0
      %352 = vmatprep.subr.bf16.mxu0 0
      %353 = vmatpush1.bf16.msra.mxu0 0
      %354 = vmatprep.subr.bf16.mxu0 0
      %355 = vmatpush1.bf16.msra.mxu0 0
      %356 = vmatprep.subr.bf16.mxu0 0
      %357 = vmatpush1.bf16.msra.mxu0 0
      %358 = vmatprep.subr.bf16.mxu0 0
      %359 = vmatpush1.bf16.msra.mxu0 0
      %360 = vmatprep.mubr.bf16.mxu0 0
      %361 = vmatmul.mubr.bf16.gmra.mrb[0].mxu0 %v262
      %v362 = vpop.f32.mrb[0].mxu0
      %v363 = vadd.f32 %v279, %v362
      %v364 = vpop.f32.mrb[0].mxu0
      %v365 = vpop.f32.mrb[0].mxu0
      %v366 = vpop.f32.mrb[0].mxu0
      %367 = vdwg.mxu0
      %v368 = vxor.u32 %v363, 2147483648
      %v369 = vmul.f32 %v368, 1.442695
      %v370 = vpow.pop %v369
      %v371 = vadd.f32 %v370, 1.0
      %v372 = vrcp.pop %v371
      %v373 = vmul.f32 1.0, %v372
      %v374 = vld [vmem:[%s238] sm:$0xf]
      %v375 = vld [vmem:[%s238 + $0x4] sm:$0xf]
      %v376 = vld [vmem:[%s238 + $0x8] sm:$0xf]
      %v377 = vld [vmem:[%s238 + $0xc] sm:$0xf]
      %v378 = vld [vmem:[%s238 + $0x10] sm:$0xf]
      %v379 = vld [vmem:[%s238 + $0x14] sm:$0xf]
      %v380 = vld [vmem:[%s238 + $0x18] sm:$0xf]
      %v381 = vld [vmem:[%s238 + $0x1c] sm:$0xf]
      %v382 = vld [vmem:[%s238 + $0x20] sm:$0xf]
      %v383 = vld [vmem:[%s238 + $0x24] sm:$0xf]
      %v384 = vld [vmem:[%s238 + $0x28] sm:$0xf]
      %v385 = vld [vmem:[%s238 + $0x2c] sm:$0xf]
      %v386 = vld [vmem:[%s238 + $0x30] sm:$0xf]
      %v387 = vld [vmem:[%s238 + $0x34] sm:$0xf]
      %v388 = vld [vmem:[%s238 + $0x38] sm:$0xf]
      %v389 = vld [vmem:[%s238 + $0x3c] sm:$0xf]
      %v390 = vunpack.c.l.bf16 %v374
      %v391 = vunpack.c.l.bf16 %v375
      %v392 = vunpack.c.l.bf16 %v376
      %v393 = vunpack.c.l.bf16 %v377
      %v394 = vunpack.c.l.bf16 %v378
      %v395 = vunpack.c.l.bf16 %v379
      %v396 = vunpack.c.l.bf16 %v380
      %v397 = vunpack.c.l.bf16 %v381
      %v398 = vunpack.c.l.bf16 %v382
      %v399 = vunpack.c.l.bf16 %v383
      %v400 = vunpack.c.l.bf16 %v384
      %v401 = vunpack.c.l.bf16 %v385
      %v402 = vunpack.c.l.bf16 %v386
      %v403 = vunpack.c.l.bf16 %v387
      %v404 = vunpack.c.l.bf16 %v388
      %v405 = vunpack.c.l.bf16 %v389
      %v406 = vlaneseq
      %v407 = vshrl.u32 %v406, 7
      %v408 = vsub.s32 0, %v407
      %v409 = vrot.slane %v373, %v408
      %v410 = vmul.f32 %v390, %v409
      %v411 = vmul.f32 %v391, %v409
      %v412 = vmul.f32 %v392, %v409
      %v413 = vmul.f32 %v393, %v409
      %v414 = vmul.f32 %v394, %v409
      %v415 = vmul.f32 %v395, %v409
      %v416 = vmul.f32 %v396, %v409
      %v417 = vmul.f32 %v397, %v409
      %v418 = vmul.f32 %v398, %v409
      %v419 = vmul.f32 %v399, %v409
      %v420 = vmul.f32 %v400, %v409
      %v421 = vmul.f32 %v401, %v409
      %v422 = vmul.f32 %v402, %v409
      %v423 = vmul.f32 %v403, %v409
      %v424 = vmul.f32 %v404, %v409
      %v425 = vmul.f32 %v405, %v409
      %v426 = vpack.c.bf16 %v411, %v410
      %v427 = vpack.c.bf16 %v413, %v412
      %v428 = vpack.c.bf16 %v415, %v414
      %v429 = vpack.c.bf16 %v417, %v416
      %v430 = vpack.c.bf16 %v419, %v418
      %v431 = vpack.c.bf16 %v421, %v420
      %v432 = vpack.c.bf16 %v423, %v422
      %v433 = vpack.c.bf16 %v425, %v424
      %v442 = vunpack.c.l.b16 %v426
      %v443 = vunpack.c.h.b16 %v426
      %v444 = vunpack.c.l.b16 %v427
      %v445 = vunpack.c.h.b16 %v427
      %v446 = vunpack.c.l.b16 %v428
      %v447 = vunpack.c.h.b16 %v428
      %v448 = vunpack.c.l.b16 %v429
      %v449 = vunpack.c.h.b16 %v429
      %v450 = vunpack.c.l.b16 %v430
      %v451 = vunpack.c.h.b16 %v430
      %v452 = vunpack.c.l.b16 %v431
      %v453 = vunpack.c.h.b16 %v431
      %v454 = vunpack.c.l.b16 %v432
      %v455 = vunpack.c.h.b16 %v432
      %v456 = vunpack.c.l.b16 %v433
      %v457 = vunpack.c.h.b16 %v433
      %v458 = vpack.c.b16 %v442, %v442
      %v459 = vpack.c.b16 %v443, %v443
      %v460 = vpack.c.b16 %v444, %v444
      %v461 = vpack.c.b16 %v445, %v445
      %v462 = vpack.c.b16 %v446, %v446
      %v463 = vpack.c.b16 %v447, %v447
      %v464 = vpack.c.b16 %v448, %v448
      %v465 = vpack.c.b16 %v449, %v449
      %v466 = vpack.c.b16 %v450, %v450
      %v467 = vpack.c.b16 %v451, %v451
      %v468 = vpack.c.b16 %v452, %v452
      %v469 = vpack.c.b16 %v453, %v453
      %v470 = vpack.c.b16 %v454, %v454
      %v471 = vpack.c.b16 %v455, %v455
      %v472 = vpack.c.b16 %v456, %v456
      %v473 = vpack.c.b16 %v457, %v457
      %490 = vst [vmem:[%s252] sm:$0xf] %v458
      %491 = vst [vmem:[%s252 + $0x4] sm:$0xf] %v459
      %492 = vst [vmem:[%s252 + $0x8] sm:$0xf] %v460
      %493 = vst [vmem:[%s252 + $0xc] sm:$0xf] %v461
      %494 = vst [vmem:[%s252 + $0x10] sm:$0xf] %v462
      %495 = vst [vmem:[%s252 + $0x14] sm:$0xf] %v463
      %496 = vst [vmem:[%s252 + $0x18] sm:$0xf] %v464
      %497 = vst [vmem:[%s252 + $0x1c] sm:$0xf] %v465
      %498 = vst [vmem:[%s252 + $0x20] sm:$0xf] %v466
      %499 = vst [vmem:[%s252 + $0x24] sm:$0xf] %v467
      %500 = vst [vmem:[%s252 + $0x28] sm:$0xf] %v468
      %501 = vst [vmem:[%s252 + $0x2c] sm:$0xf] %v469
      %502 = vst [vmem:[%s252 + $0x30] sm:$0xf] %v470
      %503 = vst [vmem:[%s252 + $0x34] sm:$0xf] %v471
      %504 = vst [vmem:[%s252 + $0x38] sm:$0xf] %v472
      %505 = vst [vmem:[%s252 + $0x3c] sm:$0xf] %v473
      %s506 = smul.u32 16, %s20
      %p507 = scmp.lt.s32.totalorder %s19, 1
      %s508 = scalar_select %p507, %s19, 1
      %p509 = scmp.lt.s32.totalorder %s506, 31
      %s510 = scalar_select %p509, %s506, 31
      %s511 = smul.addr %s508, 32
      %s512 = sadd.s32 %s510, %s511
      %s513 = smul.addr %s512, 4
      %s514 = scalar_lea.vmem %s4, %s513
      // Predicated region
      $region37: #{attention_refinement_module.3} parent=35 // pred_check
        %p515 = pneg %p143
      $region38: #{attention_refinement_module.3} parent=35 // pred_check_branch
        %517 = sbr.rel (%p515) target = $region40
      $region39: #{attention_refinement_module.3} parent=35 // pred_region
        %s518 = smul.u32 16, %s20
      $region40: #{attention_refinement_module.3} parent=35 // pred_fallthru
        _
    $region36: #{attention_refinement_module.3} parent=5 // pred_fallthru
      _
    %p519 = scmp.le.s32.totalorder 2, %s10
    // Predicated region
    $region41: #{attention_refinement_module.3} parent=5 // pred_check
      %p520 = pneg %p519
    $region42: #{attention_refinement_module.3} parent=5 // pred_check_branch
      %522 = sbr.rel (%p520) target = $region44
    $region43: #{attention_refinement_module.3} parent=5 // pred_region
      %s523 = ssub.s32 %s10, 2
      // Predicated region
      $region45: #{attention_refinement_module.3} parent=43 // pred_check
        %p524 = pneg %p149
      $region46: #{attention_refinement_module.3} parent=43 // pred_check_branch
        %526 = sbr.rel (%p524) target = $region48
      $region47: #{attention_refinement_module.3} parent=43 // pred_region
        %s527 = smul.u32 16, %s22
        %p528 = scmp.lt.s32.totalorder %s21, 1
        %s529 = scalar_select %p528, %s21, 1
        %p530 = scmp.lt.s32.totalorder %s527, 31
        %s531 = scalar_select %p530, %s527, 31
        %s532 = smul.addr %s529, 32
        %s533 = sadd.s32 %s531, %s532
        %s534 = smul.addr %s533, 4
        %s535 = scalar_lea.vmem %s4, %s534
      $region48: #{attention_refinement_module.3} parent=43 // pred_fallthru
        _
    $region44: #{attention_refinement_module.3} parent=5 // pred_fallthru
      _
  $region6: #{attention_refinement_module.3} parent=0 // loop_footer
    %s14 = sadd.s32 1, %s10
  $region7: #{attention_refinement_module.3} parent=0 // loop_footer_branch
    %9 = sbr.rel target = $region3
  $region8: #{attention_refinement_module.3} parent=0 // loop_exit
    _

// kernel: attention_refinement_module.2
$region0: #{attention_refinement_module.2}
  #allocation0 [shape = 'u32[]', space=smem, size = 0x4, offset = 0x4, fixed_abs, tag = 'smem constant byte address 0x4 - core index']
  #allocation1 [shape = 'u32[144,128]{1,0:T(1,128)}', space=vmem, size = 0x12000, scoped, tag = 'internal scratch']
  %s0 = inlined_call_operand.vmem [shape: bf16[4,10,18,4], index: 0, kind: input, shape index: {}]
  %s1 = inlined_call_operand.vmem [shape: bf16[9,4,128], index: 1, kind: input, shape index: {}]
  %s2 = inlined_call_operand.vmem [shape: f32[1,128], index: 2, kind: input, shape index: {}]
  %s3 = inlined_call_operand.vmem [shape: bf16[2,256,128], index: 3, kind: output, shape index: {0}]
  %s4 = inlined_call_operand.vmem [shape: f32[2,2,1,128], index: 4, kind: output, shape index: {1}]
  %5 = xla_tuple %s3, %s4
  %s6 = sld [smem:[#allocation0]]
  $region53: #{attention_refinement_module.2} parent=0
    _
  %s8 = ssub.s32 1, %s6
  %s9 = scalar_select 0, %s8, %s6
  loop: start=0, step=1, limit=6
  $region2: #{attention_refinement_module.2} parent=0 // loop_pre_header
    _
  $region3: #{attention_refinement_module.2} parent=0 // loop_header
    %s11 = sphi 0, %s15
    %p12 = scmp.ge.s32.totalorder %s11, 6
    %s18 = sphi 0, %s30
    %s19 = sphi 0, %s26
    %s20 = sphi 0, %s18
    %s21 = sphi 0, %s19
    %s22 = sphi 0, %s20
    %s23 = sphi 0, %s21
    %s37 = sphi 0, %s39
    %s40 = sphi 0, %s37
    %s41 = sphi 0, %s40
    %s57 = sphi 0, %s41
    %s61 = sphi 0, %s61
    %s63 = sphi 0, %s61
    %s64 = sphi 0, %s63
    %s78 = sphi 0, %s64
    %s82 = sphi 0, %s82
    %s84 = sphi 0, %s82
    %s85 = sphi 0, %s84
    %s99 = sphi 0, %s85
    %s107 = sphi 0, %s109
    %s110 = sphi 0, %s107
    %s111 = sphi 0, %s110
    %s127 = sphi 0, %s111
    %s135 = sphi 0, %s137
    %s138 = sphi 0, %s135
    %s139 = sphi 0, %s138
    %s155 = sphi 0, %s139
  $region4: #{attention_refinement_module.2} parent=0 // loop_header_branch
    %14 = sbr.rel (%p12) target = $region8
  $region5: #{attention_refinement_module.2} parent=0 // loop_body
    %s16 = ssub.s32 %s11, 1
    %s17 = ssub.s32 %s11, 2
    %s24 = sadd.s32 1, %s19
    %p25 = scmp.ge.s32.totalorder %s24, 2
    %s26 = scalar_select %p25, 0, %s24
    %s27 = sadd.s32 1, %s18
    %s28 = scalar_select %p25, %s27, %s18
    %p29 = scmp.ge.s32.totalorder %s28, 2
    %s30 = scalar_select %p29, 0, %s28
    %s31 = smul.u32 %s18, 2
    %s32 = sadd.s32 %s31, %s19
    %s33 = smul.u32 %s30, 2
    %s34 = sadd.s32 %s33, %s26
    %s35 = ssub.s32 %s32, %s34
    %p36 = scmp.eq.s32.totalorder %s35, 0
    %s38 = sadd.s32 %s37, 1
    %s39 = scalar_select %p36, %s37, %s38
    %p42 = pneg %p36
    %p43 = scmp.eq.s32.totalorder %s11, 3
    %p44 = por %p42, %p43
    %p45 = scmp.ne.s32.totalorder %s37, %s40
    %p46 = scmp.eq.s32.totalorder %s11, 0
    %p47 = por %p45, %p46
    %p48 = scmp.ne.s32.totalorder %s37, %s40
    %p49 = scmp.eq.s32.totalorder %s16, 3
    %p50 = por %p48, %p49
    %p51 = scmp.ne.s32.totalorder %s40, %s41
    %p52 = scmp.eq.s32.totalorder %s16, 0
    %p53 = por %p51, %p52
    %p54 = scmp.ne.s32.totalorder %s40, %s41
    %p55 = scmp.eq.s32.totalorder %s17, 3
    %p56 = por %p54, %p55
    %p58 = scmp.ne.s32.totalorder %s41, %s57
    %p59 = scmp.eq.s32.totalorder %s17, 0
    %p60 = por %p58, %p59
    %s62 = sadd.s32 %s61, 1
    %p65 = scmp.eq.s32.totalorder %s11, 3
    %p66 = scmp.ne.s32.totalorder %s61, %s63
    %p67 = scmp.eq.s32.totalorder %s11, 0
    %p68 = por %p66, %p67
    %p69 = scmp.ne.s32.totalorder %s61, %s63
    %p70 = scmp.eq.s32.totalorder %s16, 3
    %p71 = por %p69, %p70
    %p72 = scmp.ne.s32.totalorder %s63, %s64
    %p73 = scmp.eq.s32.totalorder %s16, 0
    %p74 = por %p72, %p73
    %p75 = scmp.ne.s32.totalorder %s63, %s64
    %p76 = scmp.eq.s32.totalorder %s17, 3
    %p77 = por %p75, %p76
    %p79 = scmp.ne.s32.totalorder %s64, %s78
    %p80 = scmp.eq.s32.totalorder %s17, 0
    %p81 = por %p79, %p80
    %s83 = sadd.s32 %s82, 1
    %p86 = scmp.eq.s32.totalorder %s11, 3
    %p87 = scmp.ne.s32.totalorder %s82, %s84
    %p88 = scmp.eq.s32.totalorder %s11, 0
    %p89 = por %p87, %p88
    %p90 = scmp.ne.s32.totalorder %s82, %s84
    %p91 = scmp.eq.s32.totalorder %s16, 3
    %p92 = por %p90, %p91
    %p93 = scmp.ne.s32.totalorder %s84, %s85
    %p94 = scmp.eq.s32.totalorder %s16, 0
    %p95 = por %p93, %p94
    %p96 = scmp.ne.s32.totalorder %s84, %s85
    %p97 = scmp.eq.s32.totalorder %s17, 3
    %p98 = por %p96, %p97
    %p100 = scmp.ne.s32.totalorder %s85, %s99
    %p101 = scmp.eq.s32.totalorder %s17, 0
    %p102 = por %p100, %p101
    %s103 = ssub.s32 %s18, %s30
    %s104 = ssub.s32 %s19, %s26
    %s105 = sor.u32 %s103, %s104
    %p106 = scmp.eq.s32.totalorder %s105, 0
    %s108 = sadd.s32 %s107, 1
    %s109 = scalar_select %p106, %s107, %s108
    %p112 = pneg %p106
    %p113 = scmp.eq.s32.totalorder %s11, 3
    %p114 = por %p112, %p113
    %p115 = scmp.ne.s32.totalorder %s107, %s110
    %p116 = scmp.eq.s32.totalorder %s11, 0
    %p117 = por %p115, %p116
    %p118 = scmp.ne.s32.totalorder %s107, %s110
    %p119 = scmp.eq.s32.totalorder %s16, 3
    %p120 = por %p118, %p119
    %p121 = scmp.ne.s32.totalorder %s110, %s111
    %p122 = scmp.eq.s32.totalorder %s16, 0
    %p123 = por %p121, %p122
    %p124 = scmp.ne.s32.totalorder %s110, %s111
    %p125 = scmp.eq.s32.totalorder %s17, 3
    %p126 = por %p124, %p125
    %p128 = scmp.ne.s32.totalorder %s111, %s127
    %p129 = scmp.eq.s32.totalorder %s17, 0
    %p130 = por %p128, %p129
    %s131 = ssub.s32 %s18, %s30
    %s132 = ssub.s32 %s19, %s26
    %s133 = sor.u32 %s131, %s132
    %p134 = scmp.eq.s32.totalorder %s133, 0
    %s136 = sadd.s32 %s135, 1
    %s137 = scalar_select %p134, %s135, %s136
    %p140 = pneg %p134
    %p141 = scmp.eq.s32.totalorder %s11, 3
    %p142 = por %p140, %p141
    %p143 = scmp.ne.s32.totalorder %s135, %s138
    %p144 = scmp.eq.s32.totalorder %s11, 0
    %p145 = por %p143, %p144
    %p146 = scmp.ne.s32.totalorder %s135, %s138
    %p147 = scmp.eq.s32.totalorder %s16, 3
    %p148 = por %p146, %p147
    %p149 = scmp.ne.s32.totalorder %s138, %s139
    %p150 = scmp.eq.s32.totalorder %s16, 0
    %p151 = por %p149, %p150
    %p152 = scmp.ne.s32.totalorder %s138, %s139
    %p153 = scmp.eq.s32.totalorder %s17, 3
    %p154 = por %p152, %p153
    %p156 = scmp.ne.s32.totalorder %s139, %s155
    %p157 = scmp.eq.s32.totalorder %s17, 0
    %p158 = por %p156, %p157
    %p159 = scmp.le.s32.totalorder 1, %s11
    %p160 = scmp.lt.s32.totalorder %s11, 5
    %p161 = pnand %p159, %p160
    %p162 = pneg %p161
    // Predicated region
    $region9: #{attention_refinement_module.2} parent=5 // pred_check
      _
    $region10: #{attention_refinement_module.2} parent=5 // pred_check_branch
      %164 = sbr.rel (%p161) target = $region12
    $region11: #{attention_refinement_module.2} parent=5 // pred_region
      %s165 = ssub.s32 %s11, 1
      // Predicated region
      $region13: #{attention_refinement_module.2} parent=11 // pred_check
        %p166 = pneg %p74
      $region14: #{attention_refinement_module.2} parent=11 // pred_check_branch
        %168 = sbr.rel (%p166) target = $region16
      $region15: #{attention_refinement_module.2} parent=11 // pred_region
        _
      $region16: #{attention_refinement_module.2} parent=11 // pred_fallthru
        _
      // Predicated region
      $region17: #{attention_refinement_module.2} parent=11 // pred_check
        %p169 = pneg %p95
      $region18: #{attention_refinement_module.2} parent=11 // pred_check_branch
        %171 = sbr.rel (%p169) target = $region20
      $region19: #{attention_refinement_module.2} parent=11 // pred_region
        _
      $region20: #{attention_refinement_module.2} parent=11 // pred_fallthru
        _
    $region12: #{attention_refinement_module.2} parent=5 // pred_fallthru
      _
    %p172 = scmp.lt.s32.totalorder %s11, 4
    // Predicated region
    $region21: #{attention_refinement_module.2} parent=5 // pred_check
      %p173 = pneg %p172
    $region22: #{attention_refinement_module.2} parent=5 // pred_check_branch
      %175 = sbr.rel (%p173) target = $region24
    $region23: #{attention_refinement_module.2} parent=5 // pred_region
      // Predicated region
      $region25: #{attention_refinement_module.2} parent=23 // pred_check
        %p176 = pneg %p47
      $region26: #{attention_refinement_module.2} parent=23 // pred_check_branch
        %178 = sbr.rel (%p176) target = $region28
      $region27: #{attention_refinement_module.2} parent=23 // pred_region
        %s179 = smul.u32 %s18, 2
        %s180 = sadd.s32 %s179, %s19
        %p181 = scmp.lt.s32.totalorder %s180, 3
        %s182 = scalar_select %p181, %s180, 3
        %s183 = smul.addr %s182, 30
        %s184 = smul.addr %s183, 4
        %s185 = scalar_lea.vmem %s0, %s184
        %s186 = smul.u32 %s18, 2
        %s187 = sadd.s32 %s186, %s19
      $region28: #{attention_refinement_module.2} parent=23 // pred_fallthru
        _
    $region24: #{attention_refinement_module.2} parent=5 // pred_fallthru
      _
    %p188 = scmp.le.s32.totalorder 1, %s11
    %p189 = scmp.lt.s32.totalorder %s11, 5
    %p190 = pnand %p188, %p189
    %p191 = pneg %p190
    // Predicated region
    $region29: #{attention_refinement_module.2} parent=5 // pred_check
      _
    $region30: #{attention_refinement_module.2} parent=5 // pred_check_branch
      %193 = sbr.rel (%p190) target = $region32
    $region31: #{attention_refinement_module.2} parent=5 // pred_region
      %s194 = ssub.s32 %s11, 1
      %s195 = smul.u32 %s20, 2
      %s196 = sadd.s32 %s195, %s21
      %p197 = scmp.lt.s32.totalorder %s196, 3
      %s198 = scalar_select %p197, %s196, 3
      %s199 = smul.addr %s198, 30
      %s200 = smul.addr %s199, 4
      %s201 = scalar_lea.vmem %s0, %s200
      %p202 = pneg %p53
      %p203 = pneg %p50
      %p204 = pneg %p74
      %p205 = pneg %p71
      %p206 = pneg %p95
      %p207 = pneg %p92
      %p208 = pneg %p123
      %p209 = pneg %p120
      %s210 = smul.u32 16, %s21
      %p211 = scmp.lt.s32.totalorder %s20, 1
      %s212 = scalar_select %p211, %s20, 1
      %p213 = scmp.lt.s32.totalorder %s210, 31
      %s214 = scalar_select %p213, %s210, 31
      %s215 = smul.addr %s212, 32
      %s216 = sadd.s32 %s214, %s215
      %s217 = smul.addr %s216, 4
      %s218 = scalar_lea.vmem %s3, %s217
      %p219 = pneg %p151
      %p220 = pneg %p148
      %p221 = scmp.lt.s32.totalorder %s20, 1
      %s222 = scalar_select %p221, %s20, 1
      %p223 = scmp.lt.s32.totalorder %s21, 1
      %s224 = scalar_select %p223, %s21, 1
      %s225 = smul.addr %s222, 2
      %s226 = sadd.s32 %s224, %s225
      %s227 = scalar_lea.vmem %s4, %s226
      %s228 = smul.u32 %s20, 2
      %s229 = sadd.s32 %s228, %s21
      %p230 = scmp.lt.s32.totalorder %s229, 3
      %s231 = scalar_select %p230, %s229, 3
      %s232 = smul.addr %s231, 30
      %s233 = smul.addr %s232, 4
      %s234 = scalar_lea.vmem %s0, %s233
      %s235 = smul.u32 %s20, 2
      %s236 = sadd.s32 %s235, %s21
      %s237 = smul.u32 16, %s21
      %p238 = scmp.lt.s32.totalorder %s20, 1
      %s239 = scalar_select %p238, %s20, 1
      %p240 = scmp.lt.s32.totalorder %s237, 31
      %s241 = scalar_select %p240, %s237, 31
      %s242 = smul.addr %s239, 32
      %s243 = sadd.s32 %s241, %s242
      %s244 = smul.addr %s243, 4
      %s245 = scalar_lea.vmem %s3, %s244
      %s246 = smul.u32 16, %s21
      %p247 = scmp.lt.s32.totalorder %s20, 1
      %s248 = scalar_select %p247, %s20, 1
      %p249 = scmp.lt.s32.totalorder %s21, 1
      %s250 = scalar_select %p249, %s21, 1
      %s251 = smul.addr %s248, 2
      %s252 = sadd.s32 %s250, %s251
      %s253 = scalar_lea.vmem %s4, %s252
      %v255 = vld [vmem:[%s234] sm:$0xf]
      %v256 = vld [vmem:[%s234 + $0x4] sm:$0xf]
      %v257 = vld [vmem:[%s234 + $0xc] sm:$0xf]
      %v258 = vld [vmem:[%s234 + $0x10] sm:$0xf]
      %v259 = vld [vmem:[%s234 + $0x18] sm:$0xf]
      %v260 = vld [vmem:[%s234 + $0x1c] sm:$0xf]
      %v261 = vld [vmem:[%s234 + $0x24] sm:$0xf]
      %v262 = vld [vmem:[%s234 + $0x28] sm:$0xf]
      %v263 = vld [vmem:[%s234 + $0x30] sm:$0xf]
      %v264 = vld [vmem:[%s234 + $0x34] sm:$0xf]
      %v265 = vld [vmem:[%s234 + $0x3c] sm:$0xf]
      %v266 = vld [vmem:[%s234 + $0x40] sm:$0xf]
      %v267 = vld [vmem:[%s234 + $0x48] sm:$0xf]
      %v268 = vld [vmem:[%s234 + $0x4c] sm:$0xf]
      %v269 = vld [vmem:[%s234 + $0x54] sm:$0xf]
      %v270 = vld [vmem:[%s234 + $0x58] sm:$0xf]
      %v271 = vld [vmem:[%s1] sm:$0x3]
      %v272 = vld [vmem:[%s234 + $0x8] sm:$0x1]
      %v273 = vld [vmem:[%s234 + $0x14] sm:$0x1]
      %v274 = vld [vmem:[%s234 + $0x20] sm:$0x1]
      %v275 = vld [vmem:[%s234 + $0x2c] sm:$0x1]
      %v276 = vld [vmem:[%s234 + $0x38] sm:$0x1]
      %v277 = vld [vmem:[%s234 + $0x44] sm:$0x1]
      %v278 = vld [vmem:[%s234 + $0x50] sm:$0x1]
      %v279 = vld [vmem:[%s234 + $0x5c] sm:$0x1]
      %vm280 = vsmask.f32 3328
      %vm281 = vsmask.f32 7440
      %vm282 = vmor %vm280, %vm281
      %v284 = vshrl.u32 %v255, 16
      %v286 = vrot.slane %v284, 4
      %v287 = vshll.u32 %v255, 16
      %v289 = vrot.slane %v287, 5
      %v290 = vor.u32 %v286, %v289
      %v291 = vrot.slane %v290, 4
      %v293 = vshll.u32 %v256, 16
      %v295 = vrot.slane %v293, 5
      %v296 = vsel %vm282, %v291, %v295
      %v297 = vshrl.u32 %v256, 16
      %v299 = vrot.slane %v297, 4
      %v300 = vor.u32 %v299, %v295
      %v301 = vrot.slane %v300, 4
      %v303 = vshll.u32 %v272, 16
      %v305 = vrot.slane %v303, 5
      %v306 = vsel %vm282, %v301, %v305
      %v308 = vshrl.u32 %v257, 16
      %v310 = vrot.slane %v308, 4
      %v311 = vshll.u32 %v257, 16
      %v313 = vrot.slane %v311, 5
      %v314 = vor.u32 %v310, %v313
      %v315 = vrot.slane %v314, 4
      %v317 = vshll.u32 %v258, 16
      %v319 = vrot.slane %v317, 5
      %v320 = vsel %vm282, %v315, %v319
      %v321 = vshrl.u32 %v258, 16
      %v323 = vrot.slane %v321, 4
      %v324 = vor.u32 %v323, %v319
      %v325 = vrot.slane %v324, 4
      %v327 = vshll.u32 %v273, 16
      %v329 = vrot.slane %v327, 5
      %v330 = vsel %vm282, %v325, %v329
      %v332 = vshrl.u32 %v259, 16
      %v334 = vrot.slane %v332, 4
      %v335 = vshll.u32 %v259, 16
      %v337 = vrot.slane %v335, 5
      %v338 = vor.u32 %v334, %v337
      %v339 = vrot.slane %v338, 4
      %v341 = vshll.u32 %v260, 16
      %v343 = vrot.slane %v341, 5
      %v344 = vsel %vm282, %v339, %v343
      %v345 = vshrl.u32 %v260, 16
      %v347 = vrot.slane %v345, 4
      %v348 = vor.u32 %v347, %v343
      %v349 = vrot.slane %v348, 4
      %v351 = vshll.u32 %v274, 16
      %v353 = vrot.slane %v351, 5
      %v354 = vsel %vm282, %v349, %v353
      %v356 = vshrl.u32 %v261, 16
      %v358 = vrot.slane %v356, 4
      %v359 = vshll.u32 %v261, 16
      %v361 = vrot.slane %v359, 5
      %v362 = vor.u32 %v358, %v361
      %v363 = vrot.slane %v362, 4
      %v365 = vshll.u32 %v262, 16
      %v367 = vrot.slane %v365, 5
      %v368 = vsel %vm282, %v363, %v367
      %v369 = vshrl.u32 %v262, 16
      %v371 = vrot.slane %v369, 4
      %v372 = vor.u32 %v371, %v367
      %v373 = vrot.slane %v372, 4
      %v375 = vshll.u32 %v275, 16
      %v377 = vrot.slane %v375, 5
      %v378 = vsel %vm282, %v373, %v377
      %v380 = vshrl.u32 %v263, 16
      %v382 = vrot.slane %v380, 4
      %v383 = vshll.u32 %v263, 16
      %v385 = vrot.slane %v383, 5
      %v386 = vor.u32 %v382, %v385
      %v387 = vrot.slane %v386, 4
      %v389 = vshll.u32 %v264, 16
      %v391 = vrot.slane %v389, 5
      %v392 = vsel %vm282, %v387, %v391
      %v393 = vshrl.u32 %v264, 16
      %v395 = vrot.slane %v393, 4
      %v396 = vor.u32 %v395, %v391
      %v397 = vrot.slane %v396, 4
      %v399 = vshll.u32 %v276, 16
      %v401 = vrot.slane %v399, 5
      %v402 = vsel %vm282, %v397, %v401
      %v404 = vshrl.u32 %v265, 16
      %v406 = vrot.slane %v404, 4
      %v407 = vshll.u32 %v265, 16
      %v409 = vrot.slane %v407, 5
      %v410 = vor.u32 %v406, %v409
      %v411 = vrot.slane %v410, 4
      %v413 = vshll.u32 %v266, 16
      %v415 = vrot.slane %v413, 5
      %v416 = vsel %vm282, %v411, %v415
      %v417 = vshrl.u32 %v266, 16
      %v419 = vrot.slane %v417, 4
      %v420 = vor.u32 %v419, %v415
      %v421 = vrot.slane %v420, 4
      %v423 = vshll.u32 %v277, 16
      %v425 = vrot.slane %v423, 5
      %v426 = vsel %vm282, %v421, %v425
      %v428 = vshrl.u32 %v267, 16
      %v430 = vrot.slane %v428, 4
      %v431 = vshll.u32 %v267, 16
      %v433 = vrot.slane %v431, 5
      %v434 = vor.u32 %v430, %v433
      %v435 = vrot.slane %v434, 4
      %v437 = vshll.u32 %v268, 16
      %v439 = vrot.slane %v437, 5
      %v440 = vsel %vm282, %v435, %v439
      %v441 = vshrl.u32 %v268, 16
      %v443 = vrot.slane %v441, 4
      %v444 = vor.u32 %v443, %v439
      %v445 = vrot.slane %v444, 4
      %v447 = vshll.u32 %v278, 16
      %v449 = vrot.slane %v447, 5
      %v450 = vsel %vm282, %v445, %v449
      %v452 = vshrl.u32 %v269, 16
      %v454 = vrot.slane %v452, 4
      %v455 = vshll.u32 %v269, 16
      %v457 = vrot.slane %v455, 5
      %v458 = vor.u32 %v454, %v457
      %v459 = vrot.slane %v458, 4
      %v461 = vshll.u32 %v270, 16
      %v463 = vrot.slane %v461, 5
      %v464 = vsel %vm282, %v459, %v463
      %v465 = vshrl.u32 %v270, 16
      %v467 = vrot.slane %v465, 4
      %v468 = vor.u32 %v467, %v463
      %v469 = vrot.slane %v468, 4
      %v471 = vshll.u32 %v279, 16
      %v473 = vrot.slane %v471, 5
      %v474 = vsel %vm282, %v469, %v473
      %s475 = scalar_lea.vmem %s1, 2
      %v476 = vld [vmem:[%s475] sm:$0x3]
      %v477 = vunpack.c.l.b16 %v296
      %v478 = vunpack.c.l.b16 %v306
      %v479 = vunpack.c.l.b16 %v320
      %v480 = vunpack.c.l.b16 %v330
      %v481 = vunpack.c.l.b16 %v344
      %v482 = vunpack.c.l.b16 %v354
      %v483 = vunpack.c.l.b16 %v368
      %v484 = vunpack.c.l.b16 %v378
      %v485 = vunpack.c.l.b16 %v392
      %v486 = vunpack.c.l.b16 %v402
      %v487 = vunpack.c.l.b16 %v416
      %v488 = vunpack.c.l.b16 %v426
      %v489 = vunpack.c.l.b16 %v440
      %v490 = vunpack.c.l.b16 %v450
      %v491 = vunpack.c.l.b16 %v464
      %v492 = vunpack.c.l.b16 %v474
      %v493 = vpack.c.b16 %v478, %v477
      %v494 = vpack.c.b16 %v480, %v479
      %v495 = vpack.c.b16 %v482, %v481
      %v496 = vpack.c.b16 %v484, %v483
      %v497 = vpack.c.b16 %v486, %v485
      %v498 = vpack.c.b16 %v488, %v487
      %v499 = vpack.c.b16 %v490, %v489
      %v500 = vpack.c.b16 %v492, %v491
      %vm501 = vcmask 31744
      %v503 = vsel %vm501, %v493, 0
      %v506 = vsel %vm501, %v494, 0
      %v509 = vsel %vm501, %v495, 0
      %v512 = vsel %vm501, %v496, 0
      %v515 = vsel %vm501, %v497, 0
      %v518 = vsel %vm501, %v498, 0
      %v521 = vsel %vm501, %v499, 0
      %v524 = vsel %vm501, %v500, 0
      %vm526 = vcmask 1041408
      %v528 = vsel %vm526, %v476, 0
      %530 = vmatprep.subr.bf16.mxu0 0
      %531 = vmatpush1.bf16.msra.mxu0 %v528
      %532 = vmatprep.subr.bf16.mxu0 0
      %533 = vmatpush1.bf16.msra.mxu0 0
      %534 = vmatprep.subr.bf16.mxu0 0
      %535 = vmatpush1.bf16.msra.mxu0 0
      %536 = vmatprep.subr.bf16.mxu0 0
      %537 = vmatpush1.bf16.msra.mxu0 0
      %538 = vmatprep.subr.bf16.mxu0 0
      %539 = vmatpush1.bf16.msra.mxu0 0
      %540 = vmatprep.subr.bf16.mxu0 0
      %541 = vmatpush1.bf16.msra.mxu0 0
      %542 = vmatprep.subr.bf16.mxu0 0
      %543 = vmatpush1.bf16.msra.mxu0 0
      %544 = vmatprep.subr.bf16.mxu0 0
      %545 = vmatpush1.bf16.msra.mxu0 0
      %546 = vmatprep.subr.bf16.mxu0 0
      %547 = vmatpush1.bf16.msra.mxu0 0
      %548 = vmatprep.subr.bf16.mxu0 0
      %549 = vmatpush1.bf16.msra.mxu0 0
      %550 = vmatprep.subr.bf16.mxu0 0
      %551 = vmatpush1.bf16.msra.mxu0 0
      %552 = vmatprep.subr.bf16.mxu0 0
      %553 = vmatpush1.bf16.msra.mxu0 0
      %554 = vmatprep.subr.bf16.mxu0 0
      %555 = vmatpush1.bf16.msra.mxu0 0
      %556 = vmatprep.subr.bf16.mxu0 0
      %557 = vmatpush1.bf16.msra.mxu0 0
      %558 = vmatprep.subr.bf16.mxu0 0
      %559 = vmatpush1.bf16.msra.mxu0 0
      %560 = vmatprep.subr.bf16.mxu0 0
      %561 = vmatpush1.bf16.msra.mxu0 0
      %562 = vmatprep.mubr.bf16.mxu0 0
      %563 = vmatmul.mubr.bf16.gmra.mrb[0].mxu0 %v503
      %v564 = vpop.f32.mrb[0].mxu0
      %v565 = vadd.f32 0.0, %v564
      %v566 = vpop.f32.mrb[0].mxu0
      %v567 = vpop.f32.mrb[0].mxu0
      %v568 = vadd.f32 0.0, %v567
      %v569 = vpop.f32.mrb[0].mxu0
      %570 = vmatprep.mubr.bf16.mxu0 0
      %571 = vmatmul.mubr.bf16.gmra.mrb[0].mxu0 %v506
      %v572 = vpop.f32.mrb[0].mxu0
      %v573 = vadd.f32 0.0, %v572
      %v574 = vpop.f32.mrb[0].mxu0
      %v575 = vpop.f32.mrb[0].mxu0
      %v576 = vadd.f32 0.0, %v575
      %v577 = vpop.f32.mrb[0].mxu0
      %578 = vmatprep.mubr.bf16.mxu0 0
      %579 = vmatmul.mubr.bf16.gmra.mrb[0].mxu0 %v509
      %v580 = vpop.f32.mrb[0].mxu0
      %v581 = vadd.f32 0.0, %v580
      %v582 = vpop.f32.mrb[0].mxu0
      %v583 = vpop.f32.mrb[0].mxu0
      %v584 = vadd.f32 0.0, %v583
      %v585 = vpop.f32.mrb[0].mxu0
      %586 = vmatprep.mubr.bf16.mxu0 0
      %587 = vmatmul.mubr.bf16.gmra.mrb[0].mxu0 %v512
      %v588 = vpop.f32.mrb[0].mxu0
      %v589 = vadd.f32 0.0, %v588
      %v590 = vpop.f32.mrb[0].mxu0
      %v591 = vpop.f32.mrb[0].mxu0
      %v592 = vadd.f32 0.0, %v591
      %v593 = vpop.f32.mrb[0].mxu0
      %594 = vmatprep.mubr.bf16.mxu0 0
      %595 = vmatmul.mubr.bf16.gmra.mrb[0].mxu0 %v515
      %v596 = vpop.f32.mrb[0].mxu0
      %v597 = vadd.f32 0.0, %v596
      %v598 = vpop.f32.mrb[0].mxu0
      %v599 = vpop.f32.mrb[0].mxu0
      %v600 = vadd.f32 0.0, %v599
      %v601 = vpop.f32.mrb[0].mxu0
      %602 = vmatprep.mubr.bf16.mxu0 0
      %603 = vmatmul.mubr.bf16.gmra.mrb[0].mxu0 %v518
      %v604 = vpop.f32.mrb[0].mxu0
      %v605 = vadd.f32 0.0, %v604
      %v606 = vpop.f32.mrb[0].mxu0
      %v607 = vpop.f32.mrb[0].mxu0
      %v608 = vadd.f32 0.0, %v607
      %v609 = vpop.f32.mrb[0].mxu0
      %610 = vmatprep.mubr.bf16.mxu0 0
      %611 = vmatmul.mubr.bf16.gmra.mrb[0].mxu0 %v521
      %v612 = vpop.f32.mrb[0].mxu0
      %v613 = vadd.f32 0.0, %v612
      %v614 = vpop.f32.mrb[0].mxu0
      %v615 = vpop.f32.mrb[0].mxu0
      %v616 = vadd.f32 0.0, %v615
      %v617 = vpop.f32.mrb[0].mxu0
      %618 = vmatprep.mubr.bf16.mxu0 0
      %619 = vmatmul.mubr.bf16.gmra.mrb[0].mxu0 %v524
      %v620 = vpop.f32.mrb[0].mxu0
      %v621 = vadd.f32 0.0, %v620
      %v622 = vpop.f32.mrb[0].mxu0
      %v623 = vpop.f32.mrb[0].mxu0
      %v624 = vadd.f32 0.0, %v623
      %v625 = vpop.f32.mrb[0].mxu0
      %626 = vdwg.mxu0
      %v643 = vunpack.c.l.b16 %v255
      %v644 = vunpack.c.l.b16 %v256
      %v645 = vunpack.c.l.b16 %v257
      %v646 = vunpack.c.l.b16 %v258
      %v647 = vunpack.c.l.b16 %v259
      %v648 = vunpack.c.l.b16 %v260
      %v649 = vunpack.c.l.b16 %v261
      %v650 = vunpack.c.l.b16 %v262
      %v651 = vunpack.c.l.b16 %v263
      %v652 = vunpack.c.l.b16 %v264
      %v653 = vunpack.c.l.b16 %v265
      %v654 = vunpack.c.l.b16 %v266
      %v655 = vunpack.c.l.b16 %v267
      %v656 = vunpack.c.l.b16 %v268
      %v657 = vunpack.c.l.b16 %v269
      %v658 = vunpack.c.l.b16 %v270
      %v659 = vpack.c.b16 %v644, %v643
      %v660 = vpack.c.b16 %v646, %v645
      %v661 = vpack.c.b16 %v648, %v647
      %v662 = vpack.c.b16 %v650, %v649
      %v663 = vpack.c.b16 %v652, %v651
      %v664 = vpack.c.b16 %v654, %v653
      %v665 = vpack.c.b16 %v656, %v655
      %v666 = vpack.c.b16 %v658, %v657
      %v668 = vsel %vm501, %v659, 0
      %v671 = vsel %vm501, %v660, 0
      %v674 = vsel %vm501, %v661, 0
      %v677 = vsel %vm501, %v662, 0
      %v680 = vsel %vm501, %v663, 0
      %v683 = vsel %vm501, %v664, 0
      %v686 = vsel %vm501, %v665, 0
      %v689 = vsel %vm501, %v666, 0
      %v692 = vsel %vm526, %v271, 0
      %694 = vmatprep.subr.bf16.mxu0 0
      %695 = vmatpush1.bf16.msra.mxu0 %v692
      %696 = vmatprep.subr.bf16.mxu0 0
      %697 = vmatpush1.bf16.msra.mxu0 0
      %698 = vmatprep.subr.bf16.mxu0 0
      %699 = vmatpush1.bf16.msra.mxu0 0
      %700 = vmatprep.subr.bf16.mxu0 0
      %701 = vmatpush1.bf16.msra.mxu0 0
      %702 = vmatprep.subr.bf16.mxu0 0
      %703 = vmatpush1.bf16.msra.mxu0 0
      %704 = vmatprep.subr.bf16.mxu0 0
      %705 = vmatpush1.bf16.msra.mxu0 0
      %706 = vmatprep.subr.bf16.mxu0 0
      %707 = vmatpush1.bf16.msra.mxu0 0
      %708 = vmatprep.subr.bf16.mxu0 0
      %709 = vmatpush1.bf16.msra.mxu0 0
      %710 = vmatprep.subr.bf16.mxu0 0
      %711 = vmatpush1.bf16.msra.mxu0 0
      %712 = vmatprep.subr.bf16.mxu0 0
      %713 = vmatpush1.bf16.msra.mxu0 0
      %714 = vmatprep.subr.bf16.mxu0 0
      %715 = vmatpush1.bf16.msra.mxu0 0
      %716 = vmatprep.subr.bf16.mxu0 0
      %717 = vmatpush1.bf16.msra.mxu0 0
      %718 = vmatprep.subr.bf16.mxu0 0
      %719 = vmatpush1.bf16.msra.mxu0 0
      %720 = vmatprep.subr.bf16.mxu0 0
      %721 = vmatpush1.bf16.msra.mxu0 0
      %722 = vmatprep.subr.bf16.mxu0 0
      %723 = vmatpush1.bf16.msra.mxu0 0
      %724 = vmatprep.subr.bf16.mxu0 0
      %725 = vmatpush1.bf16.msra.mxu0 0
      %726 = vmatprep.mubr.bf16.mxu0 0
      %727 = vmatmul.mubr.bf16.gmra.mrb[0].mxu0 %v668
      %v728 = vpop.f32.mrb[0].mxu0
      %v729 = vadd.f32 %v565, %v728
      %v730 = vpop.f32.mrb[0].mxu0
      %v731 = vpop.f32.mrb[0].mxu0
      %v732 = vadd.f32 %v568, %v731
      %v733 = vpop.f32.mrb[0].mxu0
      %734 = vmatprep.mubr.bf16.mxu0 0
      %735 = vmatmul.mubr.bf16.gmra.mrb[0].mxu0 %v671
      %v736 = vpop.f32.mrb[0].mxu0
      %v737 = vadd.f32 %v573, %v736
      %v738 = vpop.f32.mrb[0].mxu0
      %v739 = vpop.f32.mrb[0].mxu0
      %v740 = vadd.f32 %v576, %v739
      %v741 = vpop.f32.mrb[0].mxu0
      %742 = vmatprep.mubr.bf16.mxu0 0
      %743 = vmatmul.mubr.bf16.gmra.mrb[0].mxu0 %v674
      %v744 = vpop.f32.mrb[0].mxu0
      %v745 = vadd.f32 %v581, %v744
      %v746 = vpop.f32.mrb[0].mxu0
      %v747 = vpop.f32.mrb[0].mxu0
      %v748 = vadd.f32 %v584, %v747
      %v749 = vpop.f32.mrb[0].mxu0
      %750 = vmatprep.mubr.bf16.mxu0 0
      %751 = vmatmul.mubr.bf16.gmra.mrb[0].mxu0 %v677
      %v752 = vpop.f32.mrb[0].mxu0
      %v753 = vadd.f32 %v589, %v752
      %v754 = vpop.f32.mrb[0].mxu0
      %v755 = vpop.f32.mrb[0].mxu0
      %v756 = vadd.f32 %v592, %v755
      %v757 = vpop.f32.mrb[0].mxu0
      %758 = vmatprep.mubr.bf16.mxu0 0
      %759 = vmatmul.mubr.bf16.gmra.mrb[0].mxu0 %v680
      %v760 = vpop.f32.mrb[0].mxu0
      %v761 = vadd.f32 %v597, %v760
      %v762 = vpop.f32.mrb[0].mxu0
      %v763 = vpop.f32.mrb[0].mxu0
      %v764 = vadd.f32 %v600, %v763
      %v765 = vpop.f32.mrb[0].mxu0
      %766 = vmatprep.mubr.bf16.mxu0 0
      %767 = vmatmul.mubr.bf16.gmra.mrb[0].mxu0 %v683
      %v768 = vpop.f32.mrb[0].mxu0
      %v769 = vadd.f32 %v605, %v768
      %v770 = vpop.f32.mrb[0].mxu0
      %v771 = vpop.f32.mrb[0].mxu0
      %v772 = vadd.f32 %v608, %v771
      %v773 = vpop.f32.mrb[0].mxu0
      %774 = vmatprep.mubr.bf16.mxu0 0
      %775 = vmatmul.mubr.bf16.gmra.mrb[0].mxu0 %v686
      %v776 = vpop.f32.mrb[0].mxu0
      %v777 = vadd.f32 %v613, %v776
      %v778 = vpop.f32.mrb[0].mxu0
      %v779 = vpop.f32.mrb[0].mxu0
      %v780 = vadd.f32 %v616, %v779
      %v781 = vpop.f32.mrb[0].mxu0
      %782 = vmatprep.mubr.bf16.mxu0 0
      %783 = vmatmul.mubr.bf16.gmra.mrb[0].mxu0 %v689
      %v784 = vpop.f32.mrb[0].mxu0
      %v785 = vadd.f32 %v621, %v784
      %v786 = vpop.f32.mrb[0].mxu0
      %v787 = vpop.f32.mrb[0].mxu0
      %v788 = vadd.f32 %v624, %v787
      %v789 = vpop.f32.mrb[0].mxu0
      %790 = vdwg.mxu0
      %v791 = vld [vmem:[%s234] sm:$0xe]
      %v792 = vld [vmem:[%s234 + $0xc] sm:$0xe]
      %v793 = vld [vmem:[%s234 + $0x18] sm:$0xe]
      %v794 = vld [vmem:[%s234 + $0x24] sm:$0xe]
      %v795 = vld [vmem:[%s234 + $0x30] sm:$0xe]
      %v796 = vld [vmem:[%s234 + $0x3c] sm:$0xe]
      %v797 = vld [vmem:[%s234 + $0x48] sm:$0xe]
      %v798 = vld [vmem:[%s234 + $0x54] sm:$0xe]
      %vm815 = vcmask 1042432
      %vm816 = vcmask 1046532
      %vm817 = vmor %vm815, %vm816
      %v818 = vrot.slane %v791, 5
      %v819 = vrot.slane %v818, 4
      %v820 = vrot.slane %v256, 5
      %v821 = vsel %vm817, %v819, %v820
      %v822 = vrot.slane %v820, 4
      %v823 = vrot.slane %v272, 5
      %v824 = vsel %vm817, %v822, %v823
      %v825 = vrot.slane %v792, 5
      %v826 = vrot.slane %v825, 4
      %v827 = vrot.slane %v258, 5
      %v828 = vsel %vm817, %v826, %v827
      %v829 = vrot.slane %v827, 4
      %v830 = vrot.slane %v273, 5
      %v831 = vsel %vm817, %v829, %v830
      %v832 = vrot.slane %v793, 5
      %v833 = vrot.slane %v832, 4
      %v834 = vrot.slane %v260, 5
      %v835 = vsel %vm817, %v833, %v834
      %v836 = vrot.slane %v834, 4
      %v837 = vrot.slane %v274, 5
      %v838 = vsel %vm817, %v836, %v837
      %v839 = vrot.slane %v794, 5
      %v840 = vrot.slane %v839, 4
      %v841 = vrot.slane %v262, 5
      %v842 = vsel %vm817, %v840, %v841
      %v843 = vrot.slane %v841, 4
      %v844 = vrot.slane %v275, 5
      %v845 = vsel %vm817, %v843, %v844
      %v846 = vrot.slane %v795, 5
      %v847 = vrot.slane %v846, 4
      %v848 = vrot.slane %v264, 5
      %v849 = vsel %vm817, %v847, %v848
      %v850 = vrot.slane %v848, 4
      %v851 = vrot.slane %v276, 5
      %v852 = vsel %vm817, %v850, %v851
      %v853 = vrot.slane %v796, 5
      %v854 = vrot.slane %v853, 4
      %v855 = vrot.slane %v266, 5
      %v856 = vsel %vm817, %v854, %v855
      %v857 = vrot.slane %v855, 4
      %v858 = vrot.slane %v277, 5
      %v859 = vsel %vm817, %v857, %v858
      %v860 = vrot.slane %v797, 5
      %v861 = vrot.slane %v860, 4
      %v862 = vrot.slane %v268, 5
      %v863 = vsel %vm817, %v861, %v862
      %v864 = vrot.slane %v862, 4
      %v865 = vrot.slane %v278, 5
      %v866 = vsel %vm817, %v864, %v865
      %v867 = vrot.slane %v798, 5
      %v868 = vrot.slane %v867, 4
      %v869 = vrot.slane %v270, 5
      %v870 = vsel %vm817, %v868, %v869
      %v871 = vrot.slane %v869, 4
      %v872 = vrot.slane %v279, 5
      %v873 = vsel %vm817, %v871, %v872
      %s874 = scalar_lea.vmem %s1, 4
      %v875 = vld [vmem:[%s874] sm:$0x3]
      %v876 = vunpack.c.l.b16 %v821
      %v877 = vunpack.c.l.b16 %v824
      %v878 = vunpack.c.l.b16 %v828
      %v879 = vunpack.c.l.b16 %v831
      %v880 = vunpack.c.l.b16 %v835
      %v881 = vunpack.c.l.b16 %v838
      %v882 = vunpack.c.l.b16 %v842
      %v883 = vunpack.c.l.b16 %v845
      %v884 = vunpack.c.l.b16 %v849
      %v885 = vunpack.c.l.b16 %v852
      %v886 = vunpack.c.l.b16 %v856
      %v887 = vunpack.c.l.b16 %v859
      %v888 = vunpack.c.l.b16 %v863
      %v889 = vunpack.c.l.b16 %v866
      %v890 = vunpack.c.l.b16 %v870
      %v891 = vunpack.c.l.b16 %v873
      %v892 = vpack.c.b16 %v877, %v876
      %v893 = vpack.c.b16 %v879, %v878
      %v894 = vpack.c.b16 %v881, %v880
      %v895 = vpack.c.b16 %v883, %v882
      %v896 = vpack.c.b16 %v885, %v884
      %v897 = vpack.c.b16 %v887, %v886
      %v898 = vpack.c.b16 %v889, %v888
      %v899 = vpack.c.b16 %v891, %v890
      %v901 = vsel %vm501, %v892, 0
      %v904 = vsel %vm501, %v893, 0
      %v907 = vsel %vm501, %v894, 0
      %v910 = vsel %vm501, %v895, 0
      %v913 = vsel %vm501, %v896, 0
      %v916 = vsel %vm501, %v897, 0
      %v919 = vsel %vm501, %v898, 0
      %v922 = vsel %vm501, %v899, 0
      %v925 = vsel %vm526, %v875, 0
      %927 = vmatprep.subr.bf16.mxu0 0
      %928 = vmatpush1.bf16.msra.mxu0 %v925
      %929 = vmatprep.subr.bf16.mxu0 0
      %930 = vmatpush1.bf16.msra.mxu0 0
      %931 = vmatprep.subr.bf16.mxu0 0
      %932 = vmatpush1.bf16.msra.mxu0 0
      %933 = vmatprep.subr.bf16.mxu0 0
      %934 = vmatpush1.bf16.msra.mxu0 0
      %935 = vmatprep.subr.bf16.mxu0 0
      %936 = vmatpush1.bf16.msra.mxu0 0
      %937 = vmatprep.subr.bf16.mxu0 0
      %938 = vmatpush1.bf16.msra.mxu0 0
      %939 = vmatprep.subr.bf16.mxu0 0
      %940 = vmatpush1.bf16.msra.mxu0 0
      %941 = vmatprep.subr.bf16.mxu0 0
      %942 = vmatpush1.bf16.msra.mxu0 0
      %943 = vmatprep.subr.bf16.mxu0 0
      %944 = vmatpush1.bf16.msra.mxu0 0
      %945 = vmatprep.subr.bf16.mxu0 0
      %946 = vmatpush1.bf16.msra.mxu0 0
      %947 = vmatprep.subr.bf16.mxu0 0
      %948 = vmatpush1.bf16.msra.mxu0 0
      %949 = vmatprep.subr.bf16.mxu0 0
      %950 = vmatpush1.bf16.msra.mxu0 0
      %951 = vmatprep.subr.bf16.mxu0 0
      %952 = vmatpush1.bf16.msra.mxu0 0
      %953 = vmatprep.subr.bf16.mxu0 0
      %954 = vmatpush1.bf16.msra.mxu0 0
      %955 = vmatprep.subr.bf16.mxu0 0
      %956 = vmatpush1.bf16.msra.mxu0 0
      %957 = vmatprep.subr.bf16.mxu0 0
      %958 = vmatpush1.bf16.msra.mxu0 0
      %959 = vmatprep.mubr.bf16.mxu0 0
      %960 = vmatmul.mubr.bf16.gmra.mrb[0].mxu0 %v901
      %v961 = vpop.f32.mrb[0].mxu0
      %v962 = vadd.f32 0.0, %v961
      %v963 = vpop.f32.mrb[0].mxu0
      %v964 = vpop.f32.mrb[0].mxu0
      %v965 = vadd.f32 0.0, %v964
      %v966 = vpop.f32.mrb[0].mxu0
      %967 = vmatprep.mubr.bf16.mxu0 0
      %968 = vmatmul.mubr.bf16.gmra.mrb[0].mxu0 %v904
      %v969 = vpop.f32.mrb[0].mxu0
      %v970 = vadd.f32 0.0, %v969
      %v971 = vpop.f32.mrb[0].mxu0
      %v972 = vpop.f32.mrb[0].mxu0
      %v973 = vadd.f32 0.0, %v972
      %v974 = vpop.f32.mrb[0].mxu0
      %975 = vmatprep.mubr.bf16.mxu0 0
      %976 = vmatmul.mubr.bf16.gmra.mrb[0].mxu0 %v907
      %v977 = vpop.f32.mrb[0].mxu0
      %v978 = vadd.f32 0.0, %v977
      %v979 = vpop.f32.mrb[0].mxu0
      %v980 = vpop.f32.mrb[0].mxu0
      %v981 = vadd.f32 0.0, %v980
      %v982 = vpop.f32.mrb[0].mxu0
      %983 = vmatprep.mubr.bf16.mxu0 0
      %984 = vmatmul.mubr.bf16.gmra.mrb[0].mxu0 %v910
      %v985 = vpop.f32.mrb[0].mxu0
      %v986 = vadd.f32 0.0, %v985
      %v987 = vpop.f32.mrb[0].mxu0
      %v988 = vpop.f32.mrb[0].mxu0
      %v989 = vadd.f32 0.0, %v988
      %v990 = vpop.f32.mrb[0].mxu0
      %991 = vmatprep.mubr.bf16.mxu0 0
      %992 = vmatmul.mubr.bf16.gmra.mrb[0].mxu0 %v913
      %v993 = vpop.f32.mrb[0].mxu0
      %v994 = vadd.f32 0.0, %v993
      %v995 = vpop.f32.mrb[0].mxu0
      %v996 = vpop.f32.mrb[0].mxu0
      %v997 = vadd.f32 0.0, %v996
      %v998 = vpop.f32.mrb[0].mxu0
      %999 = vmatprep.mubr.bf16.mxu0 0
      %1000 = vmatmul.mubr.bf16.gmra.mrb[0].mxu0 %v916
      %v1001 = vpop.f32.mrb[0].mxu0
      %v1002 = vadd.f32 0.0, %v1001
      %v1003 = vpop.f32.mrb[0].mxu0
      %v1004 = vpop.f32.mrb[0].mxu0
      %v1005 = vadd.f32 0.0, %v1004
      %v1006 = vpop.f32.mrb[0].mxu0
      %1007 = vmatprep.mubr.bf16.mxu0 0
      %1008 = vmatmul.mubr.bf16.gmra.mrb[0].mxu0 %v919
      %v1009 = vpop.f32.mrb[0].mxu0
      %v1010 = vadd.f32 0.0, %v1009
      %v1011 = vpop.f32.mrb[0].mxu0
      %v1012 = vpop.f32.mrb[0].mxu0
      %v1013 = vadd.f32 0.0, %v1012
      %v1014 = vpop.f32.mrb[0].mxu0
      %1015 = vmatprep.mubr.bf16.mxu0 0
      %1016 = vmatmul.mubr.bf16.gmra.mrb[0].mxu0 %v922
      %v1017 = vpop.f32.mrb[0].mxu0
      %v1018 = vadd.f32 0.0, %v1017
      %v1019 = vpop.f32.mrb[0].mxu0
      %v1020 = vpop.f32.mrb[0].mxu0
      %v1021 = vadd.f32 0.0, %v1020
      %v1022 = vpop.f32.mrb[0].mxu0
      %1023 = vdwg.mxu0
      %v1024 = vadd.f32 %v729, %v962
      %v1025 = vadd.f32 %v732, %v965
      %v1026 = vadd.f32 %v737, %v970
      %v1027 = vadd.f32 %v740, %v973
      %v1028 = vadd.f32 %v745, %v978
      %v1029 = vadd.f32 %v748, %v981
      %v1030 = vadd.f32 %v753, %v986
      %v1031 = vadd.f32 %v756, %v989
      %v1032 = vadd.f32 %v761, %v994
      %v1033 = vadd.f32 %v764, %v997
      %v1034 = vadd.f32 %v769, %v1002
      %v1035 = vadd.f32 %v772, %v1005
      %v1036 = vadd.f32 %v777, %v1010
      %v1037 = vadd.f32 %v780, %v1013
      %v1038 = vadd.f32 %v785, %v1018
      %v1039 = vadd.f32 %v788, %v1021
      %s1040 = scalar_lea.vmem %s234, 12
      %v1041 = vld [vmem:[%s1040] sm:$0xf]
      %v1042 = vld [vmem:[%s1040 + $0x4] sm:$0xf]
      %v1043 = vld [vmem:[%s1040 + $0xc] sm:$0xf]
      %v1044 = vld [vmem:[%s1040 + $0x10] sm:$0xf]
      %v1045 = vld [vmem:[%s1040 + $0x18] sm:$0xf]
      %v1046 = vld [vmem:[%s1040 + $0x1c] sm:$0xf]
      %v1047 = vld [vmem:[%s1040 + $0x24] sm:$0xf]
      %v1048 = vld [vmem:[%s1040 + $0x28] sm:$0xf]
      %v1049 = vld [vmem:[%s1040 + $0x30] sm:$0xf]
      %v1050 = vld [vmem:[%s1040 + $0x34] sm:$0xf]
      %v1051 = vld [vmem:[%s1040 + $0x3c] sm:$0xf]
      %v1052 = vld [vmem:[%s1040 + $0x40] sm:$0xf]
      %v1053 = vld [vmem:[%s1040 + $0x48] sm:$0xf]
      %v1054 = vld [vmem:[%s1040 + $0x4c] sm:$0xf]
      %v1055 = vld [vmem:[%s1040 + $0x54] sm:$0xf]
      %v1056 = vld [vmem:[%s1040 + $0x58] sm:$0xf]
      %s1057 = scalar_lea.vmem %s1, 6
      %v1058 = vld [vmem:[%s1057] sm:$0x3]
      %v1075 = vunpack.c.l.b16 %v1041
      %v1076 = vunpack.c.l.b16 %v1042
      %v1077 = vunpack.c.l.b16 %v1043
      %v1078 = vunpack.c.l.b16 %v1044
      %v1079 = vunpack.c.l.b16 %v1045
      %v1080 = vunpack.c.l.b16 %v1046
      %v1081 = vunpack.c.l.b16 %v1047
      %v1082 = vunpack.c.l.b16 %v1048
      %v1083 = vunpack.c.l.b16 %v1049
      %v1084 = vunpack.c.l.b16 %v1050
      %v1085 = vunpack.c.l.b16 %v1051
      %v1086 = vunpack.c.l.b16 %v1052
      %v1087 = vunpack.c.l.b16 %v1053
      %v1088 = vunpack.c.l.b16 %v1054
      %v1089 = vunpack.c.l.b16 %v1055
      %v1090 = vunpack.c.l.b16 %v1056
      %v1091 = vpack.c.b16 %v1076, %v1075
      %v1092 = vpack.c.b16 %v1078, %v1077
      %v1093 = vpack.c.b16 %v1080, %v1079
      %v1094 = vpack.c.b16 %v1082, %v1081
      %v1095 = vpack.c.b16 %v1084, %v1083
      %v1096 = vpack.c.b16 %v1086, %v1085
      %v1097 = vpack.c.b16 %v1088, %v1087
      %v1098 = vpack.c.b16 %v1090, %v1089
      %v1100 = vsel %vm501, %v1091, 0
      %v1103 = vsel %vm501, %v1092, 0
      %v1106 = vsel %vm501, %v1093, 0
      %v1109 = vsel %vm501, %v1094, 0
      %v1112 = vsel %vm501, %v1095, 0
      %v1115 = vsel %vm501, %v1096, 0
      %v1118 = vsel %vm501, %v1097, 0
      %v1121 = vsel %vm501, %v1098, 0
      %v1124 = vsel %vm526, %v1058, 0
      %1126 = vmatprep.subr.bf16.mxu0 0
      %1127 = vmatpush1.bf16.msra.mxu0 %v1124
      %1128 = vmatprep.subr.bf16.mxu0 0
      %1129 = vmatpush1.bf16.msra.mxu0 0
      %1130 = vmatprep.subr.bf16.mxu0 0
      %1131 = vmatpush1.bf16.msra.mxu0 0
      %1132 = vmatprep.subr.bf16.mxu0 0
      %1133 = vmatpush1.bf16.msra.mxu0 0
      %1134 = vmatprep.subr.bf16.mxu0 0
      %1135 = vmatpush1.bf16.msra.mxu0 0
      %1136 = vmatprep.subr.bf16.mxu0 0
      %1137 = vmatpush1.bf16.msra.mxu0 0
      %1138 = vmatprep.subr.bf16.mxu0 0
      %1139 = vmatpush1.bf16.msra.mxu0 0
      %1140 = vmatprep.subr.bf16.mxu0 0
      %1141 = vmatpush1.bf16.msra.mxu0 0
      %1142 = vmatprep.subr.bf16.mxu0 0
      %1143 = vmatpush1.bf16.msra.mxu0 0
      %1144 = vmatprep.subr.bf16.mxu0 0
      %1145 = vmatpush1.bf16.msra.mxu0 0
      %1146 = vmatprep.subr.bf16.mxu0 0
      %1147 = vmatpush1.bf16.msra.mxu0 0
      %1148 = vmatprep.subr.bf16.mxu0 0
      %1149 = vmatpush1.bf16.msra.mxu0 0
      %1150 = vmatprep.subr.bf16.mxu0 0
      %1151 = vmatpush1.bf16.msra.mxu0 0
      %1152 = vmatprep.subr.bf16.mxu0 0
      %1153 = vmatpush1.bf16.msra.mxu0 0
      %1154 = vmatprep.subr.bf16.mxu0 0
      %1155 = vmatpush1.bf16.msra.mxu0 0
      %1156 = vmatprep.subr.bf16.mxu0 0
      %1157 = vmatpush1.bf16.msra.mxu0 0
      %1158 = vmatprep.mubr.bf16.mxu0 0
      %1159 = vmatmul.mubr.bf16.gmra.mrb[0].mxu0 %v1100
      %v1160 = vpop.f32.mrb[0].mxu0
      %v1161 = vadd.f32 0.0, %v1160
      %v1162 = vpop.f32.mrb[0].mxu0
      %v1163 = vpop.f32.mrb[0].mxu0
      %v1164 = vadd.f32 0.0, %v1163
      %v1165 = vpop.f32.mrb[0].mxu0
      %1166 = vmatprep.mubr.bf16.mxu0 0
      %1167 = vmatmul.mubr.bf16.gmra.mrb[0].mxu0 %v1103
      %v1168 = vpop.f32.mrb[0].mxu0
      %v1169 = vadd.f32 0.0, %v1168
      %v1170 = vpop.f32.mrb[0].mxu0
      %v1171 = vpop.f32.mrb[0].mxu0
      %v1172 = vadd.f32 0.0, %v1171
      %v1173 = vpop.f32.mrb[0].mxu0
      %1174 = vmatprep.mubr.bf16.mxu0 0
      %1175 = vmatmul.mubr.bf16.gmra.mrb[0].mxu0 %v1106
      %v1176 = vpop.f32.mrb[0].mxu0
      %v1177 = vadd.f32 0.0, %v1176
      %v1178 = vpop.f32.mrb[0].mxu0
      %v1179 = vpop.f32.mrb[0].mxu0
      %v1180 = vadd.f32 0.0, %v1179
      %v1181 = vpop.f32.mrb[0].mxu0
      %1182 = vmatprep.mubr.bf16.mxu0 0
      %1183 = vmatmul.mubr.bf16.gmra.mrb[0].mxu0 %v1109
      %v1184 = vpop.f32.mrb[0].mxu0
      %v1185 = vadd.f32 0.0, %v1184
      %v1186 = vpop.f32.mrb[0].mxu0
      %v1187 = vpop.f32.mrb[0].mxu0
      %v1188 = vadd.f32 0.0, %v1187
      %v1189 = vpop.f32.mrb[0].mxu0
      %1190 = vmatprep.mubr.bf16.mxu0 0
      %1191 = vmatmul.mubr.bf16.gmra.mrb[0].mxu0 %v1112
      %v1192 = vpop.f32.mrb[0].mxu0
      %v1193 = vadd.f32 0.0, %v1192
      %v1194 = vpop.f32.mrb[0].mxu0
      %v1195 = vpop.f32.mrb[0].mxu0
      %v1196 = vadd.f32 0.0, %v1195
      %v1197 = vpop.f32.mrb[0].mxu0
      %1198 = vmatprep.mubr.bf16.mxu0 0
      %1199 = vmatmul.mubr.bf16.gmra.mrb[0].mxu0 %v1115
      %v1200 = vpop.f32.mrb[0].mxu0
      %v1201 = vadd.f32 0.0, %v1200
      %v1202 = vpop.f32.mrb[0].mxu0
      %v1203 = vpop.f32.mrb[0].mxu0
      %v1204 = vadd.f32 0.0, %v1203
      %v1205 = vpop.f32.mrb[0].mxu0
      %1206 = vmatprep.mubr.bf16.mxu0 0
      %1207 = vmatmul.mubr.bf16.gmra.mrb[0].mxu0 %v1118
      %v1208 = vpop.f32.mrb[0].mxu0
      %v1209 = vadd.f32 0.0, %v1208
      %v1210 = vpop.f32.mrb[0].mxu0
      %v1211 = vpop.f32.mrb[0].mxu0
      %v1212 = vadd.f32 0.0, %v1211
      %v1213 = vpop.f32.mrb[0].mxu0
      %1214 = vmatprep.mubr.bf16.mxu0 0
      %1215 = vmatmul.mubr.bf16.gmra.mrb[0].mxu0 %v1121
      %v1216 = vpop.f32.mrb[0].mxu0
      %v1217 = vadd.f32 0.0, %v1216
      %v1218 = vpop.f32.mrb[0].mxu0
      %v1219 = vpop.f32.mrb[0].mxu0
      %v1220 = vadd.f32 0.0, %v1219
      %v1221 = vpop.f32.mrb[0].mxu0
      %1222 = vdwg.mxu0
      %v1223 = vadd.f32 %v1024, %v1161
      %v1224 = vadd.f32 %v1025, %v1164
      %v1225 = vadd.f32 %v1026, %v1169
      %v1226 = vadd.f32 %v1027, %v1172
      %v1227 = vadd.f32 %v1028, %v1177
      %v1228 = vadd.f32 %v1029, %v1180
      %v1229 = vadd.f32 %v1030, %v1185
      %v1230 = vadd.f32 %v1031, %v1188
      %v1231 = vadd.f32 %v1032, %v1193
      %v1232 = vadd.f32 %v1033, %v1196
      %v1233 = vadd.f32 %v1034, %v1201
      %v1234 = vadd.f32 %v1035, %v1204
      %v1235 = vadd.f32 %v1036, %v1209
      %v1236 = vadd.f32 %v1037, %v1212
      %v1237 = vadd.f32 %v1038, %v1217
      %v1238 = vadd.f32 %v1039, %v1220
      %v1239 = vld [vmem:[%s1040] sm:$0xf]
      %v1240 = vld [vmem:[%s1040 + $0x4] sm:$0xf]
      %v1241 = vld [vmem:[%s1040 + $0x8] sm:$0x1]
      %v1242 = vld [vmem:[%s1040 + $0xc] sm:$0xf]
      %v1243 = vld [vmem:[%s1040 + $0x10] sm:$0xf]
      %v1244 = vld [vmem:[%s1040 + $0x14] sm:$0x1]
      %v1245 = vld [vmem:[%s1040 + $0x18] sm:$0xf]
      %v1246 = vld [vmem:[%s1040 + $0x1c] sm:$0xf]
      %v1247 = vld [vmem:[%s1040 + $0x20] sm:$0x1]
      %v1248 = vld [vmem:[%s1040 + $0x24] sm:$0xf]
      %v1249 = vld [vmem:[%s1040 + $0x28] sm:$0xf]
      %v1250 = vld [vmem:[%s1040 + $0x2c] sm:$0x1]
      %v1251 = vld [vmem:[%s1040 + $0x30] sm:$0xf]
      %v1252 = vld [vmem:[%s1040 + $0x34] sm:$0xf]
      %v1253 = vld [vmem:[%s1040 + $0x38] sm:$0x1]
      %v1254 = vld [vmem:[%s1040 + $0x3c] sm:$0xf]
      %v1255 = vld [vmem:[%s1040 + $0x40] sm:$0xf]
      %v1256 = vld [vmem:[%s1040 + $0x44] sm:$0x1]
      %v1257 = vld [vmem:[%s1040 + $0x48] sm:$0xf]
      %v1258 = vld [vmem:[%s1040 + $0x4c] sm:$0xf]
      %v1259 = vld [vmem:[%s1040 + $0x50] sm:$0x1]
      %v1260 = vld [vmem:[%s1040 + $0x54] sm:$0xf]
      %v1261 = vld [vmem:[%s1040 + $0x58] sm:$0xf]
      %v1262 = vld [vmem:[%s1040 + $0x5c] sm:$0x1]
      %v1264 = vshrl.u32 %v1239, 16
      %v1266 = vrot.slane %v1264, 4
      %v1267 = vshll.u32 %v1239, 16
      %v1269 = vrot.slane %v1267, 5
      %v1270 = vor.u32 %v1266, %v1269
      %v1271 = vrot.slane %v1270, 4
      %v1273 = vshll.u32 %v1240, 16
      %v1275 = vrot.slane %v1273, 5
      %v1276 = vsel %vm282, %v1271, %v1275
      %v1277 = vshrl.u32 %v1240, 16
      %v1279 = vrot.slane %v1277, 4
      %v1280 = vor.u32 %v1279, %v1275
      %v1281 = vrot.slane %v1280, 4
      %v1283 = vshll.u32 %v1241, 16
      %v1285 = vrot.slane %v1283, 5
      %v1286 = vsel %vm282, %v1281, %v1285
      %v1288 = vshrl.u32 %v1242, 16
      %v1290 = vrot.slane %v1288, 4
      %v1291 = vshll.u32 %v1242, 16
      %v1293 = vrot.slane %v1291, 5
      %v1294 = vor.u32 %v1290, %v1293
      %v1295 = vrot.slane %v1294, 4
      %v1297 = vshll.u32 %v1243, 16
      %v1299 = vrot.slane %v1297, 5
      %v1300 = vsel %vm282, %v1295, %v1299
      %v1301 = vshrl.u32 %v1243, 16
      %v1303 = vrot.slane %v1301, 4
      %v1304 = vor.u32 %v1303, %v1299
      %v1305 = vrot.slane %v1304, 4
      %v1307 = vshll.u32 %v1244, 16
      %v1309 = vrot.slane %v1307, 5
      %v1310 = vsel %vm282, %v1305, %v1309
      %v1312 = vshrl.u32 %v1245, 16
      %v1314 = vrot.slane %v1312, 4
      %v1315 = vshll.u32 %v1245, 16
      %v1317 = vrot.slane %v1315, 5
      %v1318 = vor.u32 %v1314, %v1317
      %v1319 = vrot.slane %v1318, 4
      %v1321 = vshll.u32 %v1246, 16
      %v1323 = vrot.slane %v1321, 5
      %v1324 = vsel %vm282, %v1319, %v1323
      %v1325 = vshrl.u32 %v1246, 16
      %v1327 = vrot.slane %v1325, 4
      %v1328 = vor.u32 %v1327, %v1323
      %v1329 = vrot.slane %v1328, 4
      %v1331 = vshll.u32 %v1247, 16
      %v1333 = vrot.slane %v1331, 5
      %v1334 = vsel %vm282, %v1329, %v1333
      %v1336 = vshrl.u32 %v1248, 16
      %v1338 = vrot.slane %v1336, 4
      %v1339 = vshll.u32 %v1248, 16
      %v1341 = vrot.slane %v1339, 5
      %v1342 = vor.u32 %v1338, %v1341
      %v1343 = vrot.slane %v1342, 4
      %v1345 = vshll.u32 %v1249, 16
      %v1347 = vrot.slane %v1345, 5
      %v1348 = vsel %vm282, %v1343, %v1347
      %v1349 = vshrl.u32 %v1249, 16
      %v1351 = vrot.slane %v1349, 4
      %v1352 = vor.u32 %v1351, %v1347
      %v1353 = vrot.slane %v1352, 4
      %v1355 = vshll.u32 %v1250, 16
      %v1357 = vrot.slane %v1355, 5
      %v1358 = vsel %vm282, %v1353, %v1357
      %v1360 = vshrl.u32 %v1251, 16
      %v1362 = vrot.slane %v1360, 4
      %v1363 = vshll.u32 %v1251, 16
      %v1365 = vrot.slane %v1363, 5
      %v1366 = vor.u32 %v1362, %v1365
      %v1367 = vrot.slane %v1366, 4
      %v1369 = vshll.u32 %v1252, 16
      %v1371 = vrot.slane %v1369, 5
      %v1372 = vsel %vm282, %v1367, %v1371
      %v1373 = vshrl.u32 %v1252, 16
      %v1375 = vrot.slane %v1373, 4
      %v1376 = vor.u32 %v1375, %v1371
      %v1377 = vrot.slane %v1376, 4
      %v1379 = vshll.u32 %v1253, 16
      %v1381 = vrot.slane %v1379, 5
      %v1382 = vsel %vm282, %v1377, %v1381
      %v1384 = vshrl.u32 %v1254, 16
      %v1386 = vrot.slane %v1384, 4
      %v1387 = vshll.u32 %v1254, 16
      %v1389 = vrot.slane %v1387, 5
      %v1390 = vor.u32 %v1386, %v1389
      %v1391 = vrot.slane %v1390, 4
      %v1393 = vshll.u32 %v1255, 16
      %v1395 = vrot.slane %v1393, 5
      %v1396 = vsel %vm282, %v1391, %v1395
      %v1397 = vshrl.u32 %v1255, 16
      %v1399 = vrot.slane %v1397, 4
      %v1400 = vor.u32 %v1399, %v1395
      %v1401 = vrot.slane %v1400, 4
      %v1403 = vshll.u32 %v1256, 16
      %v1405 = vrot.slane %v1403, 5
      %v1406 = vsel %vm282, %v1401, %v1405
      %v1408 = vshrl.u32 %v1257, 16
      %v1410 = vrot.slane %v1408, 4
      %v1411 = vshll.u32 %v1257, 16
      %v1413 = vrot.slane %v1411, 5
      %v1414 = vor.u32 %v1410, %v1413
      %v1415 = vrot.slane %v1414, 4
      %v1417 = vshll.u32 %v1258, 16
      %v1419 = vrot.slane %v1417, 5
      %v1420 = vsel %vm282, %v1415, %v1419
      %v1421 = vshrl.u32 %v1258, 16
      %v1423 = vrot.slane %v1421, 4
      %v1424 = vor.u32 %v1423, %v1419
      %v1425 = vrot.slane %v1424, 4
      %v1427 = vshll.u32 %v1259, 16
      %v1429 = vrot.slane %v1427, 5
      %v1430 = vsel %vm282, %v1425, %v1429
      %v1432 = vshrl.u32 %v1260, 16
      %v1434 = vrot.slane %v1432, 4
      %v1435 = vshll.u32 %v1260, 16
      %v1437 = vrot.slane %v1435, 5
      %v1438 = vor.u32 %v1434, %v1437
      %v1439 = vrot.slane %v1438, 4
      %v1441 = vshll.u32 %v1261, 16
      %v1443 = vrot.slane %v1441, 5
      %v1444 = vsel %vm282, %v1439, %v1443
      %v1445 = vshrl.u32 %v1261, 16
      %v1447 = vrot.slane %v1445, 4
      %v1448 = vor.u32 %v1447, %v1443
      %v1449 = vrot.slane %v1448, 4
      %v1451 = vshll.u32 %v1262, 16
      %v1453 = vrot.slane %v1451, 5
      %v1454 = vsel %vm282, %v1449, %v1453
      %s1455 = scalar_lea.vmem %s1, 8
      %v1456 = vld [vmem:[%s1455] sm:$0x3]
      %v1457 = vunpack.c.l.b16 %v1276
      %v1458 = vunpack.c.l.b16 %v1286
      %v1459 = vunpack.c.l.b16 %v1300
      %v1460 = vunpack.c.l.b16 %v1310
      %v1461 = vunpack.c.l.b16 %v1324
      %v1462 = vunpack.c.l.b16 %v1334
      %v1463 = vunpack.c.l.b16 %v1348
      %v1464 = vunpack.c.l.b16 %v1358
      %v1465 = vunpack.c.l.b16 %v1372
      %v1466 = vunpack.c.l.b16 %v1382
      %v1467 = vunpack.c.l.b16 %v1396
      %v1468 = vunpack.c.l.b16 %v1406
      %v1469 = vunpack.c.l.b16 %v1420
      %v1470 = vunpack.c.l.b16 %v1430
      %v1471 = vunpack.c.l.b16 %v1444
      %v1472 = vunpack.c.l.b16 %v1454
      %v1473 = vpack.c.b16 %v1458, %v1457
      %v1474 = vpack.c.b16 %v1460, %v1459
      %v1475 = vpack.c.b16 %v1462, %v1461
      %v1476 = vpack.c.b16 %v1464, %v1463
      %v1477 = vpack.c.b16 %v1466, %v1465
      %v1478 = vpack.c.b16 %v1468, %v1467
      %v1479 = vpack.c.b16 %v1470, %v1469
      %v1480 = vpack.c.b16 %v1472, %v1471
      %v1482 = vsel %vm501, %v1473, 0
      %v1485 = vsel %vm501, %v1474, 0
      %v1488 = vsel %vm501, %v1475, 0
      %v1491 = vsel %vm501, %v1476, 0
      %v1494 = vsel %vm501, %v1477, 0
      %v1497 = vsel %vm501, %v1478, 0
      %v1500 = vsel %vm501, %v1479, 0
      %v1503 = vsel %vm501, %v1480, 0
      %v1506 = vsel %vm526, %v1456, 0
      %1508 = vmatprep.subr.bf16.mxu0 0
      %1509 = vmatpush1.bf16.msra.mxu0 %v1506
      %1510 = vmatprep.subr.bf16.mxu0 0
      %1511 = vmatpush1.bf16.msra.mxu0 0
      %1512 = vmatprep.subr.bf16.mxu0 0
      %1513 = vmatpush1.bf16.msra.mxu0 0
      %1514 = vmatprep.subr.bf16.mxu0 0
      %1515 = vmatpush1.bf16.msra.mxu0 0
      %1516 = vmatprep.subr.bf16.mxu0 0
      %1517 = vmatpush1.bf16.msra.mxu0 0
      %1518 = vmatprep.subr.bf16.mxu0 0
      %1519 = vmatpush1.bf16.msra.mxu0 0
      %1520 = vmatprep.subr.bf16.mxu0 0
      %1521 = vmatpush1.bf16.msra.mxu0 0
      %1522 = vmatprep.subr.bf16.mxu0 0
      %1523 = vmatpush1.bf16.msra.mxu0 0
      %1524 = vmatprep.subr.bf16.mxu0 0
      %1525 = vmatpush1.bf16.msra.mxu0 0
      %1526 = vmatprep.subr.bf16.mxu0 0
      %1527 = vmatpush1.bf16.msra.mxu0 0
      %1528 = vmatprep.subr.bf16.mxu0 0
      %1529 = vmatpush1.bf16.msra.mxu0 0
      %1530 = vmatprep.subr.bf16.mxu0 0
      %1531 = vmatpush1.bf16.msra.mxu0 0
      %1532 = vmatprep.subr.bf16.mxu0 0
      %1533 = vmatpush1.bf16.msra.mxu0 0
      %1534 = vmatprep.subr.bf16.mxu0 0
      %1535 = vmatpush1.bf16.msra.mxu0 0
      %1536 = vmatprep.subr.bf16.mxu0 0
      %1537 = vmatpush1.bf16.msra.mxu0 0
      %1538 = vmatprep.subr.bf16.mxu0 0
      %1539 = vmatpush1.bf16.msra.mxu0 0
      %1540 = vmatprep.mubr.bf16.mxu0 0
      %1541 = vmatmul.mubr.bf16.gmra.mrb[0].mxu0 %v1482
      %v1542 = vpop.f32.mrb[0].mxu0
      %v1543 = vadd.f32 0.0, %v1542
      %v1544 = vpop.f32.mrb[0].mxu0
      %v1545 = vpop.f32.mrb[0].mxu0
      %v1546 = vadd.f32 0.0, %v1545
      %v1547 = vpop.f32.mrb[0].mxu0
      %1548 = vmatprep.mubr.bf16.mxu0 0
      %1549 = vmatmul.mubr.bf16.gmra.mrb[0].mxu0 %v1485
      %v1550 = vpop.f32.mrb[0].mxu0
      %v1551 = vadd.f32 0.0, %v1550
      %v1552 = vpop.f32.mrb[0].mxu0
      %v1553 = vpop.f32.mrb[0].mxu0
      %v1554 = vadd.f32 0.0, %v1553
      %v1555 = vpop.f32.mrb[0].mxu0
      %1556 = vmatprep.mubr.bf16.mxu0 0
      %1557 = vmatmul.mubr.bf16.gmra.mrb[0].mxu0 %v1488
      %v1558 = vpop.f32.mrb[0].mxu0
      %v1559 = vadd.f32 0.0, %v1558
      %v1560 = vpop.f32.mrb[0].mxu0
      %v1561 = vpop.f32.mrb[0].mxu0
      %v1562 = vadd.f32 0.0, %v1561
      %v1563 = vpop.f32.mrb[0].mxu0
      %1564 = vmatprep.mubr.bf16.mxu0 0
      %1565 = vmatmul.mubr.bf16.gmra.mrb[0].mxu0 %v1491
      %v1566 = vpop.f32.mrb[0].mxu0
      %v1567 = vadd.f32 0.0, %v1566
      %v1568 = vpop.f32.mrb[0].mxu0
      %v1569 = vpop.f32.mrb[0].mxu0
      %v1570 = vadd.f32 0.0, %v1569
      %v1571 = vpop.f32.mrb[0].mxu0
      %1572 = vmatprep.mubr.bf16.mxu0 0
      %1573 = vmatmul.mubr.bf16.gmra.mrb[0].mxu0 %v1494
      %v1574 = vpop.f32.mrb[0].mxu0
      %v1575 = vadd.f32 0.0, %v1574
      %v1576 = vpop.f32.mrb[0].mxu0
      %v1577 = vpop.f32.mrb[0].mxu0
      %v1578 = vadd.f32 0.0, %v1577
      %v1579 = vpop.f32.mrb[0].mxu0
      %1580 = vmatprep.mubr.bf16.mxu0 0
      %1581 = vmatmul.mubr.bf16.gmra.mrb[0].mxu0 %v1497
      %v1582 = vpop.f32.mrb[0].mxu0
      %v1583 = vadd.f32 0.0, %v1582
      %v1584 = vpop.f32.mrb[0].mxu0
      %v1585 = vpop.f32.mrb[0].mxu0
      %v1586 = vadd.f32 0.0, %v1585
      %v1587 = vpop.f32.mrb[0].mxu0
      %1588 = vmatprep.mubr.bf16.mxu0 0
      %1589 = vmatmul.mubr.bf16.gmra.mrb[0].mxu0 %v1500
      %v1590 = vpop.f32.mrb[0].mxu0
      %v1591 = vadd.f32 0.0, %v1590
      %v1592 = vpop.f32.mrb[0].mxu0
      %v1593 = vpop.f32.mrb[0].mxu0
      %v1594 = vadd.f32 0.0, %v1593
      %v1595 = vpop.f32.mrb[0].mxu0
      %1596 = vmatprep.mubr.bf16.mxu0 0
      %1597 = vmatmul.mubr.bf16.gmra.mrb[0].mxu0 %v1503
      %v1598 = vpop.f32.mrb[0].mxu0
      %v1599 = vadd.f32 0.0, %v1598
      %v1600 = vpop.f32.mrb[0].mxu0
      %v1601 = vpop.f32.mrb[0].mxu0
      %v1602 = vadd.f32 0.0, %v1601
      %v1603 = vpop.f32.mrb[0].mxu0
      %1604 = vdwg.mxu0
      %v1605 = vadd.f32 %v1223, %v1543
      %v1606 = vadd.f32 %v1224, %v1546
      %v1607 = vadd.f32 %v1225, %v1551
      %v1608 = vadd.f32 %v1226, %v1554
      %v1609 = vadd.f32 %v1227, %v1559
      %v1610 = vadd.f32 %v1228, %v1562
      %v1611 = vadd.f32 %v1229, %v1567
      %v1612 = vadd.f32 %v1230, %v1570
      %v1613 = vadd.f32 %v1231, %v1575
      %v1614 = vadd.f32 %v1232, %v1578
      %v1615 = vadd.f32 %v1233, %v1583
      %v1616 = vadd.f32 %v1234, %v1586
      %v1617 = vadd.f32 %v1235, %v1591
      %v1618 = vadd.f32 %v1236, %v1594
      %v1619 = vadd.f32 %v1237, %v1599
      %v1620 = vadd.f32 %v1238, %v1602
      %v1621 = vld [vmem:[%s1040] sm:$0xe]
      %v1622 = vld [vmem:[%s1040 + $0xc] sm:$0xe]
      %v1623 = vld [vmem:[%s1040 + $0x18] sm:$0xe]
      %v1624 = vld [vmem:[%s1040 + $0x24] sm:$0xe]
      %v1625 = vld [vmem:[%s1040 + $0x30] sm:$0xe]
      %v1626 = vld [vmem:[%s1040 + $0x3c] sm:$0xe]
      %v1627 = vld [vmem:[%s1040 + $0x48] sm:$0xe]
      %v1628 = vld [vmem:[%s1040 + $0x54] sm:$0xe]
      %v1653 = vrot.slane %v1621, 5
      %v1654 = vrot.slane %v1653, 4
      %v1655 = vrot.slane %v1240, 5
      %v1656 = vsel %vm817, %v1654, %v1655
      %v1657 = vrot.slane %v1655, 4
      %v1658 = vrot.slane %v1241, 5
      %v1659 = vsel %vm817, %v1657, %v1658
      %v1660 = vrot.slane %v1622, 5
      %v1661 = vrot.slane %v1660, 4
      %v1662 = vrot.slane %v1243, 5
      %v1663 = vsel %vm817, %v1661, %v1662
      %v1664 = vrot.slane %v1662, 4
      %v1665 = vrot.slane %v1244, 5
      %v1666 = vsel %vm817, %v1664, %v1665
      %v1667 = vrot.slane %v1623, 5
      %v1668 = vrot.slane %v1667, 4
      %v1669 = vrot.slane %v1246, 5
      %v1670 = vsel %vm817, %v1668, %v1669
      %v1671 = vrot.slane %v1669, 4
      %v1672 = vrot.slane %v1247, 5
      %v1673 = vsel %vm817, %v1671, %v1672
      %v1674 = vrot.slane %v1624, 5
      %v1675 = vrot.slane %v1674, 4
      %v1676 = vrot.slane %v1249, 5
      %v1677 = vsel %vm817, %v1675, %v1676
      %v1678 = vrot.slane %v1676, 4
      %v1679 = vrot.slane %v1250, 5
      %v1680 = vsel %vm817, %v1678, %v1679
      %v1681 = vrot.slane %v1625, 5
      %v1682 = vrot.slane %v1681, 4
      %v1683 = vrot.slane %v1252, 5
      %v1684 = vsel %vm817, %v1682, %v1683
      %v1685 = vrot.slane %v1683, 4
      %v1686 = vrot.slane %v1253, 5
      %v1687 = vsel %vm817, %v1685, %v1686
      %v1688 = vrot.slane %v1626, 5
      %v1689 = vrot.slane %v1688, 4
      %v1690 = vrot.slane %v1255, 5
      %v1691 = vsel %vm817, %v1689, %v1690
      %v1692 = vrot.slane %v1690, 4
      %v1693 = vrot.slane %v1256, 5
      %v1694 = vsel %vm817, %v1692, %v1693
      %v1695 = vrot.slane %v1627, 5
      %v1696 = vrot.slane %v1695, 4
      %v1697 = vrot.slane %v1258, 5
      %v1698 = vsel %vm817, %v1696, %v1697
      %v1699 = vrot.slane %v1697, 4
      %v1700 = vrot.slane %v1259, 5
      %v1701 = vsel %vm817, %v1699, %v1700
      %v1702 = vrot.slane %v1628, 5
      %v1703 = vrot.slane %v1702, 4
      %v1704 = vrot.slane %v1261, 5
      %v1705 = vsel %vm817, %v1703, %v1704
      %v1706 = vrot.slane %v1704, 4
      %v1707 = vrot.slane %v1262, 5
      %v1708 = vsel %vm817, %v1706, %v1707
      %s1709 = scalar_lea.vmem %s1, 10
      %v1710 = vld [vmem:[%s1709] sm:$0x3]
      %v1711 = vunpack.c.l.b16 %v1656
      %v1712 = vunpack.c.l.b16 %v1659
      %v1713 = vunpack.c.l.b16 %v1663
      %v1714 = vunpack.c.l.b16 %v1666
      %v1715 = vunpack.c.l.b16 %v1670
      %v1716 = vunpack.c.l.b16 %v1673
      %v1717 = vunpack.c.l.b16 %v1677
      %v1718 = vunpack.c.l.b16 %v1680
      %v1719 = vunpack.c.l.b16 %v1684
      %v1720 = vunpack.c.l.b16 %v1687
      %v1721 = vunpack.c.l.b16 %v1691
      %v1722 = vunpack.c.l.b16 %v1694
      %v1723 = vunpack.c.l.b16 %v1698
      %v1724 = vunpack.c.l.b16 %v1701
      %v1725 = vunpack.c.l.b16 %v1705
      %v1726 = vunpack.c.l.b16 %v1708
      %v1727 = vpack.c.b16 %v1712, %v1711
      %v1728 = vpack.c.b16 %v1714, %v1713
      %v1729 = vpack.c.b16 %v1716, %v1715
      %v1730 = vpack.c.b16 %v1718, %v1717
      %v1731 = vpack.c.b16 %v1720, %v1719
      %v1732 = vpack.c.b16 %v1722, %v1721
      %v1733 = vpack.c.b16 %v1724, %v1723
      %v1734 = vpack.c.b16 %v1726, %v1725
      %v1736 = vsel %vm501, %v1727, 0
      %v1739 = vsel %vm501, %v1728, 0
      %v1742 = vsel %vm501, %v1729, 0
      %v1745 = vsel %vm501, %v1730, 0
      %v1748 = vsel %vm501, %v1731, 0
      %v1751 = vsel %vm501, %v1732, 0
      %v1754 = vsel %vm501, %v1733, 0
      %v1757 = vsel %vm501, %v1734, 0
      %v1760 = vsel %vm526, %v1710, 0
      %1762 = vmatprep.subr.bf16.mxu0 0
      %1763 = vmatpush1.bf16.msra.mxu0 %v1760
      %1764 = vmatprep.subr.bf16.mxu0 0
      %1765 = vmatpush1.bf16.msra.mxu0 0
      %1766 = vmatprep.subr.bf16.mxu0 0
      %1767 = vmatpush1.bf16.msra.mxu0 0
      %1768 = vmatprep.subr.bf16.mxu0 0
      %1769 = vmatpush1.bf16.msra.mxu0 0
      %1770 = vmatprep.subr.bf16.mxu0 0
      %1771 = vmatpush1.bf16.msra.mxu0 0
      %1772 = vmatprep.subr.bf16.mxu0 0
      %1773 = vmatpush1.bf16.msra.mxu0 0
      %1774 = vmatprep.subr.bf16.mxu0 0
      %1775 = vmatpush1.bf16.msra.mxu0 0
      %1776 = vmatprep.subr.bf16.mxu0 0
      %1777 = vmatpush1.bf16.msra.mxu0 0
      %1778 = vmatprep.subr.bf16.mxu0 0
      %1779 = vmatpush1.bf16.msra.mxu0 0
      %1780 = vmatprep.subr.bf16.mxu0 0
      %1781 = vmatpush1.bf16.msra.mxu0 0
      %1782 = vmatprep.subr.bf16.mxu0 0
      %1783 = vmatpush1.bf16.msra.mxu0 0
      %1784 = vmatprep.subr.bf16.mxu0 0
      %1785 = vmatpush1.bf16.msra.mxu0 0
      %1786 = vmatprep.subr.bf16.mxu0 0
      %1787 = vmatpush1.bf16.msra.mxu0 0
      %1788 = vmatprep.subr.bf16.mxu0 0
      %1789 = vmatpush1.bf16.msra.mxu0 0
      %1790 = vmatprep.subr.bf16.mxu0 0
      %1791 = vmatpush1.bf16.msra.mxu0 0
      %1792 = vmatprep.subr.bf16.mxu0 0
      %1793 = vmatpush1.bf16.msra.mxu0 0
      %1794 = vmatprep.mubr.bf16.mxu0 0
      %1795 = vmatmul.mubr.bf16.gmra.mrb[0].mxu0 %v1736
      %v1796 = vpop.f32.mrb[0].mxu0
      %v1797 = vadd.f32 0.0, %v1796
      %v1798 = vpop.f32.mrb[0].mxu0
      %v1799 = vpop.f32.mrb[0].mxu0
      %v1800 = vadd.f32 0.0, %v1799
      %v1801 = vpop.f32.mrb[0].mxu0
      %1802 = vmatprep.mubr.bf16.mxu0 0
      %1803 = vmatmul.mubr.bf16.gmra.mrb[0].mxu0 %v1739
      %v1804 = vpop.f32.mrb[0].mxu0
      %v1805 = vadd.f32 0.0, %v1804
      %v1806 = vpop.f32.mrb[0].mxu0
      %v1807 = vpop.f32.mrb[0].mxu0
      %v1808 = vadd.f32 0.0, %v1807
      %v1809 = vpop.f32.mrb[0].mxu0
      %1810 = vmatprep.mubr.bf16.mxu0 0
      %1811 = vmatmul.mubr.bf16.gmra.mrb[0].mxu0 %v1742
      %v1812 = vpop.f32.mrb[0].mxu0
      %v1813 = vadd.f32 0.0, %v1812
      %v1814 = vpop.f32.mrb[0].mxu0
      %v1815 = vpop.f32.mrb[0].mxu0
      %v1816 = vadd.f32 0.0, %v1815
      %v1817 = vpop.f32.mrb[0].mxu0
      %1818 = vmatprep.mubr.bf16.mxu0 0
      %1819 = vmatmul.mubr.bf16.gmra.mrb[0].mxu0 %v1745
      %v1820 = vpop.f32.mrb[0].mxu0
      %v1821 = vadd.f32 0.0, %v1820
      %v1822 = vpop.f32.mrb[0].mxu0
      %v1823 = vpop.f32.mrb[0].mxu0
      %v1824 = vadd.f32 0.0, %v1823
      %v1825 = vpop.f32.mrb[0].mxu0
      %1826 = vmatprep.mubr.bf16.mxu0 0
      %1827 = vmatmul.mubr.bf16.gmra.mrb[0].mxu0 %v1748
      %v1828 = vpop.f32.mrb[0].mxu0
      %v1829 = vadd.f32 0.0, %v1828
      %v1830 = vpop.f32.mrb[0].mxu0
      %v1831 = vpop.f32.mrb[0].mxu0
      %v1832 = vadd.f32 0.0, %v1831
      %v1833 = vpop.f32.mrb[0].mxu0
      %1834 = vmatprep.mubr.bf16.mxu0 0
      %1835 = vmatmul.mubr.bf16.gmra.mrb[0].mxu0 %v1751
      %v1836 = vpop.f32.mrb[0].mxu0
      %v1837 = vadd.f32 0.0, %v1836
      %v1838 = vpop.f32.mrb[0].mxu0
      %v1839 = vpop.f32.mrb[0].mxu0
      %v1840 = vadd.f32 0.0, %v1839
      %v1841 = vpop.f32.mrb[0].mxu0
      %1842 = vmatprep.mubr.bf16.mxu0 0
      %1843 = vmatmul.mubr.bf16.gmra.mrb[0].mxu0 %v1754
      %v1844 = vpop.f32.mrb[0].mxu0
      %v1845 = vadd.f32 0.0, %v1844
      %v1846 = vpop.f32.mrb[0].mxu0
      %v1847 = vpop.f32.mrb[0].mxu0
      %v1848 = vadd.f32 0.0, %v1847
      %v1849 = vpop.f32.mrb[0].mxu0
      %1850 = vmatprep.mubr.bf16.mxu0 0
      %1851 = vmatmul.mubr.bf16.gmra.mrb[0].mxu0 %v1757
      %v1852 = vpop.f32.mrb[0].mxu0
      %v1853 = vadd.f32 0.0, %v1852
      %v1854 = vpop.f32.mrb[0].mxu0
      %v1855 = vpop.f32.mrb[0].mxu0
      %v1856 = vadd.f32 0.0, %v1855
      %v1857 = vpop.f32.mrb[0].mxu0
      %1858 = vdwg.mxu0
      %v1859 = vadd.f32 %v1605, %v1797
      %v1860 = vadd.f32 %v1606, %v1800
      %v1861 = vadd.f32 %v1607, %v1805
      %v1862 = vadd.f32 %v1608, %v1808
      %v1863 = vadd.f32 %v1609, %v1813
      %v1864 = vadd.f32 %v1610, %v1816
      %v1865 = vadd.f32 %v1611, %v1821
      %v1866 = vadd.f32 %v1612, %v1824
      %v1867 = vadd.f32 %v1613, %v1829
      %v1868 = vadd.f32 %v1614, %v1832
      %v1869 = vadd.f32 %v1615, %v1837
      %v1870 = vadd.f32 %v1616, %v1840
      %v1871 = vadd.f32 %v1617, %v1845
      %v1872 = vadd.f32 %v1618, %v1848
      %v1873 = vadd.f32 %v1619, %v1853
      %v1874 = vadd.f32 %v1620, %v1856
      %s1875 = scalar_lea.vmem %s234, 24
      %v1876 = vld [vmem:[%s1875] sm:$0xf]
      %v1877 = vld [vmem:[%s1875 + $0x4] sm:$0xf]
      %v1878 = vld [vmem:[%s1875 + $0xc] sm:$0xf]
      %v1879 = vld [vmem:[%s1875 + $0x10] sm:$0xf]
      %v1880 = vld [vmem:[%s1875 + $0x18] sm:$0xf]
      %v1881 = vld [vmem:[%s1875 + $0x1c] sm:$0xf]
      %v1882 = vld [vmem:[%s1875 + $0x24] sm:$0xf]
      %v1883 = vld [vmem:[%s1875 + $0x28] sm:$0xf]
      %v1884 = vld [vmem:[%s1875 + $0x30] sm:$0xf]
      %v1885 = vld [vmem:[%s1875 + $0x34] sm:$0xf]
      %v1886 = vld [vmem:[%s1875 + $0x3c] sm:$0xf]
      %v1887 = vld [vmem:[%s1875 + $0x40] sm:$0xf]
      %v1888 = vld [vmem:[%s1875 + $0x48] sm:$0xf]
      %v1889 = vld [vmem:[%s1875 + $0x4c] sm:$0xf]
      %v1890 = vld [vmem:[%s1875 + $0x54] sm:$0xf]
      %v1891 = vld [vmem:[%s1875 + $0x58] sm:$0xf]
      %s1892 = scalar_lea.vmem %s1, 12
      %v1893 = vld [vmem:[%s1892] sm:$0x3]
      %v1910 = vunpack.c.l.b16 %v1876
      %v1911 = vunpack.c.l.b16 %v1877
      %v1912 = vunpack.c.l.b16 %v1878
      %v1913 = vunpack.c.l.b16 %v1879
      %v1914 = vunpack.c.l.b16 %v1880
      %v1915 = vunpack.c.l.b16 %v1881
      %v1916 = vunpack.c.l.b16 %v1882
      %v1917 = vunpack.c.l.b16 %v1883
      %v1918 = vunpack.c.l.b16 %v1884
      %v1919 = vunpack.c.l.b16 %v1885
      %v1920 = vunpack.c.l.b16 %v1886
      %v1921 = vunpack.c.l.b16 %v1887
      %v1922 = vunpack.c.l.b16 %v1888
      %v1923 = vunpack.c.l.b16 %v1889
      %v1924 = vunpack.c.l.b16 %v1890
      %v1925 = vunpack.c.l.b16 %v1891
      %v1926 = vpack.c.b16 %v1911, %v1910
      %v1927 = vpack.c.b16 %v1913, %v1912
      %v1928 = vpack.c.b16 %v1915, %v1914
      %v1929 = vpack.c.b16 %v1917, %v1916
      %v1930 = vpack.c.b16 %v1919, %v1918
      %v1931 = vpack.c.b16 %v1921, %v1920
      %v1932 = vpack.c.b16 %v1923, %v1922
      %v1933 = vpack.c.b16 %v1925, %v1924
      %v1935 = vsel %vm501, %v1926, 0
      %v1938 = vsel %vm501, %v1927, 0
      %v1941 = vsel %vm501, %v1928, 0
      %v1944 = vsel %vm501, %v1929, 0
      %v1947 = vsel %vm501, %v1930, 0
      %v1950 = vsel %vm501, %v1931, 0
      %v1953 = vsel %vm501, %v1932, 0
      %v1956 = vsel %vm501, %v1933, 0
      %v1959 = vsel %vm526, %v1893, 0
      %1961 = vmatprep.subr.bf16.mxu0 0
      %1962 = vmatpush1.bf16.msra.mxu0 %v1959
      %1963 = vmatprep.subr.bf16.mxu0 0
      %1964 = vmatpush1.bf16.msra.mxu0 0
      %1965 = vmatprep.subr.bf16.mxu0 0
      %1966 = vmatpush1.bf16.msra.mxu0 0
      %1967 = vmatprep.subr.bf16.mxu0 0
      %1968 = vmatpush1.bf16.msra.mxu0 0
      %1969 = vmatprep.subr.bf16.mxu0 0
      %1970 = vmatpush1.bf16.msra.mxu0 0
      %1971 = vmatprep.subr.bf16.mxu0 0
      %1972 = vmatpush1.bf16.msra.mxu0 0
      %1973 = vmatprep.subr.bf16.mxu0 0
      %1974 = vmatpush1.bf16.msra.mxu0 0
      %1975 = vmatprep.subr.bf16.mxu0 0
      %1976 = vmatpush1.bf16.msra.mxu0 0
      %1977 = vmatprep.subr.bf16.mxu0 0
      %1978 = vmatpush1.bf16.msra.mxu0 0
      %1979 = vmatprep.subr.bf16.mxu0 0
      %1980 = vmatpush1.bf16.msra.mxu0 0
      %1981 = vmatprep.subr.bf16.mxu0 0
      %1982 = vmatpush1.bf16.msra.mxu0 0
      %1983 = vmatprep.subr.bf16.mxu0 0
      %1984 = vmatpush1.bf16.msra.mxu0 0
      %1985 = vmatprep.subr.bf16.mxu0 0
      %1986 = vmatpush1.bf16.msra.mxu0 0
      %1987 = vmatprep.subr.bf16.mxu0 0
      %1988 = vmatpush1.bf16.msra.mxu0 0
      %1989 = vmatprep.subr.bf16.mxu0 0
      %1990 = vmatpush1.bf16.msra.mxu0 0
      %1991 = vmatprep.subr.bf16.mxu0 0
      %1992 = vmatpush1.bf16.msra.mxu0 0
      %1993 = vmatprep.mubr.bf16.mxu0 0
      %1994 = vmatmul.mubr.bf16.gmra.mrb[0].mxu0 %v1935
      %v1995 = vpop.f32.mrb[0].mxu0
      %v1996 = vadd.f32 0.0, %v1995
      %v1997 = vpop.f32.mrb[0].mxu0
      %v1998 = vpop.f32.mrb[0].mxu0
      %v1999 = vadd.f32 0.0, %v1998
      %v2000 = vpop.f32.mrb[0].mxu0
      %2001 = vmatprep.mubr.bf16.mxu0 0
      %2002 = vmatmul.mubr.bf16.gmra.mrb[0].mxu0 %v1938
      %v2003 = vpop.f32.mrb[0].mxu0
      %v2004 = vadd.f32 0.0, %v2003
      %v2005 = vpop.f32.mrb[0].mxu0
      %v2006 = vpop.f32.mrb[0].mxu0
      %v2007 = vadd.f32 0.0, %v2006
      %v2008 = vpop.f32.mrb[0].mxu0
      %2009 = vmatprep.mubr.bf16.mxu0 0
      %2010 = vmatmul.mubr.bf16.gmra.mrb[0].mxu0 %v1941
      %v2011 = vpop.f32.mrb[0].mxu0
      %v2012 = vadd.f32 0.0, %v2011
      %v2013 = vpop.f32.mrb[0].mxu0
      %v2014 = vpop.f32.mrb[0].mxu0
      %v2015 = vadd.f32 0.0, %v2014
      %v2016 = vpop.f32.mrb[0].mxu0
      %2017 = vmatprep.mubr.bf16.mxu0 0
      %2018 = vmatmul.mubr.bf16.gmra.mrb[0].mxu0 %v1944
      %v2019 = vpop.f32.mrb[0].mxu0
      %v2020 = vadd.f32 0.0, %v2019
      %v2021 = vpop.f32.mrb[0].mxu0
      %v2022 = vpop.f32.mrb[0].mxu0
      %v2023 = vadd.f32 0.0, %v2022
      %v2024 = vpop.f32.mrb[0].mxu0
      %2025 = vmatprep.mubr.bf16.mxu0 0
      %2026 = vmatmul.mubr.bf16.gmra.mrb[0].mxu0 %v1947
      %v2027 = vpop.f32.mrb[0].mxu0
      %v2028 = vadd.f32 0.0, %v2027
      %v2029 = vpop.f32.mrb[0].mxu0
      %v2030 = vpop.f32.mrb[0].mxu0
      %v2031 = vadd.f32 0.0, %v2030
      %v2032 = vpop.f32.mrb[0].mxu0
      %2033 = vmatprep.mubr.bf16.mxu0 0
      %2034 = vmatmul.mubr.bf16.gmra.mrb[0].mxu0 %v1950
      %v2035 = vpop.f32.mrb[0].mxu0
      %v2036 = vadd.f32 0.0, %v2035
      %v2037 = vpop.f32.mrb[0].mxu0
      %v2038 = vpop.f32.mrb[0].mxu0
      %v2039 = vadd.f32 0.0, %v2038
      %v2040 = vpop.f32.mrb[0].mxu0
      %2041 = vmatprep.mubr.bf16.mxu0 0
      %2042 = vmatmul.mubr.bf16.gmra.mrb[0].mxu0 %v1953
      %v2043 = vpop.f32.mrb[0].mxu0
      %v2044 = vadd.f32 0.0, %v2043
      %v2045 = vpop.f32.mrb[0].mxu0
      %v2046 = vpop.f32.mrb[0].mxu0
      %v2047 = vadd.f32 0.0, %v2046
      %v2048 = vpop.f32.mrb[0].mxu0
      %2049 = vmatprep.mubr.bf16.mxu0 0
      %2050 = vmatmul.mubr.bf16.gmra.mrb[0].mxu0 %v1956
      %v2051 = vpop.f32.mrb[0].mxu0
      %v2052 = vadd.f32 0.0, %v2051
      %v2053 = vpop.f32.mrb[0].mxu0
      %v2054 = vpop.f32.mrb[0].mxu0
      %v2055 = vadd.f32 0.0, %v2054
      %v2056 = vpop.f32.mrb[0].mxu0
      %2057 = vdwg.mxu0
      %v2058 = vadd.f32 %v1859, %v1996
      %v2059 = vadd.f32 %v1860, %v1999
      %v2060 = vadd.f32 %v1861, %v2004
      %v2061 = vadd.f32 %v1862, %v2007
      %v2062 = vadd.f32 %v1863, %v2012
      %v2063 = vadd.f32 %v1864, %v2015
      %v2064 = vadd.f32 %v1865, %v2020
      %v2065 = vadd.f32 %v1866, %v2023
      %v2066 = vadd.f32 %v1867, %v2028
      %v2067 = vadd.f32 %v1868, %v2031
      %v2068 = vadd.f32 %v1869, %v2036
      %v2069 = vadd.f32 %v1870, %v2039
      %v2070 = vadd.f32 %v1871, %v2044
      %v2071 = vadd.f32 %v1872, %v2047
      %v2072 = vadd.f32 %v1873, %v2052
      %v2073 = vadd.f32 %v1874, %v2055
      %v2074 = vld [vmem:[%s1875] sm:$0xf]
      %v2075 = vld [vmem:[%s1875 + $0x4] sm:$0xf]
      %v2076 = vld [vmem:[%s1875 + $0x8] sm:$0x1]
      %v2077 = vld [vmem:[%s1875 + $0xc] sm:$0xf]
      %v2078 = vld [vmem:[%s1875 + $0x10] sm:$0xf]
      %v2079 = vld [vmem:[%s1875 + $0x14] sm:$0x1]
      %v2080 = vld [vmem:[%s1875 + $0x18] sm:$0xf]
      %v2081 = vld [vmem:[%s1875 + $0x1c] sm:$0xf]
      %v2082 = vld [vmem:[%s1875 + $0x20] sm:$0x1]
      %v2083 = vld [vmem:[%s1875 + $0x24] sm:$0xf]
      %v2084 = vld [vmem:[%s1875 + $0x28] sm:$0xf]
      %v2085 = vld [vmem:[%s1875 + $0x2c] sm:$0x1]
      %v2086 = vld [vmem:[%s1875 + $0x30] sm:$0xf]
      %v2087 = vld [vmem:[%s1875 + $0x34] sm:$0xf]
      %v2088 = vld [vmem:[%s1875 + $0x38] sm:$0x1]
      %v2089 = vld [vmem:[%s1875 + $0x3c] sm:$0xf]
      %v2090 = vld [vmem:[%s1875 + $0x40] sm:$0xf]
      %v2091 = vld [vmem:[%s1875 + $0x44] sm:$0x1]
      %v2092 = vld [vmem:[%s1875 + $0x48] sm:$0xf]
      %v2093 = vld [vmem:[%s1875 + $0x4c] sm:$0xf]
      %v2094 = vld [vmem:[%s1875 + $0x50] sm:$0x1]
      %v2095 = vld [vmem:[%s1875 + $0x54] sm:$0xf]
      %v2096 = vld [vmem:[%s1875 + $0x58] sm:$0xf]
      %v2097 = vld [vmem:[%s1875 + $0x5c] sm:$0x1]
      %v2099 = vshrl.u32 %v2074, 16
      %v2101 = vrot.slane %v2099, 4
      %v2102 = vshll.u32 %v2074, 16
      %v2104 = vrot.slane %v2102, 5
      %v2105 = vor.u32 %v2101, %v2104
      %v2106 = vrot.slane %v2105, 4
      %v2108 = vshll.u32 %v2075, 16
      %v2110 = vrot.slane %v2108, 5
      %v2111 = vsel %vm282, %v2106, %v2110
      %v2112 = vshrl.u32 %v2075, 16
      %v2114 = vrot.slane %v2112, 4
      %v2115 = vor.u32 %v2114, %v2110
      %v2116 = vrot.slane %v2115, 4
      %v2118 = vshll.u32 %v2076, 16
      %v2120 = vrot.slane %v2118, 5
      %v2121 = vsel %vm282, %v2116, %v2120
      %v2123 = vshrl.u32 %v2077, 16
      %v2125 = vrot.slane %v2123, 4
      %v2126 = vshll.u32 %v2077, 16
      %v2128 = vrot.slane %v2126, 5
      %v2129 = vor.u32 %v2125, %v2128
      %v2130 = vrot.slane %v2129, 4
      %v2132 = vshll.u32 %v2078, 16
      %v2134 = vrot.slane %v2132, 5
      %v2135 = vsel %vm282, %v2130, %v2134
      %v2136 = vshrl.u32 %v2078, 16
      %v2138 = vrot.slane %v2136, 4
      %v2139 = vor.u32 %v2138, %v2134
      %v2140 = vrot.slane %v2139, 4
      %v2142 = vshll.u32 %v2079, 16
      %v2144 = vrot.slane %v2142, 5
      %v2145 = vsel %vm282, %v2140, %v2144
      %v2147 = vshrl.u32 %v2080, 16
      %v2149 = vrot.slane %v2147, 4
      %v2150 = vshll.u32 %v2080, 16
      %v2152 = vrot.slane %v2150, 5
      %v2153 = vor.u32 %v2149, %v2152
      %v2154 = vrot.slane %v2153, 4
      %v2156 = vshll.u32 %v2081, 16
      %v2158 = vrot.slane %v2156, 5
      %v2159 = vsel %vm282, %v2154, %v2158
      %v2160 = vshrl.u32 %v2081, 16
      %v2162 = vrot.slane %v2160, 4
      %v2163 = vor.u32 %v2162, %v2158
      %v2164 = vrot.slane %v2163, 4
      %v2166 = vshll.u32 %v2082, 16
      %v2168 = vrot.slane %v2166, 5
      %v2169 = vsel %vm282, %v2164, %v2168
      %v2171 = vshrl.u32 %v2083, 16
      %v2173 = vrot.slane %v2171, 4
      %v2174 = vshll.u32 %v2083, 16
      %v2176 = vrot.slane %v2174, 5
      %v2177 = vor.u32 %v2173, %v2176
      %v2178 = vrot.slane %v2177, 4
      %v2180 = vshll.u32 %v2084, 16
      %v2182 = vrot.slane %v2180, 5
      %v2183 = vsel %vm282, %v2178, %v2182
      %v2184 = vshrl.u32 %v2084, 16
      %v2186 = vrot.slane %v2184, 4
      %v2187 = vor.u32 %v2186, %v2182
      %v2188 = vrot.slane %v2187, 4
      %v2190 = vshll.u32 %v2085, 16
      %v2192 = vrot.slane %v2190, 5
      %v2193 = vsel %vm282, %v2188, %v2192
      %v2195 = vshrl.u32 %v2086, 16
      %v2197 = vrot.slane %v2195, 4
      %v2198 = vshll.u32 %v2086, 16
      %v2200 = vrot.slane %v2198, 5
      %v2201 = vor.u32 %v2197, %v2200
      %v2202 = vrot.slane %v2201, 4
      %v2204 = vshll.u32 %v2087, 16
      %v2206 = vrot.slane %v2204, 5
      %v2207 = vsel %vm282, %v2202, %v2206
      %v2208 = vshrl.u32 %v2087, 16
      %v2210 = vrot.slane %v2208, 4
      %v2211 = vor.u32 %v2210, %v2206
      %v2212 = vrot.slane %v2211, 4
      %v2214 = vshll.u32 %v2088, 16
      %v2216 = vrot.slane %v2214, 5
      %v2217 = vsel %vm282, %v2212, %v2216
      %v2219 = vshrl.u32 %v2089, 16
      %v2221 = vrot.slane %v2219, 4
      %v2222 = vshll.u32 %v2089, 16
      %v2224 = vrot.slane %v2222, 5
      %v2225 = vor.u32 %v2221, %v2224
      %v2226 = vrot.slane %v2225, 4
      %v2228 = vshll.u32 %v2090, 16
      %v2230 = vrot.slane %v2228, 5
      %v2231 = vsel %vm282, %v2226, %v2230
      %v2232 = vshrl.u32 %v2090, 16
      %v2234 = vrot.slane %v2232, 4
      %v2235 = vor.u32 %v2234, %v2230
      %v2236 = vrot.slane %v2235, 4
      %v2238 = vshll.u32 %v2091, 16
      %v2240 = vrot.slane %v2238, 5
      %v2241 = vsel %vm282, %v2236, %v2240
      %v2243 = vshrl.u32 %v2092, 16
      %v2245 = vrot.slane %v2243, 4
      %v2246 = vshll.u32 %v2092, 16
      %v2248 = vrot.slane %v2246, 5
      %v2249 = vor.u32 %v2245, %v2248
      %v2250 = vrot.slane %v2249, 4
      %v2252 = vshll.u32 %v2093, 16
      %v2254 = vrot.slane %v2252, 5
      %v2255 = vsel %vm282, %v2250, %v2254
      %v2256 = vshrl.u32 %v2093, 16
      %v2258 = vrot.slane %v2256, 4
      %v2259 = vor.u32 %v2258, %v2254
      %v2260 = vrot.slane %v2259, 4
      %v2262 = vshll.u32 %v2094, 16
      %v2264 = vrot.slane %v2262, 5
      %v2265 = vsel %vm282, %v2260, %v2264
      %v2267 = vshrl.u32 %v2095, 16
      %v2269 = vrot.slane %v2267, 4
      %v2270 = vshll.u32 %v2095, 16
      %v2272 = vrot.slane %v2270, 5
      %v2273 = vor.u32 %v2269, %v2272
      %v2274 = vrot.slane %v2273, 4
      %v2276 = vshll.u32 %v2096, 16
      %v2278 = vrot.slane %v2276, 5
      %v2279 = vsel %vm282, %v2274, %v2278
      %v2280 = vshrl.u32 %v2096, 16
      %v2282 = vrot.slane %v2280, 4
      %v2283 = vor.u32 %v2282, %v2278
      %v2284 = vrot.slane %v2283, 4
      %v2286 = vshll.u32 %v2097, 16
      %v2288 = vrot.slane %v2286, 5
      %v2289 = vsel %vm282, %v2284, %v2288
      %s2290 = scalar_lea.vmem %s1, 14
      %v2291 = vld [vmem:[%s2290] sm:$0x3]
      %v2292 = vunpack.c.l.b16 %v2111
      %v2293 = vunpack.c.l.b16 %v2121
      %v2294 = vunpack.c.l.b16 %v2135
      %v2295 = vunpack.c.l.b16 %v2145
      %v2296 = vunpack.c.l.b16 %v2159
      %v2297 = vunpack.c.l.b16 %v2169
      %v2298 = vunpack.c.l.b16 %v2183
      %v2299 = vunpack.c.l.b16 %v2193
      %v2300 = vunpack.c.l.b16 %v2207
      %v2301 = vunpack.c.l.b16 %v2217
      %v2302 = vunpack.c.l.b16 %v2231
      %v2303 = vunpack.c.l.b16 %v2241
      %v2304 = vunpack.c.l.b16 %v2255
      %v2305 = vunpack.c.l.b16 %v2265
      %v2306 = vunpack.c.l.b16 %v2279
      %v2307 = vunpack.c.l.b16 %v2289
      %v2308 = vpack.c.b16 %v2293, %v2292
      %v2309 = vpack.c.b16 %v2295, %v2294
      %v2310 = vpack.c.b16 %v2297, %v2296
      %v2311 = vpack.c.b16 %v2299, %v2298
      %v2312 = vpack.c.b16 %v2301, %v2300
      %v2313 = vpack.c.b16 %v2303, %v2302
      %v2314 = vpack.c.b16 %v2305, %v2304
      %v2315 = vpack.c.b16 %v2307, %v2306
      %v2317 = vsel %vm501, %v2308, 0
      %v2320 = vsel %vm501, %v2309, 0
      %v2323 = vsel %vm501, %v2310, 0
      %v2326 = vsel %vm501, %v2311, 0
      %v2329 = vsel %vm501, %v2312, 0
      %v2332 = vsel %vm501, %v2313, 0
      %v2335 = vsel %vm501, %v2314, 0
      %v2338 = vsel %vm501, %v2315, 0
      %v2341 = vsel %vm526, %v2291, 0
      %2343 = vmatprep.subr.bf16.mxu0 0
      %2344 = vmatpush1.bf16.msra.mxu0 %v2341
      %2345 = vmatprep.subr.bf16.mxu0 0
      %2346 = vmatpush1.bf16.msra.mxu0 0
      %2347 = vmatprep.subr.bf16.mxu0 0
      %2348 = vmatpush1.bf16.msra.mxu0 0
      %2349 = vmatprep.subr.bf16.mxu0 0
      %2350 = vmatpush1.bf16.msra.mxu0 0
      %2351 = vmatprep.subr.bf16.mxu0 0
      %2352 = vmatpush1.bf16.msra.mxu0 0
      %2353 = vmatprep.subr.bf16.mxu0 0
      %2354 = vmatpush1.bf16.msra.mxu0 0
      %2355 = vmatprep.subr.bf16.mxu0 0
      %2356 = vmatpush1.bf16.msra.mxu0 0
      %2357 = vmatprep.subr.bf16.mxu0 0
      %2358 = vmatpush1.bf16.msra.mxu0 0
      %2359 = vmatprep.subr.bf16.mxu0 0
      %2360 = vmatpush1.bf16.msra.mxu0 0
      %2361 = vmatprep.subr.bf16.mxu0 0
      %2362 = vmatpush1.bf16.msra.mxu0 0
      %2363 = vmatprep.subr.bf16.mxu0 0
      %2364 = vmatpush1.bf16.msra.mxu0 0
      %2365 = vmatprep.subr.bf16.mxu0 0
      %2366 = vmatpush1.bf16.msra.mxu0 0
      %2367 = vmatprep.subr.bf16.mxu0 0
      %2368 = vmatpush1.bf16.msra.mxu0 0
      %2369 = vmatprep.subr.bf16.mxu0 0
      %2370 = vmatpush1.bf16.msra.mxu0 0
      %2371 = vmatprep.subr.bf16.mxu0 0
      %2372 = vmatpush1.bf16.msra.mxu0 0
      %2373 = vmatprep.subr.bf16.mxu0 0
      %2374 = vmatpush1.bf16.msra.mxu0 0
      %2375 = vmatprep.mubr.bf16.mxu0 0
      %2376 = vmatmul.mubr.bf16.gmra.mrb[0].mxu0 %v2317
      %v2377 = vpop.f32.mrb[0].mxu0
      %v2378 = vadd.f32 0.0, %v2377
      %v2379 = vpop.f32.mrb[0].mxu0
      %v2380 = vpop.f32.mrb[0].mxu0
      %v2381 = vadd.f32 0.0, %v2380
      %v2382 = vpop.f32.mrb[0].mxu0
      %2383 = vmatprep.mubr.bf16.mxu0 0
      %2384 = vmatmul.mubr.bf16.gmra.mrb[0].mxu0 %v2320
      %v2385 = vpop.f32.mrb[0].mxu0
      %v2386 = vadd.f32 0.0, %v2385
      %v2387 = vpop.f32.mrb[0].mxu0
      %v2388 = vpop.f32.mrb[0].mxu0
      %v2389 = vadd.f32 0.0, %v2388
      %v2390 = vpop.f32.mrb[0].mxu0
      %2391 = vmatprep.mubr.bf16.mxu0 0
      %2392 = vmatmul.mubr.bf16.gmra.mrb[0].mxu0 %v2323
      %v2393 = vpop.f32.mrb[0].mxu0
      %v2394 = vadd.f32 0.0, %v2393
      %v2395 = vpop.f32.mrb[0].mxu0
      %v2396 = vpop.f32.mrb[0].mxu0
      %v2397 = vadd.f32 0.0, %v2396
      %v2398 = vpop.f32.mrb[0].mxu0
      %2399 = vmatprep.mubr.bf16.mxu0 0
      %2400 = vmatmul.mubr.bf16.gmra.mrb[0].mxu0 %v2326
      %v2401 = vpop.f32.mrb[0].mxu0
      %v2402 = vadd.f32 0.0, %v2401
      %v2403 = vpop.f32.mrb[0].mxu0
      %v2404 = vpop.f32.mrb[0].mxu0
      %v2405 = vadd.f32 0.0, %v2404
      %v2406 = vpop.f32.mrb[0].mxu0
      %2407 = vmatprep.mubr.bf16.mxu0 0
      %2408 = vmatmul.mubr.bf16.gmra.mrb[0].mxu0 %v2329
      %v2409 = vpop.f32.mrb[0].mxu0
      %v2410 = vadd.f32 0.0, %v2409
      %v2411 = vpop.f32.mrb[0].mxu0
      %v2412 = vpop.f32.mrb[0].mxu0
      %v2413 = vadd.f32 0.0, %v2412
      %v2414 = vpop.f32.mrb[0].mxu0
      %2415 = vmatprep.mubr.bf16.mxu0 0
      %2416 = vmatmul.mubr.bf16.gmra.mrb[0].mxu0 %v2332
      %v2417 = vpop.f32.mrb[0].mxu0
      %v2418 = vadd.f32 0.0, %v2417
      %v2419 = vpop.f32.mrb[0].mxu0
      %v2420 = vpop.f32.mrb[0].mxu0
      %v2421 = vadd.f32 0.0, %v2420
      %v2422 = vpop.f32.mrb[0].mxu0
      %2423 = vmatprep.mubr.bf16.mxu0 0
      %2424 = vmatmul.mubr.bf16.gmra.mrb[0].mxu0 %v2335
      %v2425 = vpop.f32.mrb[0].mxu0
      %v2426 = vadd.f32 0.0, %v2425
      %v2427 = vpop.f32.mrb[0].mxu0
      %v2428 = vpop.f32.mrb[0].mxu0
      %v2429 = vadd.f32 0.0, %v2428
      %v2430 = vpop.f32.mrb[0].mxu0
      %2431 = vmatprep.mubr.bf16.mxu0 0
      %2432 = vmatmul.mubr.bf16.gmra.mrb[0].mxu0 %v2338
      %v2433 = vpop.f32.mrb[0].mxu0
      %v2434 = vadd.f32 0.0, %v2433
      %v2435 = vpop.f32.mrb[0].mxu0
      %v2436 = vpop.f32.mrb[0].mxu0
      %v2437 = vadd.f32 0.0, %v2436
      %v2438 = vpop.f32.mrb[0].mxu0
      %2439 = vdwg.mxu0
      %v2440 = vadd.f32 %v2058, %v2378
      %v2441 = vadd.f32 %v2059, %v2381
      %v2442 = vadd.f32 %v2060, %v2386
      %v2443 = vadd.f32 %v2061, %v2389
      %v2444 = vadd.f32 %v2062, %v2394
      %v2445 = vadd.f32 %v2063, %v2397
      %v2446 = vadd.f32 %v2064, %v2402
      %v2447 = vadd.f32 %v2065, %v2405
      %v2448 = vadd.f32 %v2066, %v2410
      %v2449 = vadd.f32 %v2067, %v2413
      %v2450 = vadd.f32 %v2068, %v2418
      %v2451 = vadd.f32 %v2069, %v2421
      %v2452 = vadd.f32 %v2070, %v2426
      %v2453 = vadd.f32 %v2071, %v2429
      %v2454 = vadd.f32 %v2072, %v2434
      %v2455 = vadd.f32 %v2073, %v2437
      %v2456 = vld [vmem:[%s1875] sm:$0xe]
      %v2457 = vld [vmem:[%s1875 + $0xc] sm:$0xe]
      %v2458 = vld [vmem:[%s1875 + $0x18] sm:$0xe]
      %v2459 = vld [vmem:[%s1875 + $0x24] sm:$0xe]
      %v2460 = vld [vmem:[%s1875 + $0x30] sm:$0xe]
      %v2461 = vld [vmem:[%s1875 + $0x3c] sm:$0xe]
      %v2462 = vld [vmem:[%s1875 + $0x48] sm:$0xe]
      %v2463 = vld [vmem:[%s1875 + $0x54] sm:$0xe]
      %v2488 = vrot.slane %v2456, 5
      %v2489 = vrot.slane %v2488, 4
      %v2490 = vrot.slane %v2075, 5
      %v2491 = vsel %vm817, %v2489, %v2490
      %v2492 = vrot.slane %v2490, 4
      %v2493 = vrot.slane %v2076, 5
      %v2494 = vsel %vm817, %v2492, %v2493
      %v2495 = vrot.slane %v2457, 5
      %v2496 = vrot.slane %v2495, 4
      %v2497 = vrot.slane %v2078, 5
      %v2498 = vsel %vm817, %v2496, %v2497
      %v2499 = vrot.slane %v2497, 4
      %v2500 = vrot.slane %v2079, 5
      %v2501 = vsel %vm817, %v2499, %v2500
      %v2502 = vrot.slane %v2458, 5
      %v2503 = vrot.slane %v2502, 4
      %v2504 = vrot.slane %v2081, 5
      %v2505 = vsel %vm817, %v2503, %v2504
      %v2506 = vrot.slane %v2504, 4
      %v2507 = vrot.slane %v2082, 5
      %v2508 = vsel %vm817, %v2506, %v2507
      %v2509 = vrot.slane %v2459, 5
      %v2510 = vrot.slane %v2509, 4
      %v2511 = vrot.slane %v2084, 5
      %v2512 = vsel %vm817, %v2510, %v2511
      %v2513 = vrot.slane %v2511, 4
      %v2514 = vrot.slane %v2085, 5
      %v2515 = vsel %vm817, %v2513, %v2514
      %v2516 = vrot.slane %v2460, 5
      %v2517 = vrot.slane %v2516, 4
      %v2518 = vrot.slane %v2087, 5
      %v2519 = vsel %vm817, %v2517, %v2518
      %v2520 = vrot.slane %v2518, 4
      %v2521 = vrot.slane %v2088, 5
      %v2522 = vsel %vm817, %v2520, %v2521
      %v2523 = vrot.slane %v2461, 5
      %v2524 = vrot.slane %v2523, 4
      %v2525 = vrot.slane %v2090, 5
      %v2526 = vsel %vm817, %v2524, %v2525
      %v2527 = vrot.slane %v2525, 4
      %v2528 = vrot.slane %v2091, 5
      %v2529 = vsel %vm817, %v2527, %v2528
      %v2530 = vrot.slane %v2462, 5
      %v2531 = vrot.slane %v2530, 4
      %v2532 = vrot.slane %v2093, 5
      %v2533 = vsel %vm817, %v2531, %v2532
      %v2534 = vrot.slane %v2532, 4
      %v2535 = vrot.slane %v2094, 5
      %v2536 = vsel %vm817, %v2534, %v2535
      %v2537 = vrot.slane %v2463, 5
      %v2538 = vrot.slane %v2537, 4
      %v2539 = vrot.slane %v2096, 5
      %v2540 = vsel %vm817, %v2538, %v2539
      %v2541 = vrot.slane %v2539, 4
      %v2542 = vrot.slane %v2097, 5
      %v2543 = vsel %vm817, %v2541, %v2542
      %s2544 = scalar_lea.vmem %s1, 16
      %v2545 = vld [vmem:[%s2544] sm:$0x3]
      %v2546 = vunpack.c.l.b16 %v2491
      %v2547 = vunpack.c.l.b16 %v2494
      %v2548 = vunpack.c.l.b16 %v2498
      %v2549 = vunpack.c.l.b16 %v2501
      %v2550 = vunpack.c.l.b16 %v2505
      %v2551 = vunpack.c.l.b16 %v2508
      %v2552 = vunpack.c.l.b16 %v2512
      %v2553 = vunpack.c.l.b16 %v2515
      %v2554 = vunpack.c.l.b16 %v2519
      %v2555 = vunpack.c.l.b16 %v2522
      %v2556 = vunpack.c.l.b16 %v2526
      %v2557 = vunpack.c.l.b16 %v2529
      %v2558 = vunpack.c.l.b16 %v2533
      %v2559 = vunpack.c.l.b16 %v2536
      %v2560 = vunpack.c.l.b16 %v2540
      %v2561 = vunpack.c.l.b16 %v2543
      %v2562 = vpack.c.b16 %v2547, %v2546
      %v2563 = vpack.c.b16 %v2549, %v2548
      %v2564 = vpack.c.b16 %v2551, %v2550
      %v2565 = vpack.c.b16 %v2553, %v2552
      %v2566 = vpack.c.b16 %v2555, %v2554
      %v2567 = vpack.c.b16 %v2557, %v2556
      %v2568 = vpack.c.b16 %v2559, %v2558
      %v2569 = vpack.c.b16 %v2561, %v2560
      %v2571 = vsel %vm501, %v2562, 0
      %v2574 = vsel %vm501, %v2563, 0
      %v2577 = vsel %vm501, %v2564, 0
      %v2580 = vsel %vm501, %v2565, 0
      %v2583 = vsel %vm501, %v2566, 0
      %v2586 = vsel %vm501, %v2567, 0
      %v2589 = vsel %vm501, %v2568, 0
      %v2592 = vsel %vm501, %v2569, 0
      %v2595 = vsel %vm526, %v2545, 0
      %2597 = vmatprep.subr.bf16.mxu0 0
      %2598 = vmatpush1.bf16.msra.mxu0 %v2595
      %2599 = vmatprep.subr.bf16.mxu0 0
      %2600 = vmatpush1.bf16.msra.mxu0 0
      %2601 = vmatprep.subr.bf16.mxu0 0
      %2602 = vmatpush1.bf16.msra.mxu0 0
      %2603 = vmatprep.subr.bf16.mxu0 0
      %2604 = vmatpush1.bf16.msra.mxu0 0
      %2605 = vmatprep.subr.bf16.mxu0 0
      %2606 = vmatpush1.bf16.msra.mxu0 0
      %2607 = vmatprep.subr.bf16.mxu0 0
      %2608 = vmatpush1.bf16.msra.mxu0 0
      %2609 = vmatprep.subr.bf16.mxu0 0
      %2610 = vmatpush1.bf16.msra.mxu0 0
      %2611 = vmatprep.subr.bf16.mxu0 0
      %2612 = vmatpush1.bf16.msra.mxu0 0
      %2613 = vmatprep.subr.bf16.mxu0 0
      %2614 = vmatpush1.bf16.msra.mxu0 0
      %2615 = vmatprep.subr.bf16.mxu0 0
      %2616 = vmatpush1.bf16.msra.mxu0 0
      %2617 = vmatprep.subr.bf16.mxu0 0
      %2618 = vmatpush1.bf16.msra.mxu0 0
      %2619 = vmatprep.subr.bf16.mxu0 0
      %2620 = vmatpush1.bf16.msra.mxu0 0
      %2621 = vmatprep.subr.bf16.mxu0 0
      %2622 = vmatpush1.bf16.msra.mxu0 0
      %2623 = vmatprep.subr.bf16.mxu0 0
      %2624 = vmatpush1.bf16.msra.mxu0 0
      %2625 = vmatprep.subr.bf16.mxu0 0
      %2626 = vmatpush1.bf16.msra.mxu0 0
      %2627 = vmatprep.subr.bf16.mxu0 0
      %2628 = vmatpush1.bf16.msra.mxu0 0
      %2629 = vmatprep.mubr.bf16.mxu0 0
      %2630 = vmatmul.mubr.bf16.gmra.mrb[0].mxu0 %v2571
      %v2631 = vpop.f32.mrb[0].mxu0
      %v2632 = vadd.f32 0.0, %v2631
      %v2633 = vpop.f32.mrb[0].mxu0
      %v2634 = vpop.f32.mrb[0].mxu0
      %v2635 = vadd.f32 0.0, %v2634
      %v2636 = vpop.f32.mrb[0].mxu0
      %2637 = vmatprep.mubr.bf16.mxu0 0
      %2638 = vmatmul.mubr.bf16.gmra.mrb[0].mxu0 %v2574
      %v2639 = vpop.f32.mrb[0].mxu0
      %v2640 = vadd.f32 0.0, %v2639
      %v2641 = vpop.f32.mrb[0].mxu0
      %v2642 = vpop.f32.mrb[0].mxu0
      %v2643 = vadd.f32 0.0, %v2642
      %v2644 = vpop.f32.mrb[0].mxu0
      %2645 = vmatprep.mubr.bf16.mxu0 0
      %2646 = vmatmul.mubr.bf16.gmra.mrb[0].mxu0 %v2577
      %v2647 = vpop.f32.mrb[0].mxu0
      %v2648 = vadd.f32 0.0, %v2647
      %v2649 = vpop.f32.mrb[0].mxu0
      %v2650 = vpop.f32.mrb[0].mxu0
      %v2651 = vadd.f32 0.0, %v2650
      %v2652 = vpop.f32.mrb[0].mxu0
      %2653 = vmatprep.mubr.bf16.mxu0 0
      %2654 = vmatmul.mubr.bf16.gmra.mrb[0].mxu0 %v2580
      %v2655 = vpop.f32.mrb[0].mxu0
      %v2656 = vadd.f32 0.0, %v2655
      %v2657 = vpop.f32.mrb[0].mxu0
      %v2658 = vpop.f32.mrb[0].mxu0
      %v2659 = vadd.f32 0.0, %v2658
      %v2660 = vpop.f32.mrb[0].mxu0
      %2661 = vmatprep.mubr.bf16.mxu0 0
      %2662 = vmatmul.mubr.bf16.gmra.mrb[0].mxu0 %v2583
      %v2663 = vpop.f32.mrb[0].mxu0
      %v2664 = vadd.f32 0.0, %v2663
      %v2665 = vpop.f32.mrb[0].mxu0
      %v2666 = vpop.f32.mrb[0].mxu0
      %v2667 = vadd.f32 0.0, %v2666
      %v2668 = vpop.f32.mrb[0].mxu0
      %2669 = vmatprep.mubr.bf16.mxu0 0
      %2670 = vmatmul.mubr.bf16.gmra.mrb[0].mxu0 %v2586
      %v2671 = vpop.f32.mrb[0].mxu0
      %v2672 = vadd.f32 0.0, %v2671
      %v2673 = vpop.f32.mrb[0].mxu0
      %v2674 = vpop.f32.mrb[0].mxu0
      %v2675 = vadd.f32 0.0, %v2674
      %v2676 = vpop.f32.mrb[0].mxu0
      %2677 = vmatprep.mubr.bf16.mxu0 0
      %2678 = vmatmul.mubr.bf16.gmra.mrb[0].mxu0 %v2589
      %v2679 = vpop.f32.mrb[0].mxu0
      %v2680 = vadd.f32 0.0, %v2679
      %v2681 = vpop.f32.mrb[0].mxu0
      %v2682 = vpop.f32.mrb[0].mxu0
      %v2683 = vadd.f32 0.0, %v2682
      %v2684 = vpop.f32.mrb[0].mxu0
      %2685 = vmatprep.mubr.bf16.mxu0 0
      %2686 = vmatmul.mubr.bf16.gmra.mrb[0].mxu0 %v2592
      %v2687 = vpop.f32.mrb[0].mxu0
      %v2688 = vadd.f32 0.0, %v2687
      %v2689 = vpop.f32.mrb[0].mxu0
      %v2690 = vpop.f32.mrb[0].mxu0
      %v2691 = vadd.f32 0.0, %v2690
      %v2692 = vpop.f32.mrb[0].mxu0
      %2693 = vdwg.mxu0
      %v2694 = vadd.f32 %v2440, %v2632
      %v2695 = vadd.f32 %v2441, %v2635
      %v2696 = vadd.f32 %v2442, %v2640
      %v2697 = vadd.f32 %v2443, %v2643
      %v2698 = vadd.f32 %v2444, %v2648
      %v2699 = vadd.f32 %v2445, %v2651
      %v2700 = vadd.f32 %v2446, %v2656
      %v2701 = vadd.f32 %v2447, %v2659
      %v2702 = vadd.f32 %v2448, %v2664
      %v2703 = vadd.f32 %v2449, %v2667
      %v2704 = vadd.f32 %v2450, %v2672
      %v2705 = vadd.f32 %v2451, %v2675
      %v2706 = vadd.f32 %v2452, %v2680
      %v2707 = vadd.f32 %v2453, %v2683
      %v2708 = vadd.f32 %v2454, %v2688
      %v2709 = vadd.f32 %v2455, %v2691
      %v2710 = vld [vmem:[%s2] sm:$0x1]
      %v2712 = vlaneseq
      %v2713 = vshrl.u32 %v2712, 7
      %v2714 = vsub.s32 0, %v2713
      %v2715 = vrot.slane %v2710, %v2714
      %v2717 = vadd.f32 %v2694, %v2715
      %v2718 = vadd.f32 %v2695, %v2715
      %v2719 = vadd.f32 %v2696, %v2715
      %v2720 = vadd.f32 %v2697, %v2715
      %v2721 = vadd.f32 %v2698, %v2715
      %v2722 = vadd.f32 %v2699, %v2715
      %v2723 = vadd.f32 %v2700, %v2715
      %v2724 = vadd.f32 %v2701, %v2715
      %v2725 = vadd.f32 %v2702, %v2715
      %v2726 = vadd.f32 %v2703, %v2715
      %v2727 = vadd.f32 %v2704, %v2715
      %v2728 = vadd.f32 %v2705, %v2715
      %v2729 = vadd.f32 %v2706, %v2715
      %v2730 = vadd.f32 %v2707, %v2715
      %v2731 = vadd.f32 %v2708, %v2715
      %v2732 = vadd.f32 %v2709, %v2715
      %v2733 = vmax.f32 %v2717, 0.0
      %v2734 = vmax.f32 %v2718, 0.0
      %v2735 = vmax.f32 %v2719, 0.0
      %v2736 = vmax.f32 %v2720, 0.0
      %v2737 = vmax.f32 %v2721, 0.0
      %v2738 = vmax.f32 %v2722, 0.0
      %v2739 = vmax.f32 %v2723, 0.0
      %v2740 = vmax.f32 %v2724, 0.0
      %v2741 = vmax.f32 %v2725, 0.0
      %v2742 = vmax.f32 %v2726, 0.0
      %v2743 = vmax.f32 %v2727, 0.0
      %v2744 = vmax.f32 %v2728, 0.0
      %v2745 = vmax.f32 %v2729, 0.0
      %v2746 = vmax.f32 %v2730, 0.0
      %v2747 = vmax.f32 %v2731, 0.0
      %v2748 = vmax.f32 %v2732, 0.0
      %v2749 = vadd.f32 %v2733, %v2734
      %v2750 = vadd.f32 %v2749, %v2735
      %v2751 = vadd.f32 %v2750, %v2736
      %v2752 = vadd.f32 %v2751, %v2737
      %v2753 = vadd.f32 %v2752, %v2738
      %v2754 = vadd.f32 %v2753, %v2739
      %v2755 = vadd.f32 %v2754, %v2740
      %v2756 = vadd.f32 %v2755, %v2741
      %v2757 = vadd.f32 %v2756, %v2742
      %v2758 = vadd.f32 %v2757, %v2743
      %v2759 = vadd.f32 %v2758, %v2744
      %v2760 = vadd.f32 %v2759, %v2745
      %v2761 = vadd.f32 %v2760, %v2746
      %v2762 = vadd.f32 %v2761, %v2747
      %v2763 = vadd.f32 %v2762, %v2748
      %v2764 = vrot.slane %v2763, 4
      %v2765 = vadd.f32 %v2763, %v2764
      %v2766 = vrot.slane %v2765, 2
      %v2767 = vadd.f32 %v2765, %v2766
      %v2768 = vrot.slane %v2767, 1
      %v2769 = vadd.f32 %v2767, %v2768
      %2770 = vst [vmem:[%s253] sm:$0x1] %v2769
      %v2771 = vpack.c.bf16 %v2734, %v2733
      %v2772 = vpack.c.bf16 %v2736, %v2735
      %v2773 = vpack.c.bf16 %v2738, %v2737
      %v2774 = vpack.c.bf16 %v2740, %v2739
      %v2775 = vpack.c.bf16 %v2742, %v2741
      %v2776 = vpack.c.bf16 %v2744, %v2743
      %v2777 = vpack.c.bf16 %v2746, %v2745
      %v2778 = vpack.c.bf16 %v2748, %v2747
      %v2787 = vunpack.c.l.b16 %v2771
      %v2788 = vunpack.c.h.b16 %v2771
      %v2789 = vunpack.c.l.b16 %v2772
      %v2790 = vunpack.c.h.b16 %v2772
      %v2791 = vunpack.c.l.b16 %v2773
      %v2792 = vunpack.c.h.b16 %v2773
      %v2793 = vunpack.c.l.b16 %v2774
      %v2794 = vunpack.c.h.b16 %v2774
      %v2795 = vunpack.c.l.b16 %v2775
      %v2796 = vunpack.c.h.b16 %v2775
      %v2797 = vunpack.c.l.b16 %v2776
      %v2798 = vunpack.c.h.b16 %v2776
      %v2799 = vunpack.c.l.b16 %v2777
      %v2800 = vunpack.c.h.b16 %v2777
      %v2801 = vunpack.c.l.b16 %v2778
      %v2802 = vunpack.c.h.b16 %v2778
      %v2803 = vpack.c.b16 %v2787, %v2787
      %v2804 = vpack.c.b16 %v2788, %v2788
      %v2805 = vpack.c.b16 %v2789, %v2789
      %v2806 = vpack.c.b16 %v2790, %v2790
      %v2807 = vpack.c.b16 %v2791, %v2791
      %v2808 = vpack.c.b16 %v2792, %v2792
      %v2809 = vpack.c.b16 %v2793, %v2793
      %v2810 = vpack.c.b16 %v2794, %v2794
      %v2811 = vpack.c.b16 %v2795, %v2795
      %v2812 = vpack.c.b16 %v2796, %v2796
      %v2813 = vpack.c.b16 %v2797, %v2797
      %v2814 = vpack.c.b16 %v2798, %v2798
      %v2815 = vpack.c.b16 %v2799, %v2799
      %v2816 = vpack.c.b16 %v2800, %v2800
      %v2817 = vpack.c.b16 %v2801, %v2801
      %v2818 = vpack.c.b16 %v2802, %v2802
      %2835 = vst [vmem:[%s245] sm:$0xf] %v2803
      %2836 = vst [vmem:[%s245 + $0x4] sm:$0xf] %v2804
      %2837 = vst [vmem:[%s245 + $0x8] sm:$0xf] %v2805
      %2838 = vst [vmem:[%s245 + $0xc] sm:$0xf] %v2806
      %2839 = vst [vmem:[%s245 + $0x10] sm:$0xf] %v2807
      %2840 = vst [vmem:[%s245 + $0x14] sm:$0xf] %v2808
      %2841 = vst [vmem:[%s245 + $0x18] sm:$0xf] %v2809
      %2842 = vst [vmem:[%s245 + $0x1c] sm:$0xf] %v2810
      %2843 = vst [vmem:[%s245 + $0x20] sm:$0xf] %v2811
      %2844 = vst [vmem:[%s245 + $0x24] sm:$0xf] %v2812
      %2845 = vst [vmem:[%s245 + $0x28] sm:$0xf] %v2813
      %2846 = vst [vmem:[%s245 + $0x2c] sm:$0xf] %v2814
      %2847 = vst [vmem:[%s245 + $0x30] sm:$0xf] %v2815
      %2848 = vst [vmem:[%s245 + $0x34] sm:$0xf] %v2816
      %2849 = vst [vmem:[%s245 + $0x38] sm:$0xf] %v2817
      %2850 = vst [vmem:[%s245 + $0x3c] sm:$0xf] %v2818
      %s2851 = smul.u32 16, %s21
      %p2852 = scmp.lt.s32.totalorder %s20, 1
      %s2853 = scalar_select %p2852, %s20, 1
      %p2854 = scmp.lt.s32.totalorder %s2851, 31
      %s2855 = scalar_select %p2854, %s2851, 31
      %s2856 = smul.addr %s2853, 32
      %s2857 = sadd.s32 %s2855, %s2856
      %s2858 = smul.addr %s2857, 4
      %s2859 = scalar_lea.vmem %s3, %s2858
      %p2860 = scmp.lt.s32.totalorder %s20, 1
      %s2861 = scalar_select %p2860, %s20, 1
      %p2862 = scmp.lt.s32.totalorder %s21, 1
      %s2863 = scalar_select %p2862, %s21, 1
      %s2864 = smul.addr %s2861, 2
      %s2865 = sadd.s32 %s2863, %s2864
      %s2866 = scalar_lea.vmem %s4, %s2865
      // Predicated region
      $region33: #{attention_refinement_module.2} parent=31 // pred_check
        %p2867 = pneg %p120
      $region34: #{attention_refinement_module.2} parent=31 // pred_check_branch
        %2869 = sbr.rel (%p2867) target = $region36
      $region35: #{attention_refinement_module.2} parent=31 // pred_region
        %s2870 = smul.u32 16, %s21
      $region36: #{attention_refinement_module.2} parent=31 // pred_fallthru
        _
      // Predicated region
      $region37: #{attention_refinement_module.2} parent=31 // pred_check
        %p2871 = pneg %p148
      $region38: #{attention_refinement_module.2} parent=31 // pred_check_branch
        %2873 = sbr.rel (%p2871) target = $region40
      $region39: #{attention_refinement_module.2} parent=31 // pred_region
        _
      $region40: #{attention_refinement_module.2} parent=31 // pred_fallthru
        _
    $region32: #{attention_refinement_module.2} parent=5 // pred_fallthru
      _
    %p2874 = scmp.le.s32.totalorder 2, %s11
    // Predicated region
    $region41: #{attention_refinement_module.2} parent=5 // pred_check
      %p2875 = pneg %p2874
    $region42: #{attention_refinement_module.2} parent=5 // pred_check_branch
      %2877 = sbr.rel (%p2875) target = $region44
    $region43: #{attention_refinement_module.2} parent=5 // pred_region
      %s2878 = ssub.s32 %s11, 2
      // Predicated region
      $region45: #{attention_refinement_module.2} parent=43 // pred_check
        %p2879 = pneg %p126
      $region46: #{attention_refinement_module.2} parent=43 // pred_check_branch
        %2881 = sbr.rel (%p2879) target = $region48
      $region47: #{attention_refinement_module.2} parent=43 // pred_region
        %s2882 = smul.u32 16, %s23
        %p2883 = scmp.lt.s32.totalorder %s22, 1
        %s2884 = scalar_select %p2883, %s22, 1
        %p2885 = scmp.lt.s32.totalorder %s2882, 31
        %s2886 = scalar_select %p2885, %s2882, 31
        %s2887 = smul.addr %s2884, 32
        %s2888 = sadd.s32 %s2886, %s2887
        %s2889 = smul.addr %s2888, 4
        %s2890 = scalar_lea.vmem %s3, %s2889
      $region48: #{attention_refinement_module.2} parent=43 // pred_fallthru
        _
      // Predicated region
      $region49: #{attention_refinement_module.2} parent=43 // pred_check
        %p2891 = pneg %p154
      $region50: #{attention_refinement_module.2} parent=43 // pred_check_branch
        %2893 = sbr.rel (%p2891) target = $region52
      $region51: #{attention_refinement_module.2} parent=43 // pred_region
        %p2894 = scmp.lt.s32.totalorder %s22, 1
        %s2895 = scalar_select %p2894, %s22, 1
        %p2896 = scmp.lt.s32.totalorder %s23, 1
        %s2897 = scalar_select %p2896, %s23, 1
        %s2898 = smul.addr %s2895, 2
        %s2899 = sadd.s32 %s2897, %s2898
        %s2900 = scalar_lea.vmem %s4, %s2899
      $region52: #{attention_refinement_module.2} parent=43 // pred_fallthru
        _
    $region44: #{attention_refinement_module.2} parent=5 // pred_fallthru
      _
  $region6: #{attention_refinement_module.2} parent=0 // loop_footer
    %s15 = sadd.s32 1, %s11
  $region7: #{attention_refinement_module.2} parent=0 // loop_footer_branch
    %10 = sbr.rel target = $region3
  $region8: #{attention_refinement_module.2} parent=0 // loop_exit
    _

</llo_original>
